<compile_context>
chip_gen: v5e
topology: v5e:2x2
jax: 0.10.0
libtpu: 0.0.40
codegen_flags: <defaults>
</compile_context>

<pallas_src>
import jax
import jax.numpy as jnp
import numpy as np
from jax import lax
from jax.experimental import pallas as pl
from jax.experimental.pallas import tpu as pltpu

# ----- small, deterministic hyper-parameters consistent with SVAE.__init__ -----
MAX_N = 8                 # max number of vertices
NVT = 6                   # number of vertex types
HS = 32                   # GRU hidden size (hs)
NZ = 8                    # latent size (nz)
T = MAX_N - 1             # sequence length used by encode/decode/loss
XS = NVT + MAX_N - 1      # per-step feature size
B = 8                     # batch (one full sublane group)
BETA = 0.005
EPS_SCALE = 0.01          # reparameterize eps_scale (training mode)

# padded / packed layout constants
HP = 128                  # padded hidden width (one lane tile)
GP = 3 * HP               # padded gate width (r | z | n), each its own 128-lane tile
XP = 128                  # padded input feature width
NE = MAX_N - 1            # number of edge slots per step
NS = NVT + NE             # fused head output width

# weight-slab row offsets (all multiples of 8)
R_WE_IH = 0
R_WE_HH = R_WE_IH + HP    # 128
R_WD_IH = R_WE_HH + HP    # 256
R_WD_HH = R_WD_IH + HP    # 384
R_W12 = R_WD_HH + HP      # 512
R_W3 = R_W12 + HP         # 640
R_WH1 = R_W3 + NZ         # 648
R_WH2 = R_WH1 + HP        # 776
R_TOTAL = R_WH2 + 2 * HS  # 840

TB = T * B
D_ROWS = TB + B           # data slab rows: G (time-major) + eps


def svae_loss_kernel(d_ref, w_ref, b_ref, out_ref):
    f32 = jnp.float32

    # ----- unpack the 3 slabs with static, tile-aligned slices -----
    G_all = d_ref[0:TB, :]                      # [TB, 128] (lanes 0..XS-1 real)
    eps = d_ref[TB:TB + B, 0:NZ]                # [B, NZ]

    We_ih = w_ref[R_WE_IH:R_WE_IH + HP, :]      # [128, 384]
    We_hh = w_ref[R_WE_HH:R_WE_HH + HP, :]      # [128, 384]
    Wd_ih = w_ref[R_WD_IH:R_WD_IH + HP, :]      # [128, 384]
    Wd_hh = w_ref[R_WD_HH:R_WD_HH + HP, :]      # [128, 384]
    W12 = w_ref[R_W12:R_W12 + HP, 0:2 * NZ]     # [128, 16]  (fused fc1|fc2)
    W3 = w_ref[R_W3:R_W3 + NZ, 0:HP]            # [8, 128]
    Wh1 = w_ref[R_WH1:R_WH1 + HP, 0:2 * HS]     # [128, 64]  (fused add_vertex[0]|add_edges[0])
    Wh2 = w_ref[R_WH2:R_WH2 + 2 * HS, 0:NS]     # [64, 13]   (block-diag second layers)

    # biases: hoisted broadcasts, built once
    be_ih_b = jnp.broadcast_to(b_ref[0:1, :], (TB, GP))
    be_hh_b = jnp.broadcast_to(b_ref[1:2, :], (B, GP))
    bd_ih_b = jnp.broadcast_to(b_ref[2:3, :], (B, GP))
    bd_hh_b = jnp.broadcast_to(b_ref[3:4, :], (B, GP))
    b12_b = jnp.broadcast_to(b_ref[4:5, 0:2 * NZ], (B, 2 * NZ))
    b3_b = jnp.broadcast_to(b_ref[5:6, 0:HP], (B, HP))
    bh1_b = jnp.broadcast_to(b_ref[6:7, 0:2 * HS], (TB, 2 * HS))
    bh2_b = jnp.broadcast_to(b_ref[7:8, 0:NS], (TB, NS))

    def gru_cell(xr, xz, xn, h, W_hh, b_hh_b):
        # PyTorch GRU gate order (r, z, n); gates are 128-lane-tile aligned.
        gh = jnp.dot(h, W_hh, preferred_element_type=f32) + b_hh_b      # [B, 384]
        r = jax.nn.sigmoid(xr + gh[:, 0:HP])
        z = jax.nn.sigmoid(xz + gh[:, HP:2 * HP])
        n = jnp.tanh(xn + r * gh[:, 2 * HP:3 * HP])
        return (1.0 - z) * n + z * h                                    # padded lanes stay 0

    # ---------------- encoder GRU ----------------
    # Hoisted input projection: one matmul for all T steps.
    GI_all = jnp.dot(G_all, We_ih, preferred_element_type=f32) + be_ih_b   # [TB, 384]

    # Pre-slice per-step gate contributions (sublane-aligned at B=8, off the
    # serial dependency chain).
    gi_steps = []
    for t in range(T):
        blk = GI_all[t * B:(t + 1) * B, :]
        gi_steps.append((blk[:, 0:HP], blk[:, HP:2 * HP], blk[:, 2 * HP:3 * HP]))

    h = jnp.zeros((B, HP), f32)
    for t in range(T):                           # unrolled: only h @ We_hh serial
        xr, xz, xn = gi_steps[t]
        h = gru_cell(xr, xz, xn, h, We_hh, be_hh_b)

    mu_logvar = jnp.dot(h, W12, preferred_element_type=f32) + b12_b     # [B, 16]
    mu = mu_logvar[:, 0:NZ]
    logvar = mu_logvar[:, NZ:2 * NZ]

    # ---------------- reparameterize (training mode) ----------------
    std = jnp.exp(0.5 * logvar)
    z = eps * EPS_SCALE * std + mu                                      # [B, 8]

    # ---------------- decoder ----------------
    H0 = jnp.maximum(jnp.dot(z, W3, preferred_element_type=f32) + b3_b, 0.0)   # [B, 128]
    # decoder GRU input is H0 broadcast across all T steps -> constant contribution,
    # pre-sliced into gate tiles once.
    xd = jnp.dot(H0, Wd_ih, preferred_element_type=f32) + bd_ih_b       # [B, 384]
    xd_r, xd_z, xd_n = xd[:, 0:HP], xd[:, HP:2 * HP], xd[:, 2 * HP:3 * HP]

    hd = jnp.zeros((B, HP), f32)
    hs_list = []
    for t in range(T):                           # unrolled: only GRU recurrence
        hd = gru_cell(xd_r, xd_z, xd_n, hd, Wd_hh, bd_hh_b)
        hs_list.append(hd)
    H_all = jnp.concatenate(hs_list, axis=0)     # [TB, 128], kept in registers

    # Batched decoder heads: two matmuls for all T*B steps.
    HVE = jnp.maximum(jnp.dot(H_all, Wh1, preferred_element_type=f32) + bh1_b, 0.0)  # [TB, 64]
    scores = jnp.dot(HVE, Wh2, preferred_element_type=f32) + bh2_b      # [TB, 13]
    logits = scores[:, 0:NVT]                    # add_vertex logits
    e_logits = scores[:, NVT:NS]                 # add_edges logits

    # ---------------- cross-entropy over vertex types (reduction='sum') -------
    tpart = G_all[:, 0:NVT]
    iota_v = lax.broadcasted_iota(jnp.int32, (TB, NVT), 1)
    tmax = jnp.max(tpart, axis=1, keepdims=True)
    # argmax with first-index tie-break (matches torch.max indices)
    idx = jnp.min(jnp.where(tpart == tmax, iota_v, NVT), axis=1, keepdims=True)
    onehot = (iota_v == idx).astype(f32)

    lmax = jnp.max(logits, axis=1, keepdims=True)
    logZ = jnp.log(jnp.sum(jnp.exp(logits - lmax), axis=1, keepdims=True)) + lmax
    tgt = jnp.sum(onehot * logits, axis=1, keepdims=True)
    ce = jnp.sum(logZ - tgt)

    # ---------------- BCE over edges (reduction='sum') ----------------
    p = jax.nn.sigmoid(e_logits)
    y = G_all[:, NVT:NS]
    logp = jnp.maximum(jnp.log(p), -100.0)       # PyTorch BCE clamps log at -100
    log1mp = jnp.maximum(jnp.log(1.0 - p), -100.0)
    bce = jnp.sum(-(y * logp + (1.0 - y) * log1mp))

    # ---------------- KLD + total ----------------
    kld = -0.5 * jnp.sum(1.0 + logvar - mu * mu - jnp.exp(logvar))
    out_ref[...] = jnp.zeros((1, 1), f32) + ce + bce + BETA * kld


# ---------------------------------------------------------------------------
# Wrapper: packs everything into 3 lane-padded slabs and calls the kernel.
# ---------------------------------------------------------------------------
def _pad_gru_w(W):
    """[in_dim, 3*HS] -> [128, 384] with each gate in its own 128-lane tile."""
    Wp = jnp.zeros((HP, GP), jnp.float32)
    for g in range(3):
        Wp = Wp.at[0:W.shape[0], g * HP:g * HP + HS].set(W[:, g * HS:(g + 1) * HS])
    return Wp


def _pad_gru_b(b):
    """[1, 3*HS] -> [1, 384] gate-blocked."""
    bp = jnp.zeros((1, GP), jnp.float32)
    for g in range(3):
        bp = bp.at[0:1, g * HP:g * HP + HS].set(b[:, g * HS:(g + 1) * HS])
    return bp


def svae_forward_loss(G, eps, params):
    """G: [B, T, XS] batch-first (PyTorch convention). Returns scalar loss."""
    (We_ih, We_hh, be_ih, be_hh, W1, b1, W2, b2, W3, b3,
     Wd_ih, Wd_hh, bd_ih, bd_hh, Wv1, bv1, Wv2, bv2, We1, be1, We2, be2) = params

    # --- data slab: time-major G (row t*B + b == G[b, t, :]) + eps ---
    G_tm = jnp.transpose(G, (1, 0, 2)).reshape(TB, XS).astype(jnp.float32)
    d_slab = jnp.zeros((D_ROWS, XP), jnp.float32)
    d_slab = d_slab.at[0:TB, 0:XS].set(G_tm)
    d_slab = d_slab.at[TB:TB + B, 0:NZ].set(eps.astype(jnp.float32))

    # --- weight slab (one DMA): gate-padded GRU mats + fused/padded heads ---
    w_slab = jnp.zeros((R_TOTAL, GP), jnp.float32)
    w_slab = w_slab.at[R_WE_IH:R_WE_IH + HP, :].set(_pad_gru_w(We_ih))
    w_slab = w_slab.at[R_WE_HH:R_WE_HH + HP, :].set(_pad_gru_w(We_hh))
    w_slab = w_slab.at[R_WD_IH:R_WD_IH + HP, :].set(_pad_gru_w(Wd_ih))
    w_slab = w_slab.at[R_WD_HH:R_WD_HH + HP, :].set(_pad_gru_w(Wd_hh))
    w_slab = w_slab.at[R_W12:R_W12 + HS, 0:2 * NZ].set(jnp.concatenate([W1, W2], axis=1))
    w_slab = w_slab.at[R_W3:R_W3 + NZ, 0:HS].set(W3)
    w_slab = w_slab.at[R_WH1:R_WH1 + HS, 0:2 * HS].set(jnp.concatenate([Wv1, We1], axis=1))
    w_slab = w_slab.at[R_WH2:R_WH2 + HS, 0:NVT].set(Wv2)                 # block-diag
    w_slab = w_slab.at[R_WH2 + HS:R_WH2 + 2 * HS, NVT:NS].set(We2)

    # --- bias slab (one DMA) ---
    b_slab = jnp.zeros((8, GP), jnp.float32)
    b_slab = b_slab.at[0:1, :].set(_pad_gru_b(be_ih))
    b_slab = b_slab.at[1:2, :].set(_pad_gru_b(be_hh))
    b_slab = b_slab.at[2:3, :].set(_pad_gru_b(bd_ih))
    b_slab = b_slab.at[3:4, :].set(_pad_gru_b(bd_hh))
    b_slab = b_slab.at[4:5, 0:2 * NZ].set(jnp.concatenate([b1, b2], axis=1))
    b_slab = b_slab.at[5:6, 0:HS].set(b3)
    b_slab = b_slab.at[6:7, 0:2 * HS].set(jnp.concatenate([bv1, be1], axis=1))
    b_slab = b_slab.at[7:8, 0:NS].set(jnp.concatenate([bv2, be2], axis=1))

    vmem = pl.BlockSpec(memory_space=pltpu.MemorySpace.VMEM)
    out = pl.pallas_call(
        svae_loss_kernel,
        out_shape=jax.ShapeDtypeStruct((1, 1), jnp.float32),
        in_specs=[vmem, vmem, vmem],
        out_specs=vmem,
    )(d_slab, w_slab, b_slab)
    return out[0, 0]


def init_params(key):
    """Deterministic synthetic parameters (PyTorch-style uniform init bounds)."""
    ks = iter(jax.random.split(key, 24))
    k_h = 1.0 / np.sqrt(HS)
    k_z = 1.0 / np.sqrt(NZ)

    def u(shape, bound):
        return jax.random.uniform(next(ks), shape, jnp.float32, -bound, bound)

    We_ih = u((XS, 3 * HS), k_h)          # grue.weight_ih_l0.T
    We_hh = u((HS, 3 * HS), k_h)          # grue.weight_hh_l0.T
    be_ih = u((1, 3 * HS), k_h)
    be_hh = u((1, 3 * HS), k_h)
    W1, b1 = u((HS, NZ), k_h), u((1, NZ), k_h)        # fc1
    W2, b2 = u((HS, NZ), k_h), u((1, NZ), k_h)        # fc2
    W3, b3 = u((NZ, HS), k_z), u((1, HS), k_z)        # fc3
    Wd_ih = u((HS, 3 * HS), k_h)          # grud.weight_ih_l0.T
    Wd_hh = u((HS, 3 * HS), k_h)          # grud.weight_hh_l0.T
    bd_ih = u((1, 3 * HS), k_h)
    bd_hh = u((1, 3 * HS), k_h)
    Wv1, bv1 = u((HS, HS), k_h), u((1, HS), k_h)      # add_vertex[0]
    Wv2, bv2 = u((HS, NVT), k_h), u((1, NVT), k_h)    # add_vertex[2]
    We1, be1 = u((HS, HS), k_h), u((1, HS), k_h)      # add_edges[0]
    We2, be2 = u((HS, NE), k_h), u((1, NE), k_h)      # add_edges[2]
    return (We_ih, We_hh, be_ih, be_hh, W1, b1, W2, b2, W3, b3,
            Wd_ih, Wd_hh, bd_ih, bd_hh, Wv1, bv1, Wv2, bv2, We1, be1, We2, be2)


def reference_loss(G, eps, params):
    """Pure-JAX reference implementing the exact same math as the PyTorch module."""
    (We_ih, We_hh, be_ih, be_hh, W1, b1, W2, b2, W3, b3,
     Wd_ih, Wd_hh, bd_ih, bd_hh, Wv1, bv1, Wv2, bv2, We1, be1, We2, be2) = params

    def cell(xc, h, Whh, bhh):
        gh = h @ Whh + bhh
        r = jax.nn.sigmoid(xc[:, :HS] + gh[:, :HS])
        z = jax.nn.sigmoid(xc[:, HS:2 * HS] + gh[:, HS:2 * HS])
        n = jnp.tanh(xc[:, 2 * HS:] + r * gh[:, 2 * HS:])
        return (1 - z) * n + z * h

    h = jnp.zeros((B, HS), jnp.float32)
    for t in range(T):
        h = cell(G[:, t, :] @ We_ih + be_ih, h, We_hh, be_hh)
    mu = h @ W1 + b1
    logvar = h @ W2 + b2
    z = eps * EPS_SCALE * jnp.exp(0.5 * logvar) + mu
    H0 = jnp.maximum(z @ W3 + b3, 0.0)
    xd = H0 @ Wd_ih + bd_ih
    hd = jnp.zeros((B, HS), jnp.float32)
    ce = 0.0
    bce = 0.0
    for t in range(T):
        hd = cell(xd, hd, Wd_hh, bd_hh)
        logits = jnp.maximum(hd @ Wv1 + bv1, 0.0) @ Wv2 + bv2
        true_t = jnp.argmax(G[:, t, :NVT], axis=1)
        logZ = jax.nn.logsumexp(logits, axis=1)
        tgt = jnp.take_along_axis(logits, true_t[:, None], axis=1)[:, 0]
        ce += jnp.sum(logZ - tgt)
        p = jax.nn.sigmoid(jnp.maximum(hd @ We1 + be1, 0.0) @ We2 + be2)
        y = G[:, t, NVT:]
        bce += jnp.sum(-(y * jnp.maximum(jnp.log(p), -100.0)
                         + (1 - y) * jnp.maximum(jnp.log(1 - p), -100.0)))
    kld = -0.5 * jnp.sum(1 + logvar - mu ** 2 - jnp.exp(logvar))
    return ce + bce + BETA * kld


if __name__ == "__main__":
    key = jax.random.PRNGKey(0)
    k_types, k_edges, k_eps, k_params = jax.random.split(key, 4)

    params = init_params(k_params)

    # Build a graph tensor the way SVAE._collate_fn would: first NVT columns
    # one-hot vertex types, remaining MAX_N-1 columns edge indicators in [0,1].
    types = jax.random.randint(k_types, (B, T), 0, NVT)
    type_onehot = jax.nn.one_hot(types, NVT, dtype=jnp.float32)
    edges = (jax.random.uniform(k_edges, (B, T, NE)) > 0.5).astype(jnp.float32)
    G = jnp.concatenate([type_onehot, edges], axis=2)        # [B, T, XS]

    # Deterministic noise standing in for torch.randn_like in reparameterize.
    eps = jax.random.normal(k_eps, (B, NZ), jnp.float32)

    loss_fn = jax.jit(svae_forward_loss)
    loss = jax.block_until_ready(loss_fn(G, eps, params))
    ref = reference_loss(G, eps, params)

    assert np.isfinite(float(loss))
    np.testing.assert_allclose(float(loss), float(ref), rtol=2e-3, atol=2e-3)
    print("KERNEL_OK")
</pallas_src>

<mosaic_0001>
module attributes {stable_mosaic.version = 11 : i64} {
  func.func @svae_loss_kernel(%arg0: memref<64x128xf32, #tpu.memory_space<vmem>>, %arg1: memref<840x384xf32, #tpu.memory_space<vmem>>, %arg2: memref<8x384xf32, #tpu.memory_space<vmem>>, %arg3: memref<1x1xf32, #tpu.memory_space<vmem>>) attributes {dimension_semantics = [], scalar_prefetch = 0 : i64, scratch_operands = 0 : i64, tpu.core_type = #tpu.core_type<tc>} {
    %c0 = arith.constant 0 : index
    %c0_0 = arith.constant 0 : index
    %0 = vector.load %arg0[%c0, %c0_0] : memref<64x128xf32, #tpu.memory_space<vmem>>, vector<56x128xf32>
    %c56 = arith.constant 56 : index
    %c0_1 = arith.constant 0 : index
    %1 = vector.load %arg0[%c56, %c0_1] : memref<64x128xf32, #tpu.memory_space<vmem>>, vector<8x8xf32>
    %c0_2 = arith.constant 0 : index
    %c0_3 = arith.constant 0 : index
    %2 = vector.load %arg1[%c0_2, %c0_3] : memref<840x384xf32, #tpu.memory_space<vmem>>, vector<128x384xf32>
    %c128 = arith.constant 128 : index
    %c0_4 = arith.constant 0 : index
    %3 = vector.load %arg1[%c128, %c0_4] : memref<840x384xf32, #tpu.memory_space<vmem>>, vector<128x384xf32>
    %c256 = arith.constant 256 : index
    %c0_5 = arith.constant 0 : index
    %4 = vector.load %arg1[%c256, %c0_5] : memref<840x384xf32, #tpu.memory_space<vmem>>, vector<128x384xf32>
    %c384 = arith.constant 384 : index
    %c0_6 = arith.constant 0 : index
    %5 = vector.load %arg1[%c384, %c0_6] : memref<840x384xf32, #tpu.memory_space<vmem>>, vector<128x384xf32>
    %c512 = arith.constant 512 : index
    %c0_7 = arith.constant 0 : index
    %6 = vector.load %arg1[%c512, %c0_7] : memref<840x384xf32, #tpu.memory_space<vmem>>, vector<128x16xf32>
    %c640 = arith.constant 640 : index
    %c0_8 = arith.constant 0 : index
    %7 = vector.load %arg1[%c640, %c0_8] : memref<840x384xf32, #tpu.memory_space<vmem>>, vector<8x128xf32>
    %c648 = arith.constant 648 : index
    %c0_9 = arith.constant 0 : index
    %8 = vector.load %arg1[%c648, %c0_9] : memref<840x384xf32, #tpu.memory_space<vmem>>, vector<128x64xf32>
    %c776 = arith.constant 776 : index
    %c0_10 = arith.constant 0 : index
    %9 = vector.load %arg1[%c776, %c0_10] : memref<840x384xf32, #tpu.memory_space<vmem>>, vector<64x13xf32>
    %c0_11 = arith.constant 0 : index
    %c0_12 = arith.constant 0 : index
    %10 = vector.load %arg2[%c0_11, %c0_12] : memref<8x384xf32, #tpu.memory_space<vmem>>, vector<1x384xf32>
    %11 = vector.shape_cast %10 : vector<1x384xf32> to vector<1x384xf32>
    %12 = vector.broadcast %11 : vector<1x384xf32> to vector<56x384xf32>
    %c1 = arith.constant 1 : index
    %c0_13 = arith.constant 0 : index
    %13 = vector.load %arg2[%c1, %c0_13] : memref<8x384xf32, #tpu.memory_space<vmem>>, vector<1x384xf32>
    %14 = vector.shape_cast %13 : vector<1x384xf32> to vector<1x384xf32>
    %15 = vector.broadcast %14 : vector<1x384xf32> to vector<8x384xf32>
    %c2 = arith.constant 2 : index
    %c0_14 = arith.constant 0 : index
    %16 = vector.load %arg2[%c2, %c0_14] : memref<8x384xf32, #tpu.memory_space<vmem>>, vector<1x384xf32>
    %17 = vector.shape_cast %16 : vector<1x384xf32> to vector<1x384xf32>
    %18 = vector.broadcast %17 : vector<1x384xf32> to vector<8x384xf32>
    %c3 = arith.constant 3 : index
    %c0_15 = arith.constant 0 : index
    %19 = vector.load %arg2[%c3, %c0_15] : memref<8x384xf32, #tpu.memory_space<vmem>>, vector<1x384xf32>
    %20 = vector.shape_cast %19 : vector<1x384xf32> to vector<1x384xf32>
    %21 = vector.broadcast %20 : vector<1x384xf32> to vector<8x384xf32>
    %c4 = arith.constant 4 : index
    %c0_16 = arith.constant 0 : index
    %22 = vector.load %arg2[%c4, %c0_16] : memref<8x384xf32, #tpu.memory_space<vmem>>, vector<1x16xf32>
    %23 = vector.shape_cast %22 : vector<1x16xf32> to vector<1x16xf32>
    %24 = vector.broadcast %23 : vector<1x16xf32> to vector<8x16xf32>
    %c5 = arith.constant 5 : index
    %c0_17 = arith.constant 0 : index
    %25 = vector.load %arg2[%c5, %c0_17] : memref<8x384xf32, #tpu.memory_space<vmem>>, vector<1x128xf32>
    %26 = vector.shape_cast %25 : vector<1x128xf32> to vector<1x128xf32>
    %27 = vector.broadcast %26 : vector<1x128xf32> to vector<8x128xf32>
    %c6 = arith.constant 6 : index
    %c0_18 = arith.constant 0 : index
    %28 = vector.load %arg2[%c6, %c0_18] : memref<8x384xf32, #tpu.memory_space<vmem>>, vector<1x64xf32>
    %29 = vector.shape_cast %28 : vector<1x64xf32> to vector<1x64xf32>
    %30 = vector.broadcast %29 : vector<1x64xf32> to vector<56x64xf32>
    %c7 = arith.constant 7 : index
    %c0_19 = arith.constant 0 : index
    %31 = vector.load %arg2[%c7, %c0_19] : memref<8x384xf32, #tpu.memory_space<vmem>>, vector<1x13xf32>
    %32 = vector.shape_cast %31 : vector<1x13xf32> to vector<1x13xf32>
    %33 = vector.broadcast %32 : vector<1x13xf32> to vector<56x13xf32>
    %cst = arith.constant dense<0.000000e+00> : vector<56x384xf32>
    %34 = tpu.matmul %0, %2, %cst {dimension_numbers = #tpu.dot_dimension_numbers<[1], [0], [0], [1], [0, 0, 1, 1], [], []>} : vector<56x128xf32>, vector<128x384xf32>, vector<56x384xf32> -> vector<56x384xf32>
    %35 = arith.addf %34, %12 : vector<56x384xf32>
    %36 = vector.extract_strided_slice %35 {offsets = [0, 0], sizes = [8, 384], strides = [1, 1]} : vector<56x384xf32> to vector<8x384xf32>
    %37 = vector.extract_strided_slice %36 {offsets = [0, 0], sizes = [8, 128], strides = [1, 1]} : vector<8x384xf32> to vector<8x128xf32>
    %38 = vector.extract_strided_slice %36 {offsets = [0, 128], sizes = [8, 128], strides = [1, 1]} : vector<8x384xf32> to vector<8x128xf32>
    %39 = vector.extract_strided_slice %36 {offsets = [0, 256], sizes = [8, 128], strides = [1, 1]} : vector<8x384xf32> to vector<8x128xf32>
    %40 = vector.extract_strided_slice %35 {offsets = [8, 0], sizes = [8, 384], strides = [1, 1]} : vector<56x384xf32> to vector<8x384xf32>
    %41 = vector.extract_strided_slice %40 {offsets = [0, 0], sizes = [8, 128], strides = [1, 1]} : vector<8x384xf32> to vector<8x128xf32>
    %42 = vector.extract_strided_slice %40 {offsets = [0, 128], sizes = [8, 128], strides = [1, 1]} : vector<8x384xf32> to vector<8x128xf32>
    %43 = vector.extract_strided_slice %40 {offsets = [0, 256], sizes = [8, 128], strides = [1, 1]} : vector<8x384xf32> to vector<8x128xf32>
    %44 = vector.extract_strided_slice %35 {offsets = [16, 0], sizes = [8, 384], strides = [1, 1]} : vector<56x384xf32> to vector<8x384xf32>
    %45 = vector.extract_strided_slice %44 {offsets = [0, 0], sizes = [8, 128], strides = [1, 1]} : vector<8x384xf32> to vector<8x128xf32>
    %46 = vector.extract_strided_slice %44 {offsets = [0, 128], sizes = [8, 128], strides = [1, 1]} : vector<8x384xf32> to vector<8x128xf32>
    %47 = vector.extract_strided_slice %44 {offsets = [0, 256], sizes = [8, 128], strides = [1, 1]} : vector<8x384xf32> to vector<8x128xf32>
    %48 = vector.extract_strided_slice %35 {offsets = [24, 0], sizes = [8, 384], strides = [1, 1]} : vector<56x384xf32> to vector<8x384xf32>
    %49 = vector.extract_strided_slice %48 {offsets = [0, 0], sizes = [8, 128], strides = [1, 1]} : vector<8x384xf32> to vector<8x128xf32>
    %50 = vector.extract_strided_slice %48 {offsets = [0, 128], sizes = [8, 128], strides = [1, 1]} : vector<8x384xf32> to vector<8x128xf32>
    %51 = vector.extract_strided_slice %48 {offsets = [0, 256], sizes = [8, 128], strides = [1, 1]} : vector<8x384xf32> to vector<8x128xf32>
    %52 = vector.extract_strided_slice %35 {offsets = [32, 0], sizes = [8, 384], strides = [1, 1]} : vector<56x384xf32> to vector<8x384xf32>
    %53 = vector.extract_strided_slice %52 {offsets = [0, 0], sizes = [8, 128], strides = [1, 1]} : vector<8x384xf32> to vector<8x128xf32>
    %54 = vector.extract_strided_slice %52 {offsets = [0, 128], sizes = [8, 128], strides = [1, 1]} : vector<8x384xf32> to vector<8x128xf32>
    %55 = vector.extract_strided_slice %52 {offsets = [0, 256], sizes = [8, 128], strides = [1, 1]} : vector<8x384xf32> to vector<8x128xf32>
    %56 = vector.extract_strided_slice %35 {offsets = [40, 0], sizes = [8, 384], strides = [1, 1]} : vector<56x384xf32> to vector<8x384xf32>
    %57 = vector.extract_strided_slice %56 {offsets = [0, 0], sizes = [8, 128], strides = [1, 1]} : vector<8x384xf32> to vector<8x128xf32>
    %58 = vector.extract_strided_slice %56 {offsets = [0, 128], sizes = [8, 128], strides = [1, 1]} : vector<8x384xf32> to vector<8x128xf32>
    %59 = vector.extract_strided_slice %56 {offsets = [0, 256], sizes = [8, 128], strides = [1, 1]} : vector<8x384xf32> to vector<8x128xf32>
    %60 = vector.extract_strided_slice %35 {offsets = [48, 0], sizes = [8, 384], strides = [1, 1]} : vector<56x384xf32> to vector<8x384xf32>
    %61 = vector.extract_strided_slice %60 {offsets = [0, 0], sizes = [8, 128], strides = [1, 1]} : vector<8x384xf32> to vector<8x128xf32>
    %62 = vector.extract_strided_slice %60 {offsets = [0, 128], sizes = [8, 128], strides = [1, 1]} : vector<8x384xf32> to vector<8x128xf32>
    %63 = vector.extract_strided_slice %60 {offsets = [0, 256], sizes = [8, 128], strides = [1, 1]} : vector<8x384xf32> to vector<8x128xf32>
    %cst_20 = arith.constant 0.000000e+00 : f32
    %64 = vector.broadcast %cst_20 : f32 to vector<8x128xf32>
    %cst_21 = arith.constant dense<0.000000e+00> : vector<8x384xf32>
    %65 = tpu.matmul %64, %3, %cst_21 {dimension_numbers = #tpu.dot_dimension_numbers<[1], [0], [0], [1], [0, 0, 1, 1], [], []>} : vector<8x128xf32>, vector<128x384xf32>, vector<8x384xf32> -> vector<8x384xf32>
    %66 = arith.addf %65, %15 : vector<8x384xf32>
    %67 = vector.extract_strided_slice %66 {offsets = [0, 0], sizes = [8, 128], strides = [1, 1]} : vector<8x384xf32> to vector<8x128xf32>
    %68 = arith.addf %37, %67 : vector<8x128xf32>
    %69 = arith.negf %68 : vector<8x128xf32>
    %70 = math.exp %69 : vector<8x128xf32>
    %cst_22 = arith.constant 1.000000e+00 : f32
    %71 = vector.broadcast %cst_22 : f32 to vector<8x128xf32>
    %72 = arith.addf %71, %70 : vector<8x128xf32>
    %73 = arith.divf %71, %72 : vector<8x128xf32>
    %74 = vector.extract_strided_slice %66 {offsets = [0, 128], sizes = [8, 128], strides = [1, 1]} : vector<8x384xf32> to vector<8x128xf32>
    %75 = arith.addf %38, %74 : vector<8x128xf32>
    %76 = arith.negf %75 : vector<8x128xf32>
    %77 = math.exp %76 : vector<8x128xf32>
    %cst_23 = arith.constant 1.000000e+00 : f32
    %78 = vector.broadcast %cst_23 : f32 to vector<8x128xf32>
    %79 = arith.addf %78, %77 : vector<8x128xf32>
    %80 = arith.divf %78, %79 : vector<8x128xf32>
    %81 = vector.extract_strided_slice %66 {offsets = [0, 256], sizes = [8, 128], strides = [1, 1]} : vector<8x384xf32> to vector<8x128xf32>
    %82 = arith.mulf %73, %81 : vector<8x128xf32>
    %83 = arith.addf %39, %82 : vector<8x128xf32>
    %84 = math.tanh %83 : vector<8x128xf32>
    %cst_24 = arith.constant 1.000000e+00 : f32
    %85 = vector.broadcast %cst_24 : f32 to vector<8x128xf32>
    %86 = arith.subf %85, %80 : vector<8x128xf32>
    %87 = arith.mulf %86, %84 : vector<8x128xf32>
    %88 = arith.mulf %80, %64 : vector<8x128xf32>
    %89 = arith.addf %87, %88 : vector<8x128xf32>
    %cst_25 = arith.constant dense<0.000000e+00> : vector<8x384xf32>
    %90 = tpu.matmul %89, %3, %cst_25 {dimension_numbers = #tpu.dot_dimension_numbers<[1], [0], [0], [1], [0, 0, 1, 1], [], []>} : vector<8x128xf32>, vector<128x384xf32>, vector<8x384xf32> -> vector<8x384xf32>
    %91 = arith.addf %90, %15 : vector<8x384xf32>
    %92 = vector.extract_strided_slice %91 {offsets = [0, 0], sizes = [8, 128], strides = [1, 1]} : vector<8x384xf32> to vector<8x128xf32>
    %93 = arith.addf %41, %92 : vector<8x128xf32>
    %94 = arith.negf %93 : vector<8x128xf32>
    %95 = math.exp %94 : vector<8x128xf32>
    %cst_26 = arith.constant 1.000000e+00 : f32
    %96 = vector.broadcast %cst_26 : f32 to vector<8x128xf32>
    %97 = arith.addf %96, %95 : vector<8x128xf32>
    %98 = arith.divf %96, %97 : vector<8x128xf32>
    %99 = vector.extract_strided_slice %91 {offsets = [0, 128], sizes = [8, 128], strides = [1, 1]} : vector<8x384xf32> to vector<8x128xf32>
    %100 = arith.addf %42, %99 : vector<8x128xf32>
    %101 = arith.negf %100 : vector<8x128xf32>
    %102 = math.exp %101 : vector<8x128xf32>
    %cst_27 = arith.constant 1.000000e+00 : f32
    %103 = vector.broadcast %cst_27 : f32 to vector<8x128xf32>
    %104 = arith.addf %103, %102 : vector<8x128xf32>
    %105 = arith.divf %103, %104 : vector<8x128xf32>
    %106 = vector.extract_strided_slice %91 {offsets = [0, 256], sizes = [8, 128], strides = [1, 1]} : vector<8x384xf32> to vector<8x128xf32>
    %107 = arith.mulf %98, %106 : vector<8x128xf32>
    %108 = arith.addf %43, %107 : vector<8x128xf32>
    %109 = math.tanh %108 : vector<8x128xf32>
    %cst_28 = arith.constant 1.000000e+00 : f32
    %110 = vector.broadcast %cst_28 : f32 to vector<8x128xf32>
    %111 = arith.subf %110, %105 : vector<8x128xf32>
    %112 = arith.mulf %111, %109 : vector<8x128xf32>
    %113 = arith.mulf %105, %89 : vector<8x128xf32>
    %114 = arith.addf %112, %113 : vector<8x128xf32>
    %cst_29 = arith.constant dense<0.000000e+00> : vector<8x384xf32>
    %115 = tpu.matmul %114, %3, %cst_29 {dimension_numbers = #tpu.dot_dimension_numbers<[1], [0], [0], [1], [0, 0, 1, 1], [], []>} : vector<8x128xf32>, vector<128x384xf32>, vector<8x384xf32> -> vector<8x384xf32>
    %116 = arith.addf %115, %15 : vector<8x384xf32>
    %117 = vector.extract_strided_slice %116 {offsets = [0, 0], sizes = [8, 128], strides = [1, 1]} : vector<8x384xf32> to vector<8x128xf32>
    %118 = arith.addf %45, %117 : vector<8x128xf32>
    %119 = arith.negf %118 : vector<8x128xf32>
    %120 = math.exp %119 : vector<8x128xf32>
    %cst_30 = arith.constant 1.000000e+00 : f32
    %121 = vector.broadcast %cst_30 : f32 to vector<8x128xf32>
    %122 = arith.addf %121, %120 : vector<8x128xf32>
    %123 = arith.divf %121, %122 : vector<8x128xf32>
    %124 = vector.extract_strided_slice %116 {offsets = [0, 128], sizes = [8, 128], strides = [1, 1]} : vector<8x384xf32> to vector<8x128xf32>
    %125 = arith.addf %46, %124 : vector<8x128xf32>
    %126 = arith.negf %125 : vector<8x128xf32>
    %127 = math.exp %126 : vector<8x128xf32>
    %cst_31 = arith.constant 1.000000e+00 : f32
    %128 = vector.broadcast %cst_31 : f32 to vector<8x128xf32>
    %129 = arith.addf %128, %127 : vector<8x128xf32>
    %130 = arith.divf %128, %129 : vector<8x128xf32>
    %131 = vector.extract_strided_slice %116 {offsets = [0, 256], sizes = [8, 128], strides = [1, 1]} : vector<8x384xf32> to vector<8x128xf32>
    %132 = arith.mulf %123, %131 : vector<8x128xf32>
    %133 = arith.addf %47, %132 : vector<8x128xf32>
    %134 = math.tanh %133 : vector<8x128xf32>
    %cst_32 = arith.constant 1.000000e+00 : f32
    %135 = vector.broadcast %cst_32 : f32 to vector<8x128xf32>
    %136 = arith.subf %135, %130 : vector<8x128xf32>
    %137 = arith.mulf %136, %134 : vector<8x128xf32>
    %138 = arith.mulf %130, %114 : vector<8x128xf32>
    %139 = arith.addf %137, %138 : vector<8x128xf32>
    %cst_33 = arith.constant dense<0.000000e+00> : vector<8x384xf32>
    %140 = tpu.matmul %139, %3, %cst_33 {dimension_numbers = #tpu.dot_dimension_numbers<[1], [0], [0], [1], [0, 0, 1, 1], [], []>} : vector<8x128xf32>, vector<128x384xf32>, vector<8x384xf32> -> vector<8x384xf32>
    %141 = arith.addf %140, %15 : vector<8x384xf32>
    %142 = vector.extract_strided_slice %141 {offsets = [0, 0], sizes = [8, 128], strides = [1, 1]} : vector<8x384xf32> to vector<8x128xf32>
    %143 = arith.addf %49, %142 : vector<8x128xf32>
    %144 = arith.negf %143 : vector<8x128xf32>
    %145 = math.exp %144 : vector<8x128xf32>
    %cst_34 = arith.constant 1.000000e+00 : f32
    %146 = vector.broadcast %cst_34 : f32 to vector<8x128xf32>
    %147 = arith.addf %146, %145 : vector<8x128xf32>
    %148 = arith.divf %146, %147 : vector<8x128xf32>
    %149 = vector.extract_strided_slice %141 {offsets = [0, 128], sizes = [8, 128], strides = [1, 1]} : vector<8x384xf32> to vector<8x128xf32>
    %150 = arith.addf %50, %149 : vector<8x128xf32>
    %151 = arith.negf %150 : vector<8x128xf32>
    %152 = math.exp %151 : vector<8x128xf32>
    %cst_35 = arith.constant 1.000000e+00 : f32
    %153 = vector.broadcast %cst_35 : f32 to vector<8x128xf32>
    %154 = arith.addf %153, %152 : vector<8x128xf32>
    %155 = arith.divf %153, %154 : vector<8x128xf32>
    %156 = vector.extract_strided_slice %141 {offsets = [0, 256], sizes = [8, 128], strides = [1, 1]} : vector<8x384xf32> to vector<8x128xf32>
    %157 = arith.mulf %148, %156 : vector<8x128xf32>
    %158 = arith.addf %51, %157 : vector<8x128xf32>
    %159 = math.tanh %158 : vector<8x128xf32>
    %cst_36 = arith.constant 1.000000e+00 : f32
    %160 = vector.broadcast %cst_36 : f32 to vector<8x128xf32>
    %161 = arith.subf %160, %155 : vector<8x128xf32>
    %162 = arith.mulf %161, %159 : vector<8x128xf32>
    %163 = arith.mulf %155, %139 : vector<8x128xf32>
    %164 = arith.addf %162, %163 : vector<8x128xf32>
    %cst_37 = arith.constant dense<0.000000e+00> : vector<8x384xf32>
    %165 = tpu.matmul %164, %3, %cst_37 {dimension_numbers = #tpu.dot_dimension_numbers<[1], [0], [0], [1], [0, 0, 1, 1], [], []>} : vector<8x128xf32>, vector<128x384xf32>, vector<8x384xf32> -> vector<8x384xf32>
    %166 = arith.addf %165, %15 : vector<8x384xf32>
    %167 = vector.extract_strided_slice %166 {offsets = [0, 0], sizes = [8, 128], strides = [1, 1]} : vector<8x384xf32> to vector<8x128xf32>
    %168 = arith.addf %53, %167 : vector<8x128xf32>
    %169 = arith.negf %168 : vector<8x128xf32>
    %170 = math.exp %169 : vector<8x128xf32>
    %cst_38 = arith.constant 1.000000e+00 : f32
    %171 = vector.broadcast %cst_38 : f32 to vector<8x128xf32>
    %172 = arith.addf %171, %170 : vector<8x128xf32>
    %173 = arith.divf %171, %172 : vector<8x128xf32>
    %174 = vector.extract_strided_slice %166 {offsets = [0, 128], sizes = [8, 128], strides = [1, 1]} : vector<8x384xf32> to vector<8x128xf32>
    %175 = arith.addf %54, %174 : vector<8x128xf32>
    %176 = arith.negf %175 : vector<8x128xf32>
    %177 = math.exp %176 : vector<8x128xf32>
    %cst_39 = arith.constant 1.000000e+00 : f32
    %178 = vector.broadcast %cst_39 : f32 to vector<8x128xf32>
    %179 = arith.addf %178, %177 : vector<8x128xf32>
    %180 = arith.divf %178, %179 : vector<8x128xf32>
    %181 = vector.extract_strided_slice %166 {offsets = [0, 256], sizes = [8, 128], strides = [1, 1]} : vector<8x384xf32> to vector<8x128xf32>
    %182 = arith.mulf %173, %181 : vector<8x128xf32>
    %183 = arith.addf %55, %182 : vector<8x128xf32>
    %184 = math.tanh %183 : vector<8x128xf32>
    %cst_40 = arith.constant 1.000000e+00 : f32
    %185 = vector.broadcast %cst_40 : f32 to vector<8x128xf32>
    %186 = arith.subf %185, %180 : vector<8x128xf32>
    %187 = arith.mulf %186, %184 : vector<8x128xf32>
    %188 = arith.mulf %180, %164 : vector<8x128xf32>
    %189 = arith.addf %187, %188 : vector<8x128xf32>
    %cst_41 = arith.constant dense<0.000000e+00> : vector<8x384xf32>
    %190 = tpu.matmul %189, %3, %cst_41 {dimension_numbers = #tpu.dot_dimension_numbers<[1], [0], [0], [1], [0, 0, 1, 1], [], []>} : vector<8x128xf32>, vector<128x384xf32>, vector<8x384xf32> -> vector<8x384xf32>
    %191 = arith.addf %190, %15 : vector<8x384xf32>
    %192 = vector.extract_strided_slice %191 {offsets = [0, 0], sizes = [8, 128], strides = [1, 1]} : vector<8x384xf32> to vector<8x128xf32>
    %193 = arith.addf %57, %192 : vector<8x128xf32>
    %194 = arith.negf %193 : vector<8x128xf32>
    %195 = math.exp %194 : vector<8x128xf32>
    %cst_42 = arith.constant 1.000000e+00 : f32
    %196 = vector.broadcast %cst_42 : f32 to vector<8x128xf32>
    %197 = arith.addf %196, %195 : vector<8x128xf32>
    %198 = arith.divf %196, %197 : vector<8x128xf32>
    %199 = vector.extract_strided_slice %191 {offsets = [0, 128], sizes = [8, 128], strides = [1, 1]} : vector<8x384xf32> to vector<8x128xf32>
    %200 = arith.addf %58, %199 : vector<8x128xf32>
    %201 = arith.negf %200 : vector<8x128xf32>
    %202 = math.exp %201 : vector<8x128xf32>
    %cst_43 = arith.constant 1.000000e+00 : f32
    %203 = vector.broadcast %cst_43 : f32 to vector<8x128xf32>
    %204 = arith.addf %203, %202 : vector<8x128xf32>
    %205 = arith.divf %203, %204 : vector<8x128xf32>
    %206 = vector.extract_strided_slice %191 {offsets = [0, 256], sizes = [8, 128], strides = [1, 1]} : vector<8x384xf32> to vector<8x128xf32>
    %207 = arith.mulf %198, %206 : vector<8x128xf32>
    %208 = arith.addf %59, %207 : vector<8x128xf32>
    %209 = math.tanh %208 : vector<8x128xf32>
    %cst_44 = arith.constant 1.000000e+00 : f32
    %210 = vector.broadcast %cst_44 : f32 to vector<8x128xf32>
    %211 = arith.subf %210, %205 : vector<8x128xf32>
    %212 = arith.mulf %211, %209 : vector<8x128xf32>
    %213 = arith.mulf %205, %189 : vector<8x128xf32>
    %214 = arith.addf %212, %213 : vector<8x128xf32>
    %cst_45 = arith.constant dense<0.000000e+00> : vector<8x384xf32>
    %215 = tpu.matmul %214, %3, %cst_45 {dimension_numbers = #tpu.dot_dimension_numbers<[1], [0], [0], [1], [0, 0, 1, 1], [], []>} : vector<8x128xf32>, vector<128x384xf32>, vector<8x384xf32> -> vector<8x384xf32>
    %216 = arith.addf %215, %15 : vector<8x384xf32>
    %217 = vector.extract_strided_slice %216 {offsets = [0, 0], sizes = [8, 128], strides = [1, 1]} : vector<8x384xf32> to vector<8x128xf32>
    %218 = arith.addf %61, %217 : vector<8x128xf32>
    %219 = arith.negf %218 : vector<8x128xf32>
    %220 = math.exp %219 : vector<8x128xf32>
    %cst_46 = arith.constant 1.000000e+00 : f32
    %221 = vector.broadcast %cst_46 : f32 to vector<8x128xf32>
    %222 = arith.addf %221, %220 : vector<8x128xf32>
    %223 = arith.divf %221, %222 : vector<8x128xf32>
    %224 = vector.extract_strided_slice %216 {offsets = [0, 128], sizes = [8, 128], strides = [1, 1]} : vector<8x384xf32> to vector<8x128xf32>
    %225 = arith.addf %62, %224 : vector<8x128xf32>
    %226 = arith.negf %225 : vector<8x128xf32>
    %227 = math.exp %226 : vector<8x128xf32>
    %cst_47 = arith.constant 1.000000e+00 : f32
    %228 = vector.broadcast %cst_47 : f32 to vector<8x128xf32>
    %229 = arith.addf %228, %227 : vector<8x128xf32>
    %230 = arith.divf %228, %229 : vector<8x128xf32>
    %231 = vector.extract_strided_slice %216 {offsets = [0, 256], sizes = [8, 128], strides = [1, 1]} : vector<8x384xf32> to vector<8x128xf32>
    %232 = arith.mulf %223, %231 : vector<8x128xf32>
    %233 = arith.addf %63, %232 : vector<8x128xf32>
    %234 = math.tanh %233 : vector<8x128xf32>
    %cst_48 = arith.constant 1.000000e+00 : f32
    %235 = vector.broadcast %cst_48 : f32 to vector<8x128xf32>
    %236 = arith.subf %235, %230 : vector<8x128xf32>
    %237 = arith.mulf %236, %234 : vector<8x128xf32>
    %238 = arith.mulf %230, %214 : vector<8x128xf32>
    %239 = arith.addf %237, %238 : vector<8x128xf32>
    %cst_49 = arith.constant dense<0.000000e+00> : vector<8x16xf32>
    %240 = tpu.matmul %239, %6, %cst_49 {dimension_numbers = #tpu.dot_dimension_numbers<[1], [0], [0], [1], [0, 0, 1, 1], [], []>} : vector<8x128xf32>, vector<128x16xf32>, vector<8x16xf32> -> vector<8x16xf32>
    %241 = arith.addf %240, %24 : vector<8x16xf32>
    %242 = vector.extract_strided_slice %241 {offsets = [0, 0], sizes = [8, 8], strides = [1, 1]} : vector<8x16xf32> to vector<8x8xf32>
    %243 = vector.extract_strided_slice %241 {offsets = [0, 8], sizes = [8, 8], strides = [1, 1]} : vector<8x16xf32> to vector<8x8xf32>
    %cst_50 = arith.constant 5.000000e-01 : f32
    %244 = vector.broadcast %cst_50 : f32 to vector<8x8xf32>
    %245 = arith.mulf %244, %243 : vector<8x8xf32>
    %246 = math.exp %245 : vector<8x8xf32>
    %cst_51 = arith.constant 0.00999999977 : f32
    %247 = vector.broadcast %cst_51 : f32 to vector<8x8xf32>
    %248 = arith.mulf %1, %247 : vector<8x8xf32>
    %249 = arith.mulf %248, %246 : vector<8x8xf32>
    %250 = arith.addf %249, %242 : vector<8x8xf32>
    %cst_52 = arith.constant dense<0.000000e+00> : vector<8x128xf32>
    %251 = tpu.matmul %250, %7, %cst_52 {dimension_numbers = #tpu.dot_dimension_numbers<[1], [0], [0], [1], [0, 0, 1, 1], [], []>} : vector<8x8xf32>, vector<8x128xf32>, vector<8x128xf32> -> vector<8x128xf32>
    %252 = arith.addf %251, %27 : vector<8x128xf32>
    %cst_53 = arith.constant 0.000000e+00 : f32
    %253 = vector.broadcast %cst_53 : f32 to vector<8x128xf32>
    %254 = arith.maximumf %252, %253 : vector<8x128xf32>
    %cst_54 = arith.constant dense<0.000000e+00> : vector<8x384xf32>
    %255 = tpu.matmul %254, %4, %cst_54 {dimension_numbers = #tpu.dot_dimension_numbers<[1], [0], [0], [1], [0, 0, 1, 1], [], []>} : vector<8x128xf32>, vector<128x384xf32>, vector<8x384xf32> -> vector<8x384xf32>
    %256 = arith.addf %255, %18 : vector<8x384xf32>
    %257 = vector.extract_strided_slice %256 {offsets = [0, 0], sizes = [8, 128], strides = [1, 1]} : vector<8x384xf32> to vector<8x128xf32>
    %258 = vector.extract_strided_slice %256 {offsets = [0, 128], sizes = [8, 128], strides = [1, 1]} : vector<8x384xf32> to vector<8x128xf32>
    %259 = vector.extract_strided_slice %256 {offsets = [0, 256], sizes = [8, 128], strides = [1, 1]} : vector<8x384xf32> to vector<8x128xf32>
    %cst_55 = arith.constant 0.000000e+00 : f32
    %260 = vector.broadcast %cst_55 : f32 to vector<8x128xf32>
    %cst_56 = arith.constant dense<0.000000e+00> : vector<8x384xf32>
    %261 = tpu.matmul %260, %5, %cst_56 {dimension_numbers = #tpu.dot_dimension_numbers<[1], [0], [0], [1], [0, 0, 1, 1], [], []>} : vector<8x128xf32>, vector<128x384xf32>, vector<8x384xf32> -> vector<8x384xf32>
    %262 = arith.addf %261, %21 : vector<8x384xf32>
    %263 = vector.extract_strided_slice %262 {offsets = [0, 0], sizes = [8, 128], strides = [1, 1]} : vector<8x384xf32> to vector<8x128xf32>
    %264 = arith.addf %257, %263 : vector<8x128xf32>
    %265 = arith.negf %264 : vector<8x128xf32>
    %266 = math.exp %265 : vector<8x128xf32>
    %cst_57 = arith.constant 1.000000e+00 : f32
    %267 = vector.broadcast %cst_57 : f32 to vector<8x128xf32>
    %268 = arith.addf %267, %266 : vector<8x128xf32>
    %269 = arith.divf %267, %268 : vector<8x128xf32>
    %270 = vector.extract_strided_slice %262 {offsets = [0, 128], sizes = [8, 128], strides = [1, 1]} : vector<8x384xf32> to vector<8x128xf32>
    %271 = arith.addf %258, %270 : vector<8x128xf32>
    %272 = arith.negf %271 : vector<8x128xf32>
    %273 = math.exp %272 : vector<8x128xf32>
    %cst_58 = arith.constant 1.000000e+00 : f32
    %274 = vector.broadcast %cst_58 : f32 to vector<8x128xf32>
    %275 = arith.addf %274, %273 : vector<8x128xf32>
    %276 = arith.divf %274, %275 : vector<8x128xf32>
    %277 = vector.extract_strided_slice %262 {offsets = [0, 256], sizes = [8, 128], strides = [1, 1]} : vector<8x384xf32> to vector<8x128xf32>
    %278 = arith.mulf %269, %277 : vector<8x128xf32>
    %279 = arith.addf %259, %278 : vector<8x128xf32>
    %280 = math.tanh %279 : vector<8x128xf32>
    %cst_59 = arith.constant 1.000000e+00 : f32
    %281 = vector.broadcast %cst_59 : f32 to vector<8x128xf32>
    %282 = arith.subf %281, %276 : vector<8x128xf32>
    %283 = arith.mulf %282, %280 : vector<8x128xf32>
    %284 = arith.mulf %276, %260 : vector<8x128xf32>
    %285 = arith.addf %283, %284 : vector<8x128xf32>
    %cst_60 = arith.constant dense<0.000000e+00> : vector<8x384xf32>
    %286 = tpu.matmul %285, %5, %cst_60 {dimension_numbers = #tpu.dot_dimension_numbers<[1], [0], [0], [1], [0, 0, 1, 1], [], []>} : vector<8x128xf32>, vector<128x384xf32>, vector<8x384xf32> -> vector<8x384xf32>
    %287 = arith.addf %286, %21 : vector<8x384xf32>
    %288 = vector.extract_strided_slice %287 {offsets = [0, 0], sizes = [8, 128], strides = [1, 1]} : vector<8x384xf32> to vector<8x128xf32>
    %289 = arith.addf %257, %288 : vector<8x128xf32>
    %290 = arith.negf %289 : vector<8x128xf32>
    %291 = math.exp %290 : vector<8x128xf32>
    %cst_61 = arith.constant 1.000000e+00 : f32
    %292 = vector.broadcast %cst_61 : f32 to vector<8x128xf32>
    %293 = arith.addf %292, %291 : vector<8x128xf32>
    %294 = arith.divf %292, %293 : vector<8x128xf32>
    %295 = vector.extract_strided_slice %287 {offsets = [0, 128], sizes = [8, 128], strides = [1, 1]} : vector<8x384xf32> to vector<8x128xf32>
    %296 = arith.addf %258, %295 : vector<8x128xf32>
    %297 = arith.negf %296 : vector<8x128xf32>
    %298 = math.exp %297 : vector<8x128xf32>
    %cst_62 = arith.constant 1.000000e+00 : f32
    %299 = vector.broadcast %cst_62 : f32 to vector<8x128xf32>
    %300 = arith.addf %299, %298 : vector<8x128xf32>
    %301 = arith.divf %299, %300 : vector<8x128xf32>
    %302 = vector.extract_strided_slice %287 {offsets = [0, 256], sizes = [8, 128], strides = [1, 1]} : vector<8x384xf32> to vector<8x128xf32>
    %303 = arith.mulf %294, %302 : vector<8x128xf32>
    %304 = arith.addf %259, %303 : vector<8x128xf32>
    %305 = math.tanh %304 : vector<8x128xf32>
    %cst_63 = arith.constant 1.000000e+00 : f32
    %306 = vector.broadcast %cst_63 : f32 to vector<8x128xf32>
    %307 = arith.subf %306, %301 : vector<8x128xf32>
    %308 = arith.mulf %307, %305 : vector<8x128xf32>
    %309 = arith.mulf %301, %285 : vector<8x128xf32>
    %310 = arith.addf %308, %309 : vector<8x128xf32>
    %cst_64 = arith.constant dense<0.000000e+00> : vector<8x384xf32>
    %311 = tpu.matmul %310, %5, %cst_64 {dimension_numbers = #tpu.dot_dimension_numbers<[1], [0], [0], [1], [0, 0, 1, 1], [], []>} : vector<8x128xf32>, vector<128x384xf32>, vector<8x384xf32> -> vector<8x384xf32>
    %312 = arith.addf %311, %21 : vector<8x384xf32>
    %313 = vector.extract_strided_slice %312 {offsets = [0, 0], sizes = [8, 128], strides = [1, 1]} : vector<8x384xf32> to vector<8x128xf32>
    %314 = arith.addf %257, %313 : vector<8x128xf32>
    %315 = arith.negf %314 : vector<8x128xf32>
    %316 = math.exp %315 : vector<8x128xf32>
    %cst_65 = arith.constant 1.000000e+00 : f32
    %317 = vector.broadcast %cst_65 : f32 to vector<8x128xf32>
    %318 = arith.addf %317, %316 : vector<8x128xf32>
    %319 = arith.divf %317, %318 : vector<8x128xf32>
    %320 = vector.extract_strided_slice %312 {offsets = [0, 128], sizes = [8, 128], strides = [1, 1]} : vector<8x384xf32> to vector<8x128xf32>
    %321 = arith.addf %258, %320 : vector<8x128xf32>
    %322 = arith.negf %321 : vector<8x128xf32>
    %323 = math.exp %322 : vector<8x128xf32>
    %cst_66 = arith.constant 1.000000e+00 : f32
    %324 = vector.broadcast %cst_66 : f32 to vector<8x128xf32>
    %325 = arith.addf %324, %323 : vector<8x128xf32>
    %326 = arith.divf %324, %325 : vector<8x128xf32>
    %327 = vector.extract_strided_slice %312 {offsets = [0, 256], sizes = [8, 128], strides = [1, 1]} : vector<8x384xf32> to vector<8x128xf32>
    %328 = arith.mulf %319, %327 : vector<8x128xf32>
    %329 = arith.addf %259, %328 : vector<8x128xf32>
    %330 = math.tanh %329 : vector<8x128xf32>
    %cst_67 = arith.constant 1.000000e+00 : f32
    %331 = vector.broadcast %cst_67 : f32 to vector<8x128xf32>
    %332 = arith.subf %331, %326 : vector<8x128xf32>
    %333 = arith.mulf %332, %330 : vector<8x128xf32>
    %334 = arith.mulf %326, %310 : vector<8x128xf32>
    %335 = arith.addf %333, %334 : vector<8x128xf32>
    %cst_68 = arith.constant dense<0.000000e+00> : vector<8x384xf32>
    %336 = tpu.matmul %335, %5, %cst_68 {dimension_numbers = #tpu.dot_dimension_numbers<[1], [0], [0], [1], [0, 0, 1, 1], [], []>} : vector<8x128xf32>, vector<128x384xf32>, vector<8x384xf32> -> vector<8x384xf32>
    %337 = arith.addf %336, %21 : vector<8x384xf32>
    %338 = vector.extract_strided_slice %337 {offsets = [0, 0], sizes = [8, 128], strides = [1, 1]} : vector<8x384xf32> to vector<8x128xf32>
    %339 = arith.addf %257, %338 : vector<8x128xf32>
    %340 = arith.negf %339 : vector<8x128xf32>
    %341 = math.exp %340 : vector<8x128xf32>
    %cst_69 = arith.constant 1.000000e+00 : f32
    %342 = vector.broadcast %cst_69 : f32 to vector<8x128xf32>
    %343 = arith.addf %342, %341 : vector<8x128xf32>
    %344 = arith.divf %342, %343 : vector<8x128xf32>
    %345 = vector.extract_strided_slice %337 {offsets = [0, 128], sizes = [8, 128], strides = [1, 1]} : vector<8x384xf32> to vector<8x128xf32>
    %346 = arith.addf %258, %345 : vector<8x128xf32>
    %347 = arith.negf %346 : vector<8x128xf32>
    %348 = math.exp %347 : vector<8x128xf32>
    %cst_70 = arith.constant 1.000000e+00 : f32
    %349 = vector.broadcast %cst_70 : f32 to vector<8x128xf32>
    %350 = arith.addf %349, %348 : vector<8x128xf32>
    %351 = arith.divf %349, %350 : vector<8x128xf32>
    %352 = vector.extract_strided_slice %337 {offsets = [0, 256], sizes = [8, 128], strides = [1, 1]} : vector<8x384xf32> to vector<8x128xf32>
    %353 = arith.mulf %344, %352 : vector<8x128xf32>
    %354 = arith.addf %259, %353 : vector<8x128xf32>
    %355 = math.tanh %354 : vector<8x128xf32>
    %cst_71 = arith.constant 1.000000e+00 : f32
    %356 = vector.broadcast %cst_71 : f32 to vector<8x128xf32>
    %357 = arith.subf %356, %351 : vector<8x128xf32>
    %358 = arith.mulf %357, %355 : vector<8x128xf32>
    %359 = arith.mulf %351, %335 : vector<8x128xf32>
    %360 = arith.addf %358, %359 : vector<8x128xf32>
    %cst_72 = arith.constant dense<0.000000e+00> : vector<8x384xf32>
    %361 = tpu.matmul %360, %5, %cst_72 {dimension_numbers = #tpu.dot_dimension_numbers<[1], [0], [0], [1], [0, 0, 1, 1], [], []>} : vector<8x128xf32>, vector<128x384xf32>, vector<8x384xf32> -> vector<8x384xf32>
    %362 = arith.addf %361, %21 : vector<8x384xf32>
    %363 = vector.extract_strided_slice %362 {offsets = [0, 0], sizes = [8, 128], strides = [1, 1]} : vector<8x384xf32> to vector<8x128xf32>
    %364 = arith.addf %257, %363 : vector<8x128xf32>
    %365 = arith.negf %364 : vector<8x128xf32>
    %366 = math.exp %365 : vector<8x128xf32>
    %cst_73 = arith.constant 1.000000e+00 : f32
    %367 = vector.broadcast %cst_73 : f32 to vector<8x128xf32>
    %368 = arith.addf %367, %366 : vector<8x128xf32>
    %369 = arith.divf %367, %368 : vector<8x128xf32>
    %370 = vector.extract_strided_slice %362 {offsets = [0, 128], sizes = [8, 128], strides = [1, 1]} : vector<8x384xf32> to vector<8x128xf32>
    %371 = arith.addf %258, %370 : vector<8x128xf32>
    %372 = arith.negf %371 : vector<8x128xf32>
    %373 = math.exp %372 : vector<8x128xf32>
    %cst_74 = arith.constant 1.000000e+00 : f32
    %374 = vector.broadcast %cst_74 : f32 to vector<8x128xf32>
    %375 = arith.addf %374, %373 : vector<8x128xf32>
    %376 = arith.divf %374, %375 : vector<8x128xf32>
    %377 = vector.extract_strided_slice %362 {offsets = [0, 256], sizes = [8, 128], strides = [1, 1]} : vector<8x384xf32> to vector<8x128xf32>
    %378 = arith.mulf %369, %377 : vector<8x128xf32>
    %379 = arith.addf %259, %378 : vector<8x128xf32>
    %380 = math.tanh %379 : vector<8x128xf32>
    %cst_75 = arith.constant 1.000000e+00 : f32
    %381 = vector.broadcast %cst_75 : f32 to vector<8x128xf32>
    %382 = arith.subf %381, %376 : vector<8x128xf32>
    %383 = arith.mulf %382, %380 : vector<8x128xf32>
    %384 = arith.mulf %376, %360 : vector<8x128xf32>
    %385 = arith.addf %383, %384 : vector<8x128xf32>
    %cst_76 = arith.constant dense<0.000000e+00> : vector<8x384xf32>
    %386 = tpu.matmul %385, %5, %cst_76 {dimension_numbers = #tpu.dot_dimension_numbers<[1], [0], [0], [1], [0, 0, 1, 1], [], []>} : vector<8x128xf32>, vector<128x384xf32>, vector<8x384xf32> -> vector<8x384xf32>
    %387 = arith.addf %386, %21 : vector<8x384xf32>
    %388 = vector.extract_strided_slice %387 {offsets = [0, 0], sizes = [8, 128], strides = [1, 1]} : vector<8x384xf32> to vector<8x128xf32>
    %389 = arith.addf %257, %388 : vector<8x128xf32>
    %390 = arith.negf %389 : vector<8x128xf32>
    %391 = math.exp %390 : vector<8x128xf32>
    %cst_77 = arith.constant 1.000000e+00 : f32
    %392 = vector.broadcast %cst_77 : f32 to vector<8x128xf32>
    %393 = arith.addf %392, %391 : vector<8x128xf32>
    %394 = arith.divf %392, %393 : vector<8x128xf32>
    %395 = vector.extract_strided_slice %387 {offsets = [0, 128], sizes = [8, 128], strides = [1, 1]} : vector<8x384xf32> to vector<8x128xf32>
    %396 = arith.addf %258, %395 : vector<8x128xf32>
    %397 = arith.negf %396 : vector<8x128xf32>
    %398 = math.exp %397 : vector<8x128xf32>
    %cst_78 = arith.constant 1.000000e+00 : f32
    %399 = vector.broadcast %cst_78 : f32 to vector<8x128xf32>
    %400 = arith.addf %399, %398 : vector<8x128xf32>
    %401 = arith.divf %399, %400 : vector<8x128xf32>
    %402 = vector.extract_strided_slice %387 {offsets = [0, 256], sizes = [8, 128], strides = [1, 1]} : vector<8x384xf32> to vector<8x128xf32>
    %403 = arith.mulf %394, %402 : vector<8x128xf32>
    %404 = arith.addf %259, %403 : vector<8x128xf32>
    %405 = math.tanh %404 : vector<8x128xf32>
    %cst_79 = arith.constant 1.000000e+00 : f32
    %406 = vector.broadcast %cst_79 : f32 to vector<8x128xf32>
    %407 = arith.subf %406, %401 : vector<8x128xf32>
    %408 = arith.mulf %407, %405 : vector<8x128xf32>
    %409 = arith.mulf %401, %385 : vector<8x128xf32>
    %410 = arith.addf %408, %409 : vector<8x128xf32>
    %cst_80 = arith.constant dense<0.000000e+00> : vector<8x384xf32>
    %411 = tpu.matmul %410, %5, %cst_80 {dimension_numbers = #tpu.dot_dimension_numbers<[1], [0], [0], [1], [0, 0, 1, 1], [], []>} : vector<8x128xf32>, vector<128x384xf32>, vector<8x384xf32> -> vector<8x384xf32>
    %412 = arith.addf %411, %21 : vector<8x384xf32>
    %413 = vector.extract_strided_slice %412 {offsets = [0, 0], sizes = [8, 128], strides = [1, 1]} : vector<8x384xf32> to vector<8x128xf32>
    %414 = arith.addf %257, %413 : vector<8x128xf32>
    %415 = arith.negf %414 : vector<8x128xf32>
    %416 = math.exp %415 : vector<8x128xf32>
    %cst_81 = arith.constant 1.000000e+00 : f32
    %417 = vector.broadcast %cst_81 : f32 to vector<8x128xf32>
    %418 = arith.addf %417, %416 : vector<8x128xf32>
    %419 = arith.divf %417, %418 : vector<8x128xf32>
    %420 = vector.extract_strided_slice %412 {offsets = [0, 128], sizes = [8, 128], strides = [1, 1]} : vector<8x384xf32> to vector<8x128xf32>
    %421 = arith.addf %258, %420 : vector<8x128xf32>
    %422 = arith.negf %421 : vector<8x128xf32>
    %423 = math.exp %422 : vector<8x128xf32>
    %cst_82 = arith.constant 1.000000e+00 : f32
    %424 = vector.broadcast %cst_82 : f32 to vector<8x128xf32>
    %425 = arith.addf %424, %423 : vector<8x128xf32>
    %426 = arith.divf %424, %425 : vector<8x128xf32>
    %427 = vector.extract_strided_slice %412 {offsets = [0, 256], sizes = [8, 128], strides = [1, 1]} : vector<8x384xf32> to vector<8x128xf32>
    %428 = arith.mulf %419, %427 : vector<8x128xf32>
    %429 = arith.addf %259, %428 : vector<8x128xf32>
    %430 = math.tanh %429 : vector<8x128xf32>
    %cst_83 = arith.constant 1.000000e+00 : f32
    %431 = vector.broadcast %cst_83 : f32 to vector<8x128xf32>
    %432 = arith.subf %431, %426 : vector<8x128xf32>
    %433 = arith.mulf %432, %430 : vector<8x128xf32>
    %434 = arith.mulf %426, %410 : vector<8x128xf32>
    %435 = arith.addf %433, %434 : vector<8x128xf32>
    %436 = tpu.concatenate %285, %310, %335, %360, %385, %410, %435 in 0 : vector<8x128xf32>, vector<8x128xf32>, vector<8x128xf32>, vector<8x128xf32>, vector<8x128xf32>, vector<8x128xf32>, vector<8x128xf32> -> vector<56x128xf32>
    %cst_84 = arith.constant dense<0.000000e+00> : vector<56x64xf32>
    %437 = tpu.matmul %436, %8, %cst_84 {dimension_numbers = #tpu.dot_dimension_numbers<[1], [0], [0], [1], [0, 0, 1, 1], [], []>} : vector<56x128xf32>, vector<128x64xf32>, vector<56x64xf32> -> vector<56x64xf32>
    %438 = arith.addf %437, %30 : vector<56x64xf32>
    %cst_85 = arith.constant 0.000000e+00 : f32
    %439 = vector.broadcast %cst_85 : f32 to vector<56x64xf32>
    %440 = arith.maximumf %438, %439 : vector<56x64xf32>
    %cst_86 = arith.constant dense<0.000000e+00> : vector<56x13xf32>
    %441 = tpu.matmul %440, %9, %cst_86 {dimension_numbers = #tpu.dot_dimension_numbers<[1], [0], [0], [1], [0, 0, 1, 1], [], []>} : vector<56x64xf32>, vector<64x13xf32>, vector<56x13xf32> -> vector<56x13xf32>
    %442 = arith.addf %441, %33 : vector<56x13xf32>
    %443 = vector.extract_strided_slice %442 {offsets = [0, 0], sizes = [56, 6], strides = [1, 1]} : vector<56x13xf32> to vector<56x6xf32>
    %444 = vector.extract_strided_slice %442 {offsets = [0, 6], sizes = [56, 7], strides = [1, 1]} : vector<56x13xf32> to vector<56x7xf32>
    %445 = vector.extract_strided_slice %0 {offsets = [0, 0], sizes = [56, 6], strides = [1, 1]} : vector<56x128xf32> to vector<56x6xf32>
    %446 = tpu.iota {dimensions = array<i32: 1>} : vector<56x6xi32>
    %cst_87 = arith.constant dense<0xFF800000> : vector<56xf32>
    %447 = vector.multi_reduction <maximumf>, %445, %cst_87 [1] : vector<56x6xf32> to vector<56xf32>
    %448 = vector.shape_cast %447 : vector<56xf32> to vector<56x1xf32>
    %449 = vector.broadcast %448 : vector<56x1xf32> to vector<56x6xf32>
    %450 = arith.cmpf oeq, %445, %449 : vector<56x6xf32>
    %c6_i32 = arith.constant 6 : i32
    %451 = vector.broadcast %c6_i32 : i32 to vector<56x6xi32>
    %452 = arith.select %450, %446, %451 : vector<56x6xi1>, vector<56x6xi32>
    %cst_88 = arith.constant dense<2147483647> : vector<56xi32>
    %453 = vector.multi_reduction <minsi>, %452, %cst_88 [1] : vector<56x6xi32> to vector<56xi32>
    %454 = vector.shape_cast %453 : vector<56xi32> to vector<56x1xi32>
    %455 = vector.broadcast %454 : vector<56x1xi32> to vector<56x6xi32>
    %456 = arith.cmpi eq, %446, %455 : vector<56x6xi32>
    %457 = arith.extui %456 : vector<56x6xi1> to vector<56x6xi32>
    %458 = arith.sitofp %457 : vector<56x6xi32> to vector<56x6xf32>
    %cst_89 = arith.constant dense<0xFF800000> : vector<56xf32>
    %459 = vector.multi_reduction <maximumf>, %443, %cst_89 [1] : vector<56x6xf32> to vector<56xf32>
    %460 = vector.shape_cast %459 : vector<56xf32> to vector<56x1xf32>
    %461 = vector.broadcast %460 : vector<56x1xf32> to vector<56x6xf32>
    %462 = arith.subf %443, %461 : vector<56x6xf32>
    %463 = math.exp %462 : vector<56x6xf32>
    %cst_90 = arith.constant dense<0.000000e+00> : vector<56xf32>
    %464 = vector.multi_reduction <add>, %463, %cst_90 [1] : vector<56x6xf32> to vector<56xf32>
    %465 = vector.shape_cast %464 : vector<56xf32> to vector<56x1xf32>
    %466 = math.log %465 : vector<56x1xf32>
    %467 = arith.addf %466, %460 : vector<56x1xf32>
    %468 = arith.mulf %458, %443 : vector<56x6xf32>
    %cst_91 = arith.constant dense<0.000000e+00> : vector<56xf32>
    %469 = vector.multi_reduction <add>, %468, %cst_91 [1] : vector<56x6xf32> to vector<56xf32>
    %470 = vector.shape_cast %469 : vector<56xf32> to vector<56x1xf32>
    %471 = arith.subf %467, %470 : vector<56x1xf32>
    %472 = vector.shape_cast %471 : vector<56x1xf32> to vector<1x56x1xf32>
    %cst_92 = arith.constant dense<0.000000e+00> : vector<1xf32>
    %473 = vector.multi_reduction <add>, %472, %cst_92 [1, 2] : vector<1x56x1xf32> to vector<1xf32>
    %474 = vector.shape_cast %473 : vector<1xf32> to vector<1x1x1xf32>
    %475 = vector.extract %474[0, 0, 0] : f32 from vector<1x1x1xf32>
    %476 = arith.negf %444 : vector<56x7xf32>
    %477 = math.exp %476 : vector<56x7xf32>
    %cst_93 = arith.constant 1.000000e+00 : f32
    %478 = vector.broadcast %cst_93 : f32 to vector<56x7xf32>
    %479 = arith.addf %478, %477 : vector<56x7xf32>
    %480 = arith.divf %478, %479 : vector<56x7xf32>
    %481 = vector.extract_strided_slice %0 {offsets = [0, 6], sizes = [56, 7], strides = [1, 1]} : vector<56x128xf32> to vector<56x7xf32>
    %482 = math.log %480 : vector<56x7xf32>
    %cst_94 = arith.constant -1.000000e+02 : f32
    %483 = vector.broadcast %cst_94 : f32 to vector<56x7xf32>
    %484 = arith.maximumf %482, %483 : vector<56x7xf32>
    %cst_95 = arith.constant 1.000000e+00 : f32
    %485 = vector.broadcast %cst_95 : f32 to vector<56x7xf32>
    %486 = arith.subf %485, %480 : vector<56x7xf32>
    %487 = math.log %486 : vector<56x7xf32>
    %cst_96 = arith.constant -1.000000e+02 : f32
    %488 = vector.broadcast %cst_96 : f32 to vector<56x7xf32>
    %489 = arith.maximumf %487, %488 : vector<56x7xf32>
    %490 = arith.mulf %481, %484 : vector<56x7xf32>
    %cst_97 = arith.constant 1.000000e+00 : f32
    %491 = vector.broadcast %cst_97 : f32 to vector<56x7xf32>
    %492 = arith.subf %491, %481 : vector<56x7xf32>
    %493 = arith.mulf %492, %489 : vector<56x7xf32>
    %494 = arith.addf %490, %493 : vector<56x7xf32>
    %cst_98 = arith.constant 0.000000e+00 : f32
    %495 = vector.broadcast %cst_98 : f32 to vector<56x7xf32>
    %496 = arith.subf %495, %494 : vector<56x7xf32>
    %497 = vector.shape_cast %496 : vector<56x7xf32> to vector<1x56x7xf32>
    %cst_99 = arith.constant dense<0.000000e+00> : vector<1xf32>
    %498 = vector.multi_reduction <add>, %497, %cst_99 [1, 2] : vector<1x56x7xf32> to vector<1xf32>
    %499 = vector.shape_cast %498 : vector<1xf32> to vector<1x1x1xf32>
    %500 = vector.extract %499[0, 0, 0] : f32 from vector<1x1x1xf32>
    %cst_100 = arith.constant 1.000000e+00 : f32
    %501 = vector.broadcast %cst_100 : f32 to vector<8x8xf32>
    %502 = arith.addf %501, %243 : vector<8x8xf32>
    %503 = arith.mulf %242, %242 : vector<8x8xf32>
    %504 = arith.subf %502, %503 : vector<8x8xf32>
    %505 = math.exp %243 : vector<8x8xf32>
    %506 = arith.subf %504, %505 : vector<8x8xf32>
    %507 = vector.shape_cast %506 : vector<8x8xf32> to vector<1x8x8xf32>
    %cst_101 = arith.constant dense<0.000000e+00> : vector<1xf32>
    %508 = vector.multi_reduction <add>, %507, %cst_101 [1, 2] : vector<1x8x8xf32> to vector<1xf32>
    %509 = vector.shape_cast %508 : vector<1xf32> to vector<1x1x1xf32>
    %510 = vector.extract %509[0, 0, 0] : f32 from vector<1x1x1xf32>
    %cst_102 = arith.constant -5.000000e-01 : f32
    %511 = arith.mulf %cst_102, %510 : f32
    %cst_103 = arith.constant 0.000000e+00 : f32
    %512 = vector.broadcast %cst_103 : f32 to vector<1x1xf32>
    %513 = vector.broadcast %475 : f32 to vector<1x1xf32>
    %514 = arith.addf %512, %513 : vector<1x1xf32>
    %515 = vector.broadcast %500 : f32 to vector<1x1xf32>
    %516 = arith.addf %514, %515 : vector<1x1xf32>
    %cst_104 = arith.constant 5.000000e-03 : f32
    %517 = arith.mulf %cst_104, %511 : f32
    %518 = vector.broadcast %517 : f32 to vector<1x1xf32>
    %519 = arith.addf %516, %518 : vector<1x1xf32>
    %c0_105 = arith.constant 0 : index
    %c0_106 = arith.constant 0 : index
    %520 = vector.load %arg3[%c0_105, %c0_106] : memref<1x1xf32, #tpu.memory_space<vmem>>, vector<1x1xf32>
    tpu.vector_store %arg3[%c0_105, %c0_106], %519 {strides = array<i32>} : memref<1x1xf32, #tpu.memory_space<vmem>>, vector<1x1xf32>,
    return
  }
}

</mosaic_0001>

<llo_original>
// kernel: svae_forward_loss.1
$region0: #{svae_forward_loss.1}
  #allocation0 [shape = 'u32[]', space=smem, size = 0x4, offset = 0x4, fixed_abs, tag = 'smem constant byte address 0x4 - core index']
  #allocation1 [shape = 'u32[72,128]{1,0:T(1,128)}', space=vmem, size = 0x9000, scoped, tag = 'internal scratch']
  %s0 = inlined_call_operand.vmem [shape: f32[64,128], index: 0, kind: input, shape index: {}]
  %s1 = inlined_call_operand.vmem [shape: f32[840,384], index: 1, kind: input, shape index: {}]
  %s2 = inlined_call_operand.vmem [shape: f32[8,384], index: 2, kind: input, shape index: {}]
  %s3 = inlined_call_operand.hbm [shape: f32[1,1], index: 3, kind: output, shape index: {}]
  %s4 = sld [smem:[#allocation0]]
  $region22: #{svae_forward_loss.1} parent=0
    _
  %s6 = ssub.s32 1, %s4
  %s7 = scalar_select 0, %s6, %s4
  $region1: #{svae_forward_loss.1} parent=0
    #allocation2 [shape = 'u8[512]{0}', space=vmem, size = 0x400, scoped, tag = 'output window, operand 0, single buffered']
    #allocation3 [shape = 's32[1]{0}', space=sflag, size = 0x4, scoped, tag = 'scoped memory for svae_forward_loss.1']
    %8 = vsyncpa [#allocation3], 0
    // Predicated region
    $region2: #{svae_forward_loss.1} parent=1 // pred_check
      _
    $region3: #{svae_forward_loss.1} parent=1 // pred_check_branch
      %10 = sbr.rel (0) target = $region5
    $region4: #{svae_forward_loss.1} parent=1 // pred_region
      _
    $region5: #{svae_forward_loss.1} parent=1 // pred_fallthru
      _
    // Predicated region
    $region6: #{svae_forward_loss.1} parent=1 // pred_check
      _
    $region7: #{svae_forward_loss.1} parent=1 // pred_check_branch
      %12 = sbr.rel (0) target = $region9
    $region8: #{svae_forward_loss.1} parent=1 // pred_region
      _
    $region9: #{svae_forward_loss.1} parent=1 // pred_fallthru
      _
    // Predicated region
    $region10: #{svae_forward_loss.1} parent=1 // pred_check
      _
    $region11: #{svae_forward_loss.1} parent=1 // pred_check_branch
      %14 = sbr.rel (0) target = $region13
    $region12: #{svae_forward_loss.1} parent=1 // pred_region
      _
    $region13: #{svae_forward_loss.1} parent=1 // pred_fallthru
      _
    %v15 = vld [vmem:[%s0] sm:$0xff]
    %v16 = vld [vmem:[%s0 + $0x8] sm:$0xff]
    %v17 = vld [vmem:[%s0 + $0x10] sm:$0xff]
    %v18 = vld [vmem:[%s0 + $0x18] sm:$0xff]
    %v19 = vld [vmem:[%s0 + $0x20] sm:$0xff]
    %v20 = vld [vmem:[%s0 + $0x28] sm:$0xff]
    %v21 = vld [vmem:[%s0 + $0x30] sm:$0xff]
    %v22 = vld [vmem:[%s0 + $0x38] sm:$0xff]
    %v23 = vld [vmem:[%s1] sm:$0xff]
    %v24 = vld [vmem:[%s1 + $0x8] sm:$0xff]
    %v25 = vld [vmem:[%s1 + $0x10] sm:$0xff]
    %v26 = vld [vmem:[%s1 + $0x18] sm:$0xff]
    %v27 = vld [vmem:[%s1 + $0x20] sm:$0xff]
    %v28 = vld [vmem:[%s1 + $0x28] sm:$0xff]
    %v29 = vld [vmem:[%s1 + $0x30] sm:$0xff]
    %v30 = vld [vmem:[%s1 + $0x38] sm:$0xff]
    %v31 = vld [vmem:[%s1 + $0x40] sm:$0xff]
    %v32 = vld [vmem:[%s1 + $0x48] sm:$0xff]
    %v33 = vld [vmem:[%s1 + $0x50] sm:$0xff]
    %v34 = vld [vmem:[%s1 + $0x58] sm:$0xff]
    %v35 = vld [vmem:[%s1 + $0x60] sm:$0xff]
    %v36 = vld [vmem:[%s1 + $0x68] sm:$0xff]
    %v37 = vld [vmem:[%s1 + $0x70] sm:$0xff]
    %v38 = vld [vmem:[%s1 + $0x78] sm:$0xff]
    %v39 = vld [vmem:[%s1 + $0x80] sm:$0xff]
    %v40 = vld [vmem:[%s1 + $0x88] sm:$0xff]
    %v41 = vld [vmem:[%s1 + $0x90] sm:$0xff]
    %v42 = vld [vmem:[%s1 + $0x98] sm:$0xff]
    %v43 = vld [vmem:[%s1 + $0xa0] sm:$0xff]
    %v44 = vld [vmem:[%s1 + $0xa8] sm:$0xff]
    %v45 = vld [vmem:[%s1 + $0xb0] sm:$0xff]
    %v46 = vld [vmem:[%s1 + $0xb8] sm:$0xff]
    %v47 = vld [vmem:[%s1 + $0xc0] sm:$0xff]
    %v48 = vld [vmem:[%s1 + $0xc8] sm:$0xff]
    %v49 = vld [vmem:[%s1 + $0xd0] sm:$0xff]
    %v50 = vld [vmem:[%s1 + $0xd8] sm:$0xff]
    %v51 = vld [vmem:[%s1 + $0xe0] sm:$0xff]
    %v52 = vld [vmem:[%s1 + $0xe8] sm:$0xff]
    %v53 = vld [vmem:[%s1 + $0xf0] sm:$0xff]
    %v54 = vld [vmem:[%s1 + $0xf8] sm:$0xff]
    %v55 = vld [vmem:[%s1 + $0x100] sm:$0xff]
    %v56 = vld [vmem:[%s1 + $0x108] sm:$0xff]
    %v57 = vld [vmem:[%s1 + $0x110] sm:$0xff]
    %v58 = vld [vmem:[%s1 + $0x118] sm:$0xff]
    %v59 = vld [vmem:[%s1 + $0x120] sm:$0xff]
    %v60 = vld [vmem:[%s1 + $0x128] sm:$0xff]
    %v61 = vld [vmem:[%s1 + $0x130] sm:$0xff]
    %v62 = vld [vmem:[%s1 + $0x138] sm:$0xff]
    %v63 = vld [vmem:[%s1 + $0x140] sm:$0xff]
    %v64 = vld [vmem:[%s1 + $0x148] sm:$0xff]
    %v65 = vld [vmem:[%s1 + $0x150] sm:$0xff]
    %v66 = vld [vmem:[%s1 + $0x158] sm:$0xff]
    %v67 = vld [vmem:[%s1 + $0x160] sm:$0xff]
    %v68 = vld [vmem:[%s1 + $0x168] sm:$0xff]
    %v69 = vld [vmem:[%s1 + $0x170] sm:$0xff]
    %v70 = vld [vmem:[%s1 + $0x178] sm:$0xff]
    %v71 = vld [vmem:[%s1 + $0x180] sm:$0xff]
    %v72 = vld [vmem:[%s1 + $0x188] sm:$0xff]
    %v73 = vld [vmem:[%s1 + $0x190] sm:$0xff]
    %v74 = vld [vmem:[%s1 + $0x198] sm:$0xff]
    %v75 = vld [vmem:[%s1 + $0x1a0] sm:$0xff]
    %v76 = vld [vmem:[%s1 + $0x1a8] sm:$0xff]
    %v77 = vld [vmem:[%s1 + $0x1b0] sm:$0xff]
    %v78 = vld [vmem:[%s1 + $0x1b8] sm:$0xff]
    %v79 = vld [vmem:[%s1 + $0x1c0] sm:$0xff]
    %v80 = vld [vmem:[%s1 + $0x1c8] sm:$0xff]
    %v81 = vld [vmem:[%s1 + $0x1d0] sm:$0xff]
    %v82 = vld [vmem:[%s1 + $0x1d8] sm:$0xff]
    %v83 = vld [vmem:[%s1 + $0x1e0] sm:$0xff]
    %v84 = vld [vmem:[%s1 + $0x1e8] sm:$0xff]
    %v85 = vld [vmem:[%s1 + $0x1f0] sm:$0xff]
    %v86 = vld [vmem:[%s1 + $0x1f8] sm:$0xff]
    %v87 = vld [vmem:[%s1 + $0x200] sm:$0xff]
    %v88 = vld [vmem:[%s1 + $0x208] sm:$0xff]
    %v89 = vld [vmem:[%s1 + $0x210] sm:$0xff]
    %v90 = vld [vmem:[%s1 + $0x218] sm:$0xff]
    %v91 = vld [vmem:[%s1 + $0x220] sm:$0xff]
    %v92 = vld [vmem:[%s1 + $0x228] sm:$0xff]
    %v93 = vld [vmem:[%s1 + $0x230] sm:$0xff]
    %v94 = vld [vmem:[%s1 + $0x238] sm:$0xff]
    %v95 = vld [vmem:[%s1 + $0x240] sm:$0xff]
    %v96 = vld [vmem:[%s1 + $0x248] sm:$0xff]
    %v97 = vld [vmem:[%s1 + $0x250] sm:$0xff]
    %v98 = vld [vmem:[%s1 + $0x258] sm:$0xff]
    %v99 = vld [vmem:[%s1 + $0x260] sm:$0xff]
    %v100 = vld [vmem:[%s1 + $0x268] sm:$0xff]
    %v101 = vld [vmem:[%s1 + $0x270] sm:$0xff]
    %v102 = vld [vmem:[%s1 + $0x278] sm:$0xff]
    %v103 = vld [vmem:[%s1 + $0x280] sm:$0xff]
    %v104 = vld [vmem:[%s1 + $0x288] sm:$0xff]
    %v105 = vld [vmem:[%s1 + $0x290] sm:$0xff]
    %v106 = vld [vmem:[%s1 + $0x298] sm:$0xff]
    %v107 = vld [vmem:[%s1 + $0x2a0] sm:$0xff]
    %v108 = vld [vmem:[%s1 + $0x2a8] sm:$0xff]
    %v109 = vld [vmem:[%s1 + $0x2b0] sm:$0xff]
    %v110 = vld [vmem:[%s1 + $0x2b8] sm:$0xff]
    %v111 = vld [vmem:[%s1 + $0x2c0] sm:$0xff]
    %v112 = vld [vmem:[%s1 + $0x2c8] sm:$0xff]
    %v113 = vld [vmem:[%s1 + $0x2d0] sm:$0xff]
    %v114 = vld [vmem:[%s1 + $0x2d8] sm:$0xff]
    %v115 = vld [vmem:[%s1 + $0x2e0] sm:$0xff]
    %v116 = vld [vmem:[%s1 + $0x2e8] sm:$0xff]
    %v117 = vld [vmem:[%s1 + $0x2f0] sm:$0xff]
    %v118 = vld [vmem:[%s1 + $0x2f8] sm:$0xff]
    %v119 = vld [vmem:[%s1 + $0x300] sm:$0xff]
    %v120 = vld [vmem:[%s1 + $0x308] sm:$0xff]
    %v121 = vld [vmem:[%s1 + $0x310] sm:$0xff]
    %v122 = vld [vmem:[%s1 + $0x318] sm:$0xff]
    %v123 = vld [vmem:[%s1 + $0x320] sm:$0xff]
    %v124 = vld [vmem:[%s1 + $0x328] sm:$0xff]
    %v125 = vld [vmem:[%s1 + $0x330] sm:$0xff]
    %v126 = vld [vmem:[%s1 + $0x338] sm:$0xff]
    %v127 = vld [vmem:[%s1 + $0x340] sm:$0xff]
    %v128 = vld [vmem:[%s1 + $0x348] sm:$0xff]
    %v129 = vld [vmem:[%s1 + $0x350] sm:$0xff]
    %v130 = vld [vmem:[%s1 + $0x358] sm:$0xff]
    %v131 = vld [vmem:[%s1 + $0x360] sm:$0xff]
    %v132 = vld [vmem:[%s1 + $0x368] sm:$0xff]
    %v133 = vld [vmem:[%s1 + $0x370] sm:$0xff]
    %v134 = vld [vmem:[%s1 + $0x378] sm:$0xff]
    %v135 = vld [vmem:[%s1 + $0x380] sm:$0xff]
    %v136 = vld [vmem:[%s1 + $0x388] sm:$0xff]
    %v137 = vld [vmem:[%s1 + $0x390] sm:$0xff]
    %v138 = vld [vmem:[%s1 + $0x398] sm:$0xff]
    %v139 = vld [vmem:[%s1 + $0x3a0] sm:$0xff]
    %v140 = vld [vmem:[%s1 + $0x3a8] sm:$0xff]
    %v141 = vld [vmem:[%s1 + $0x3b0] sm:$0xff]
    %v142 = vld [vmem:[%s1 + $0x3b8] sm:$0xff]
    %v143 = vld [vmem:[%s1 + $0x3c0] sm:$0xff]
    %v144 = vld [vmem:[%s1 + $0x3c8] sm:$0xff]
    %v145 = vld [vmem:[%s1 + $0x3d0] sm:$0xff]
    %v146 = vld [vmem:[%s1 + $0x3d8] sm:$0xff]
    %v147 = vld [vmem:[%s1 + $0x3e0] sm:$0xff]
    %v148 = vld [vmem:[%s1 + $0x3e8] sm:$0xff]
    %v149 = vld [vmem:[%s1 + $0x3f0] sm:$0xff]
    %v150 = vld [vmem:[%s1 + $0x3f8] sm:$0xff]
    %v151 = vld [vmem:[%s1 + $0x400] sm:$0xff]
    %v152 = vld [vmem:[%s1 + $0x408] sm:$0xff]
    %v153 = vld [vmem:[%s1 + $0x410] sm:$0xff]
    %v154 = vld [vmem:[%s1 + $0x418] sm:$0xff]
    %v155 = vld [vmem:[%s1 + $0x420] sm:$0xff]
    %v156 = vld [vmem:[%s1 + $0x428] sm:$0xff]
    %v157 = vld [vmem:[%s1 + $0x430] sm:$0xff]
    %v158 = vld [vmem:[%s1 + $0x438] sm:$0xff]
    %v159 = vld [vmem:[%s1 + $0x440] sm:$0xff]
    %v160 = vld [vmem:[%s1 + $0x448] sm:$0xff]
    %v161 = vld [vmem:[%s1 + $0x450] sm:$0xff]
    %v162 = vld [vmem:[%s1 + $0x458] sm:$0xff]
    %v163 = vld [vmem:[%s1 + $0x460] sm:$0xff]
    %v164 = vld [vmem:[%s1 + $0x468] sm:$0xff]
    %v165 = vld [vmem:[%s1 + $0x470] sm:$0xff]
    %v166 = vld [vmem:[%s1 + $0x478] sm:$0xff]
    %v167 = vld [vmem:[%s1 + $0x480] sm:$0xff]
    %v168 = vld [vmem:[%s1 + $0x488] sm:$0xff]
    %v169 = vld [vmem:[%s1 + $0x490] sm:$0xff]
    %v170 = vld [vmem:[%s1 + $0x498] sm:$0xff]
    %v171 = vld [vmem:[%s1 + $0x4a0] sm:$0xff]
    %v172 = vld [vmem:[%s1 + $0x4a8] sm:$0xff]
    %v173 = vld [vmem:[%s1 + $0x4b0] sm:$0xff]
    %v174 = vld [vmem:[%s1 + $0x4b8] sm:$0xff]
    %v175 = vld [vmem:[%s1 + $0x4c0] sm:$0xff]
    %v176 = vld [vmem:[%s1 + $0x4c8] sm:$0xff]
    %v177 = vld [vmem:[%s1 + $0x4d0] sm:$0xff]
    %v178 = vld [vmem:[%s1 + $0x4d8] sm:$0xff]
    %v179 = vld [vmem:[%s1 + $0x4e0] sm:$0xff]
    %v180 = vld [vmem:[%s1 + $0x4e8] sm:$0xff]
    %v181 = vld [vmem:[%s1 + $0x4f0] sm:$0xff]
    %v182 = vld [vmem:[%s1 + $0x4f8] sm:$0xff]
    %v183 = vld [vmem:[%s1 + $0x500] sm:$0xff]
    %v184 = vld [vmem:[%s1 + $0x508] sm:$0xff]
    %v185 = vld [vmem:[%s1 + $0x510] sm:$0xff]
    %v186 = vld [vmem:[%s1 + $0x518] sm:$0xff]
    %v187 = vld [vmem:[%s1 + $0x520] sm:$0xff]
    %v188 = vld [vmem:[%s1 + $0x528] sm:$0xff]
    %v189 = vld [vmem:[%s1 + $0x530] sm:$0xff]
    %v190 = vld [vmem:[%s1 + $0x538] sm:$0xff]
    %v191 = vld [vmem:[%s1 + $0x540] sm:$0xff]
    %v192 = vld [vmem:[%s1 + $0x548] sm:$0xff]
    %v193 = vld [vmem:[%s1 + $0x550] sm:$0xff]
    %v194 = vld [vmem:[%s1 + $0x558] sm:$0xff]
    %v195 = vld [vmem:[%s1 + $0x560] sm:$0xff]
    %v196 = vld [vmem:[%s1 + $0x568] sm:$0xff]
    %v197 = vld [vmem:[%s1 + $0x570] sm:$0xff]
    %v198 = vld [vmem:[%s1 + $0x578] sm:$0xff]
    %v199 = vld [vmem:[%s1 + $0x580] sm:$0xff]
    %v200 = vld [vmem:[%s1 + $0x588] sm:$0xff]
    %v201 = vld [vmem:[%s1 + $0x590] sm:$0xff]
    %v202 = vld [vmem:[%s1 + $0x598] sm:$0xff]
    %v203 = vld [vmem:[%s1 + $0x5a0] sm:$0xff]
    %v204 = vld [vmem:[%s1 + $0x5a8] sm:$0xff]
    %v205 = vld [vmem:[%s1 + $0x5b0] sm:$0xff]
    %v206 = vld [vmem:[%s1 + $0x5b8] sm:$0xff]
    %v207 = vld [vmem:[%s1 + $0x5c0] sm:$0xff]
    %v208 = vld [vmem:[%s1 + $0x5c8] sm:$0xff]
    %v209 = vld [vmem:[%s1 + $0x5d0] sm:$0xff]
    %v210 = vld [vmem:[%s1 + $0x5d8] sm:$0xff]
    %v211 = vld [vmem:[%s1 + $0x5e0] sm:$0xff]
    %v212 = vld [vmem:[%s1 + $0x5e8] sm:$0xff]
    %v213 = vld [vmem:[%s1 + $0x5f0] sm:$0xff]
    %v214 = vld [vmem:[%s1 + $0x5f8] sm:$0xff]
    %v215 = vld [vmem:[%s1 + $0x600] sm:$0xff]
    %v216 = vld [vmem:[%s1 + $0x618] sm:$0xff]
    %v217 = vld [vmem:[%s1 + $0x630] sm:$0xff]
    %v218 = vld [vmem:[%s1 + $0x648] sm:$0xff]
    %v219 = vld [vmem:[%s1 + $0x660] sm:$0xff]
    %v220 = vld [vmem:[%s1 + $0x678] sm:$0xff]
    %v221 = vld [vmem:[%s1 + $0x690] sm:$0xff]
    %v222 = vld [vmem:[%s1 + $0x6a8] sm:$0xff]
    %v223 = vld [vmem:[%s1 + $0x6c0] sm:$0xff]
    %v224 = vld [vmem:[%s1 + $0x6d8] sm:$0xff]
    %v225 = vld [vmem:[%s1 + $0x6f0] sm:$0xff]
    %v226 = vld [vmem:[%s1 + $0x708] sm:$0xff]
    %v227 = vld [vmem:[%s1 + $0x720] sm:$0xff]
    %v228 = vld [vmem:[%s1 + $0x738] sm:$0xff]
    %v229 = vld [vmem:[%s1 + $0x750] sm:$0xff]
    %v230 = vld [vmem:[%s1 + $0x768] sm:$0xff]
    %v231 = vld [vmem:[%s1 + $0x780] sm:$0xff]
    %v232 = vld [vmem:[%s1 + $0x798] sm:$0xff]
    %v233 = vld [vmem:[%s1 + $0x7b0] sm:$0xff]
    %v234 = vld [vmem:[%s1 + $0x7c8] sm:$0xff]
    %v235 = vld [vmem:[%s1 + $0x7e0] sm:$0xff]
    %v236 = vld [vmem:[%s1 + $0x7f8] sm:$0xff]
    %v237 = vld [vmem:[%s1 + $0x810] sm:$0xff]
    %v238 = vld [vmem:[%s1 + $0x828] sm:$0xff]
    %v239 = vld [vmem:[%s1 + $0x840] sm:$0xff]
    %v240 = vld [vmem:[%s1 + $0x858] sm:$0xff]
    %v241 = vld [vmem:[%s1 + $0x870] sm:$0xff]
    %v242 = vld [vmem:[%s1 + $0x888] sm:$0xff]
    %v243 = vld [vmem:[%s1 + $0x8a0] sm:$0xff]
    %v244 = vld [vmem:[%s1 + $0x8b8] sm:$0xff]
    %v245 = vld [vmem:[%s1 + $0x8d0] sm:$0xff]
    %v246 = vld [vmem:[%s1 + $0x8e8] sm:$0xff]
    %v247 = vld [vmem:[%s1 + $0x900] sm:$0xff]
    %v248 = vld [vmem:[%s1 + $0x918] sm:$0xff]
    %v249 = vld [vmem:[%s1 + $0x930] sm:$0xff]
    %v250 = vld [vmem:[%s1 + $0x948] sm:$0xff]
    %v251 = vld [vmem:[%s1 + $0x960] sm:$0xff]
    %v252 = vld [vmem:[%s1 + $0x978] sm:$0xff]
    %v253 = vld [vmem:[%s1 + $0x990] sm:$0xff]
    %v254 = vld [vmem:[%s1 + $0x9a8] sm:$0xff]
    %v255 = vld [vmem:[%s1 + $0x9c0] sm:$0xff]
    %v256 = vld [vmem:[%s2] ss:$8 sm:$0x7]
    %v258 = vperm.slane %v256, 0
    %v259 = vperm.slane %v256, 1
    %v260 = vperm.slane %v256, 2
    %s264 = scalar_lea.vmem %s2, 1
    %v265 = vld [vmem:[%s264] ss:$8 sm:$0x7]
    %v267 = vperm.slane %v265, 0
    %v268 = vperm.slane %v265, 1
    %v269 = vperm.slane %v265, 2
    %s273 = scalar_lea.vmem %s2, 2
    %v274 = vld [vmem:[%s273] ss:$8 sm:$0x7]
    %v276 = vperm.slane %v274, 0
    %v277 = vperm.slane %v274, 1
    %v278 = vperm.slane %v274, 2
    %s282 = scalar_lea.vmem %s2, 3
    %v283 = vld [vmem:[%s282] ss:$8 sm:$0x7]
    %v285 = vperm.slane %v283, 0
    %v286 = vperm.slane %v283, 1
    %v287 = vperm.slane %v283, 2
    %v291 = vld [vmem:[%s2 + $0x4] ss:$0 sm:$0xff]
    %v292 = vld [vmem:[%s2 + $0x5] ss:$0 sm:$0xff]
    %v293 = vld [vmem:[%s2 + $0x6] ss:$0 sm:$0xff]
    %v294 = vld [vmem:[%s2 + $0x7] ss:$0 sm:$0xff]
    %295 = vmatpush.msra.mxu0 %v68
    %296 = vmatpush.msra.mxu0 %v65
    %297 = vmatpush.msra.mxu0 %v62
    %298 = vmatpush.msra.mxu0 %v59
    %299 = vmatpush.msra.mxu0 %v56
    %300 = vmatpush.msra.mxu0 %v53
    %301 = vmatpush.msra.mxu0 %v50
    %302 = vmatpush.msra.mxu0 %v47
    %303 = vmatpush.msra.mxu0 %v44
    %304 = vmatpush.msra.mxu0 %v41
    %305 = vmatpush.msra.mxu0 %v38
    %306 = vmatpush.msra.mxu0 %v35
    %307 = vmatpush.msra.mxu0 %v32
    %308 = vmatpush.msra.mxu0 %v29
    %309 = vmatpush.msra.mxu0 %v26
    %310 = vmatpush.msra.mxu0 %v23
    %311 = vmatmul.f32.gmra.mxu0 %v15
    %v312 = vpop.f32.mrf.mxu0
    %v313 = vadd.f32 %v258, %v312
    %314 = vmatmul.f32.gmra.mxu0 %v16
    %v315 = vpop.f32.mrf.mxu0
    %v316 = vadd.f32 %v258, %v315
    %317 = vmatmul.f32.gmra.mxu0 %v17
    %v318 = vpop.f32.mrf.mxu0
    %v319 = vadd.f32 %v258, %v318
    %320 = vmatmul.f32.gmra.mxu0 %v18
    %v321 = vpop.f32.mrf.mxu0
    %v322 = vadd.f32 %v258, %v321
    %323 = vmatmul.f32.gmra.mxu0 %v19
    %v324 = vpop.f32.mrf.mxu0
    %v325 = vadd.f32 %v258, %v324
    %326 = vmatmul.f32.gmra.mxu0 %v20
    %v327 = vpop.f32.mrf.mxu0
    %v328 = vadd.f32 %v258, %v327
    %329 = vmatmul.f32.gmra.mxu0 %v21
    %v330 = vpop.f32.mrf.mxu0
    %v331 = vadd.f32 %v258, %v330
    %332 = vdwg.mxu0
    %333 = vmatpush.msra.mxu0 %v69
    %334 = vmatpush.msra.mxu0 %v66
    %335 = vmatpush.msra.mxu0 %v63
    %336 = vmatpush.msra.mxu0 %v60
    %337 = vmatpush.msra.mxu0 %v57
    %338 = vmatpush.msra.mxu0 %v54
    %339 = vmatpush.msra.mxu0 %v51
    %340 = vmatpush.msra.mxu0 %v48
    %341 = vmatpush.msra.mxu0 %v45
    %342 = vmatpush.msra.mxu0 %v42
    %343 = vmatpush.msra.mxu0 %v39
    %344 = vmatpush.msra.mxu0 %v36
    %345 = vmatpush.msra.mxu0 %v33
    %346 = vmatpush.msra.mxu0 %v30
    %347 = vmatpush.msra.mxu0 %v27
    %348 = vmatpush.msra.mxu0 %v24
    %349 = vmatmul.f32.gmra.mxu0 %v15
    %v350 = vpop.f32.mrf.mxu0
    %v351 = vadd.f32 %v259, %v350
    %352 = vmatmul.f32.gmra.mxu0 %v16
    %v353 = vpop.f32.mrf.mxu0
    %v354 = vadd.f32 %v259, %v353
    %355 = vmatmul.f32.gmra.mxu0 %v17
    %v356 = vpop.f32.mrf.mxu0
    %v357 = vadd.f32 %v259, %v356
    %358 = vmatmul.f32.gmra.mxu0 %v18
    %v359 = vpop.f32.mrf.mxu0
    %v360 = vadd.f32 %v259, %v359
    %361 = vmatmul.f32.gmra.mxu0 %v19
    %v362 = vpop.f32.mrf.mxu0
    %v363 = vadd.f32 %v259, %v362
    %364 = vmatmul.f32.gmra.mxu0 %v20
    %v365 = vpop.f32.mrf.mxu0
    %v366 = vadd.f32 %v259, %v365
    %367 = vmatmul.f32.gmra.mxu0 %v21
    %v368 = vpop.f32.mrf.mxu0
    %v369 = vadd.f32 %v259, %v368
    %370 = vdwg.mxu0
    %371 = vmatpush.msra.mxu0 %v70
    %372 = vmatpush.msra.mxu0 %v67
    %373 = vmatpush.msra.mxu0 %v64
    %374 = vmatpush.msra.mxu0 %v61
    %375 = vmatpush.msra.mxu0 %v58
    %376 = vmatpush.msra.mxu0 %v55
    %377 = vmatpush.msra.mxu0 %v52
    %378 = vmatpush.msra.mxu0 %v49
    %379 = vmatpush.msra.mxu0 %v46
    %380 = vmatpush.msra.mxu0 %v43
    %381 = vmatpush.msra.mxu0 %v40
    %382 = vmatpush.msra.mxu0 %v37
    %383 = vmatpush.msra.mxu0 %v34
    %384 = vmatpush.msra.mxu0 %v31
    %385 = vmatpush.msra.mxu0 %v28
    %386 = vmatpush.msra.mxu0 %v25
    %387 = vmatmul.f32.gmra.mxu0 %v15
    %v388 = vpop.f32.mrf.mxu0
    %v389 = vadd.f32 %v260, %v388
    %390 = vmatmul.f32.gmra.mxu0 %v16
    %v391 = vpop.f32.mrf.mxu0
    %v392 = vadd.f32 %v260, %v391
    %393 = vmatmul.f32.gmra.mxu0 %v17
    %v394 = vpop.f32.mrf.mxu0
    %v395 = vadd.f32 %v260, %v394
    %396 = vmatmul.f32.gmra.mxu0 %v18
    %v397 = vpop.f32.mrf.mxu0
    %v398 = vadd.f32 %v260, %v397
    %399 = vmatmul.f32.gmra.mxu0 %v19
    %v400 = vpop.f32.mrf.mxu0
    %v401 = vadd.f32 %v260, %v400
    %402 = vmatmul.f32.gmra.mxu0 %v20
    %v403 = vpop.f32.mrf.mxu0
    %v404 = vadd.f32 %v260, %v403
    %405 = vmatmul.f32.gmra.mxu0 %v21
    %v406 = vpop.f32.mrf.mxu0
    %v407 = vadd.f32 %v260, %v406
    %408 = vdwg.mxu0
    %409 = vmatpush.msra.mxu0 %v116
    %410 = vmatpush.msra.mxu0 %v113
    %411 = vmatpush.msra.mxu0 %v110
    %412 = vmatpush.msra.mxu0 %v107
    %413 = vmatpush.msra.mxu0 %v104
    %414 = vmatpush.msra.mxu0 %v101
    %415 = vmatpush.msra.mxu0 %v98
    %416 = vmatpush.msra.mxu0 %v95
    %417 = vmatpush.msra.mxu0 %v92
    %418 = vmatpush.msra.mxu0 %v89
    %419 = vmatpush.msra.mxu0 %v86
    %420 = vmatpush.msra.mxu0 %v83
    %421 = vmatpush.msra.mxu0 %v80
    %422 = vmatpush.msra.mxu0 %v77
    %423 = vmatpush.msra.mxu0 %v74
    %424 = vmatpush.msra.mxu0 %v71
    %425 = vmatmul.f32.gmra.mxu0 0.0
    %v426 = vpop.f32.mrf.mxu0
    %v427 = vadd.f32 %v267, %v426
    %428 = vdwg.mxu0
    %429 = vmatpush.msra.mxu0 %v117
    %430 = vmatpush.msra.mxu0 %v114
    %431 = vmatpush.msra.mxu0 %v111
    %432 = vmatpush.msra.mxu0 %v108
    %433 = vmatpush.msra.mxu0 %v105
    %434 = vmatpush.msra.mxu0 %v102
    %435 = vmatpush.msra.mxu0 %v99
    %436 = vmatpush.msra.mxu0 %v96
    %437 = vmatpush.msra.mxu0 %v93
    %438 = vmatpush.msra.mxu0 %v90
    %439 = vmatpush.msra.mxu0 %v87
    %440 = vmatpush.msra.mxu0 %v84
    %441 = vmatpush.msra.mxu0 %v81
    %442 = vmatpush.msra.mxu0 %v78
    %443 = vmatpush.msra.mxu0 %v75
    %444 = vmatpush.msra.mxu0 %v72
    %445 = vmatmul.f32.gmra.mxu0 0.0
    %v446 = vpop.f32.mrf.mxu0
    %v447 = vadd.f32 %v268, %v446
    %448 = vdwg.mxu0
    %449 = vmatpush.msra.mxu0 %v118
    %450 = vmatpush.msra.mxu0 %v115
    %451 = vmatpush.msra.mxu0 %v112
    %452 = vmatpush.msra.mxu0 %v109
    %453 = vmatpush.msra.mxu0 %v106
    %454 = vmatpush.msra.mxu0 %v103
    %455 = vmatpush.msra.mxu0 %v100
    %456 = vmatpush.msra.mxu0 %v97
    %457 = vmatpush.msra.mxu0 %v94
    %458 = vmatpush.msra.mxu0 %v91
    %459 = vmatpush.msra.mxu0 %v88
    %460 = vmatpush.msra.mxu0 %v85
    %461 = vmatpush.msra.mxu0 %v82
    %462 = vmatpush.msra.mxu0 %v79
    %463 = vmatpush.msra.mxu0 %v76
    %464 = vmatpush.msra.mxu0 %v73
    %465 = vmatmul.f32.gmra.mxu0 0.0
    %v466 = vpop.f32.mrf.mxu0
    %v467 = vadd.f32 %v269, %v466
    %468 = vdwg.mxu0
    %v469 = vadd.f32 %v313, %v427
    %v470 = vxor.u32 %v469, 2147483648
    %v471 = vmul.f32 %v470, 1.442695
    %v472 = vpow.pop %v471
    %v473 = vadd.f32 %v472, 1.0
    %v474 = vrcp.pop %v473
    %v475 = vmul.f32 %v473, %v474
    %v476 = vsub.f32 1.0, %v475
    %v477 = vmul.f32 %v474, %v476
    %v478 = vadd.f32 %v474, %v477
    %vm479 = vweird.f32 %v473
    %vm480 = vweird.f32 %v474
    %vm481 = vmor %vm479, %vm480
    %v482 = vsel %vm481, %v474, %v478
    %v483 = vand.u32 2147483647, %v473
    %vm484 = vcmp.eq.f32.partialorder %v483, 8.507059e+37
    %v485 = vand.u32 %v473, 2147483648
    %v486 = vor.u32 1.1754944e-38, %v485
    %v487 = vsel %vm484, %v486, %v482
    %v488 = vmul.f32 1.0, %v487
    %v489 = vadd.f32 %v351, %v447
    %v490 = vxor.u32 %v489, 2147483648
    %v491 = vmul.f32 %v490, 1.442695
    %v492 = vpow.pop %v491
    %v493 = vadd.f32 %v492, 1.0
    %v494 = vrcp.pop %v493
    %v495 = vmul.f32 %v493, %v494
    %v496 = vsub.f32 1.0, %v495
    %v497 = vmul.f32 %v494, %v496
    %v498 = vadd.f32 %v494, %v497
    %vm499 = vweird.f32 %v493
    %vm500 = vweird.f32 %v494
    %vm501 = vmor %vm499, %vm500
    %v502 = vsel %vm501, %v494, %v498
    %v503 = vand.u32 2147483647, %v493
    %vm504 = vcmp.eq.f32.partialorder %v503, 8.507059e+37
    %v505 = vand.u32 %v493, 2147483648
    %v506 = vor.u32 1.1754944e-38, %v505
    %v507 = vsel %vm504, %v506, %v502
    %v508 = vmul.f32 1.0, %v507
    %v509 = vmul.f32 %v488, %v467
    %v510 = vadd.f32 %v389, %v509
    %v511 = vtanh.pop %v510
    %v512 = vsub.f32 1.0, %v508
    %v513 = vmul.f32 %v512, %v511
    %v514 = vmul.f32 %v508, 0.0
    %v515 = vadd.f32 %v513, %v514
    %516 = vmatpush.msra.mxu0 %v116
    %517 = vmatpush.msra.mxu0 %v113
    %518 = vmatpush.msra.mxu0 %v110
    %519 = vmatpush.msra.mxu0 %v107
    %520 = vmatpush.msra.mxu0 %v104
    %521 = vmatpush.msra.mxu0 %v101
    %522 = vmatpush.msra.mxu0 %v98
    %523 = vmatpush.msra.mxu0 %v95
    %524 = vmatpush.msra.mxu0 %v92
    %525 = vmatpush.msra.mxu0 %v89
    %526 = vmatpush.msra.mxu0 %v86
    %527 = vmatpush.msra.mxu0 %v83
    %528 = vmatpush.msra.mxu0 %v80
    %529 = vmatpush.msra.mxu0 %v77
    %530 = vmatpush.msra.mxu0 %v74
    %531 = vmatpush.msra.mxu0 %v71
    %532 = vmatmul.f32.gmra.mxu0 %v515
    %v533 = vpop.f32.mrf.mxu0
    %v534 = vadd.f32 %v267, %v533
    %535 = vdwg.mxu0
    %536 = vmatpush.msra.mxu0 %v117
    %537 = vmatpush.msra.mxu0 %v114
    %538 = vmatpush.msra.mxu0 %v111
    %539 = vmatpush.msra.mxu0 %v108
    %540 = vmatpush.msra.mxu0 %v105
    %541 = vmatpush.msra.mxu0 %v102
    %542 = vmatpush.msra.mxu0 %v99
    %543 = vmatpush.msra.mxu0 %v96
    %544 = vmatpush.msra.mxu0 %v93
    %545 = vmatpush.msra.mxu0 %v90
    %546 = vmatpush.msra.mxu0 %v87
    %547 = vmatpush.msra.mxu0 %v84
    %548 = vmatpush.msra.mxu0 %v81
    %549 = vmatpush.msra.mxu0 %v78
    %550 = vmatpush.msra.mxu0 %v75
    %551 = vmatpush.msra.mxu0 %v72
    %552 = vmatmul.f32.gmra.mxu0 %v515
    %v553 = vpop.f32.mrf.mxu0
    %v554 = vadd.f32 %v268, %v553
    %555 = vdwg.mxu0
    %556 = vmatpush.msra.mxu0 %v118
    %557 = vmatpush.msra.mxu0 %v115
    %558 = vmatpush.msra.mxu0 %v112
    %559 = vmatpush.msra.mxu0 %v109
    %560 = vmatpush.msra.mxu0 %v106
    %561 = vmatpush.msra.mxu0 %v103
    %562 = vmatpush.msra.mxu0 %v100
    %563 = vmatpush.msra.mxu0 %v97
    %564 = vmatpush.msra.mxu0 %v94
    %565 = vmatpush.msra.mxu0 %v91
    %566 = vmatpush.msra.mxu0 %v88
    %567 = vmatpush.msra.mxu0 %v85
    %568 = vmatpush.msra.mxu0 %v82
    %569 = vmatpush.msra.mxu0 %v79
    %570 = vmatpush.msra.mxu0 %v76
    %571 = vmatpush.msra.mxu0 %v73
    %572 = vmatmul.f32.gmra.mxu0 %v515
    %v573 = vpop.f32.mrf.mxu0
    %v574 = vadd.f32 %v269, %v573
    %575 = vdwg.mxu0
    %v576 = vadd.f32 %v316, %v534
    %v577 = vxor.u32 %v576, 2147483648
    %v578 = vmul.f32 %v577, 1.442695
    %v579 = vpow.pop %v578
    %v580 = vadd.f32 %v579, 1.0
    %v581 = vrcp.pop %v580
    %v582 = vmul.f32 %v580, %v581
    %v583 = vsub.f32 1.0, %v582
    %v584 = vmul.f32 %v581, %v583
    %v585 = vadd.f32 %v581, %v584
    %vm586 = vweird.f32 %v580
    %vm587 = vweird.f32 %v581
    %vm588 = vmor %vm586, %vm587
    %v589 = vsel %vm588, %v581, %v585
    %v590 = vand.u32 2147483647, %v580
    %vm591 = vcmp.eq.f32.partialorder %v590, 8.507059e+37
    %v592 = vand.u32 %v580, 2147483648
    %v593 = vor.u32 1.1754944e-38, %v592
    %v594 = vsel %vm591, %v593, %v589
    %v595 = vmul.f32 1.0, %v594
    %v596 = vadd.f32 %v354, %v554
    %v597 = vxor.u32 %v596, 2147483648
    %v598 = vmul.f32 %v597, 1.442695
    %v599 = vpow.pop %v598
    %v600 = vadd.f32 %v599, 1.0
    %v601 = vrcp.pop %v600
    %v602 = vmul.f32 %v600, %v601
    %v603 = vsub.f32 1.0, %v602
    %v604 = vmul.f32 %v601, %v603
    %v605 = vadd.f32 %v601, %v604
    %vm606 = vweird.f32 %v600
    %vm607 = vweird.f32 %v601
    %vm608 = vmor %vm606, %vm607
    %v609 = vsel %vm608, %v601, %v605
    %v610 = vand.u32 2147483647, %v600
    %vm611 = vcmp.eq.f32.partialorder %v610, 8.507059e+37
    %v612 = vand.u32 %v600, 2147483648
    %v613 = vor.u32 1.1754944e-38, %v612
    %v614 = vsel %vm611, %v613, %v609
    %v615 = vmul.f32 1.0, %v614
    %v616 = vmul.f32 %v595, %v574
    %v617 = vadd.f32 %v392, %v616
    %v618 = vtanh.pop %v617
    %v619 = vsub.f32 1.0, %v615
    %v620 = vmul.f32 %v619, %v618
    %v621 = vmul.f32 %v615, %v515
    %v622 = vadd.f32 %v620, %v621
    %623 = vmatpush.msra.mxu0 %v116
    %624 = vmatpush.msra.mxu0 %v113
    %625 = vmatpush.msra.mxu0 %v110
    %626 = vmatpush.msra.mxu0 %v107
    %627 = vmatpush.msra.mxu0 %v104
    %628 = vmatpush.msra.mxu0 %v101
    %629 = vmatpush.msra.mxu0 %v98
    %630 = vmatpush.msra.mxu0 %v95
    %631 = vmatpush.msra.mxu0 %v92
    %632 = vmatpush.msra.mxu0 %v89
    %633 = vmatpush.msra.mxu0 %v86
    %634 = vmatpush.msra.mxu0 %v83
    %635 = vmatpush.msra.mxu0 %v80
    %636 = vmatpush.msra.mxu0 %v77
    %637 = vmatpush.msra.mxu0 %v74
    %638 = vmatpush.msra.mxu0 %v71
    %639 = vmatmul.f32.gmra.mxu0 %v622
    %v640 = vpop.f32.mrf.mxu0
    %v641 = vadd.f32 %v267, %v640
    %642 = vdwg.mxu0
    %643 = vmatpush.msra.mxu0 %v117
    %644 = vmatpush.msra.mxu0 %v114
    %645 = vmatpush.msra.mxu0 %v111
    %646 = vmatpush.msra.mxu0 %v108
    %647 = vmatpush.msra.mxu0 %v105
    %648 = vmatpush.msra.mxu0 %v102
    %649 = vmatpush.msra.mxu0 %v99
    %650 = vmatpush.msra.mxu0 %v96
    %651 = vmatpush.msra.mxu0 %v93
    %652 = vmatpush.msra.mxu0 %v90
    %653 = vmatpush.msra.mxu0 %v87
    %654 = vmatpush.msra.mxu0 %v84
    %655 = vmatpush.msra.mxu0 %v81
    %656 = vmatpush.msra.mxu0 %v78
    %657 = vmatpush.msra.mxu0 %v75
    %658 = vmatpush.msra.mxu0 %v72
    %659 = vmatmul.f32.gmra.mxu0 %v622
    %v660 = vpop.f32.mrf.mxu0
    %v661 = vadd.f32 %v268, %v660
    %662 = vdwg.mxu0
    %663 = vmatpush.msra.mxu0 %v118
    %664 = vmatpush.msra.mxu0 %v115
    %665 = vmatpush.msra.mxu0 %v112
    %666 = vmatpush.msra.mxu0 %v109
    %667 = vmatpush.msra.mxu0 %v106
    %668 = vmatpush.msra.mxu0 %v103
    %669 = vmatpush.msra.mxu0 %v100
    %670 = vmatpush.msra.mxu0 %v97
    %671 = vmatpush.msra.mxu0 %v94
    %672 = vmatpush.msra.mxu0 %v91
    %673 = vmatpush.msra.mxu0 %v88
    %674 = vmatpush.msra.mxu0 %v85
    %675 = vmatpush.msra.mxu0 %v82
    %676 = vmatpush.msra.mxu0 %v79
    %677 = vmatpush.msra.mxu0 %v76
    %678 = vmatpush.msra.mxu0 %v73
    %679 = vmatmul.f32.gmra.mxu0 %v622
    %v680 = vpop.f32.mrf.mxu0
    %v681 = vadd.f32 %v269, %v680
    %682 = vdwg.mxu0
    %v683 = vadd.f32 %v319, %v641
    %v684 = vxor.u32 %v683, 2147483648
    %v685 = vmul.f32 %v684, 1.442695
    %v686 = vpow.pop %v685
    %v687 = vadd.f32 %v686, 1.0
    %v688 = vrcp.pop %v687
    %v689 = vmul.f32 %v687, %v688
    %v690 = vsub.f32 1.0, %v689
    %v691 = vmul.f32 %v688, %v690
    %v692 = vadd.f32 %v688, %v691
    %vm693 = vweird.f32 %v687
    %vm694 = vweird.f32 %v688
    %vm695 = vmor %vm693, %vm694
    %v696 = vsel %vm695, %v688, %v692
    %v697 = vand.u32 2147483647, %v687
    %vm698 = vcmp.eq.f32.partialorder %v697, 8.507059e+37
    %v699 = vand.u32 %v687, 2147483648
    %v700 = vor.u32 1.1754944e-38, %v699
    %v701 = vsel %vm698, %v700, %v696
    %v702 = vmul.f32 1.0, %v701
    %v703 = vadd.f32 %v357, %v661
    %v704 = vxor.u32 %v703, 2147483648
    %v705 = vmul.f32 %v704, 1.442695
    %v706 = vpow.pop %v705
    %v707 = vadd.f32 %v706, 1.0
    %v708 = vrcp.pop %v707
    %v709 = vmul.f32 %v707, %v708
    %v710 = vsub.f32 1.0, %v709
    %v711 = vmul.f32 %v708, %v710
    %v712 = vadd.f32 %v708, %v711
    %vm713 = vweird.f32 %v707
    %vm714 = vweird.f32 %v708
    %vm715 = vmor %vm713, %vm714
    %v716 = vsel %vm715, %v708, %v712
    %v717 = vand.u32 2147483647, %v707
    %vm718 = vcmp.eq.f32.partialorder %v717, 8.507059e+37
    %v719 = vand.u32 %v707, 2147483648
    %v720 = vor.u32 1.1754944e-38, %v719
    %v721 = vsel %vm718, %v720, %v716
    %v722 = vmul.f32 1.0, %v721
    %v723 = vmul.f32 %v702, %v681
    %v724 = vadd.f32 %v395, %v723
    %v725 = vtanh.pop %v724
    %v726 = vsub.f32 1.0, %v722
    %v727 = vmul.f32 %v726, %v725
    %v728 = vmul.f32 %v722, %v622
    %v729 = vadd.f32 %v727, %v728
    %730 = vmatpush.msra.mxu0 %v116
    %731 = vmatpush.msra.mxu0 %v113
    %732 = vmatpush.msra.mxu0 %v110
    %733 = vmatpush.msra.mxu0 %v107
    %734 = vmatpush.msra.mxu0 %v104
    %735 = vmatpush.msra.mxu0 %v101
    %736 = vmatpush.msra.mxu0 %v98
    %737 = vmatpush.msra.mxu0 %v95
    %738 = vmatpush.msra.mxu0 %v92
    %739 = vmatpush.msra.mxu0 %v89
    %740 = vmatpush.msra.mxu0 %v86
    %741 = vmatpush.msra.mxu0 %v83
    %742 = vmatpush.msra.mxu0 %v80
    %743 = vmatpush.msra.mxu0 %v77
    %744 = vmatpush.msra.mxu0 %v74
    %745 = vmatpush.msra.mxu0 %v71
    %746 = vmatmul.f32.gmra.mxu0 %v729
    %v747 = vpop.f32.mrf.mxu0
    %v748 = vadd.f32 %v267, %v747
    %749 = vdwg.mxu0
    %750 = vmatpush.msra.mxu0 %v117
    %751 = vmatpush.msra.mxu0 %v114
    %752 = vmatpush.msra.mxu0 %v111
    %753 = vmatpush.msra.mxu0 %v108
    %754 = vmatpush.msra.mxu0 %v105
    %755 = vmatpush.msra.mxu0 %v102
    %756 = vmatpush.msra.mxu0 %v99
    %757 = vmatpush.msra.mxu0 %v96
    %758 = vmatpush.msra.mxu0 %v93
    %759 = vmatpush.msra.mxu0 %v90
    %760 = vmatpush.msra.mxu0 %v87
    %761 = vmatpush.msra.mxu0 %v84
    %762 = vmatpush.msra.mxu0 %v81
    %763 = vmatpush.msra.mxu0 %v78
    %764 = vmatpush.msra.mxu0 %v75
    %765 = vmatpush.msra.mxu0 %v72
    %766 = vmatmul.f32.gmra.mxu0 %v729
    %v767 = vpop.f32.mrf.mxu0
    %v768 = vadd.f32 %v268, %v767
    %769 = vdwg.mxu0
    %770 = vmatpush.msra.mxu0 %v118
    %771 = vmatpush.msra.mxu0 %v115
    %772 = vmatpush.msra.mxu0 %v112
    %773 = vmatpush.msra.mxu0 %v109
    %774 = vmatpush.msra.mxu0 %v106
    %775 = vmatpush.msra.mxu0 %v103
    %776 = vmatpush.msra.mxu0 %v100
    %777 = vmatpush.msra.mxu0 %v97
    %778 = vmatpush.msra.mxu0 %v94
    %779 = vmatpush.msra.mxu0 %v91
    %780 = vmatpush.msra.mxu0 %v88
    %781 = vmatpush.msra.mxu0 %v85
    %782 = vmatpush.msra.mxu0 %v82
    %783 = vmatpush.msra.mxu0 %v79
    %784 = vmatpush.msra.mxu0 %v76
    %785 = vmatpush.msra.mxu0 %v73
    %786 = vmatmul.f32.gmra.mxu0 %v729
    %v787 = vpop.f32.mrf.mxu0
    %v788 = vadd.f32 %v269, %v787
    %789 = vdwg.mxu0
    %v790 = vadd.f32 %v322, %v748
    %v791 = vxor.u32 %v790, 2147483648
    %v792 = vmul.f32 %v791, 1.442695
    %v793 = vpow.pop %v792
    %v794 = vadd.f32 %v793, 1.0
    %v795 = vrcp.pop %v794
    %v796 = vmul.f32 %v794, %v795
    %v797 = vsub.f32 1.0, %v796
    %v798 = vmul.f32 %v795, %v797
    %v799 = vadd.f32 %v795, %v798
    %vm800 = vweird.f32 %v794
    %vm801 = vweird.f32 %v795
    %vm802 = vmor %vm800, %vm801
    %v803 = vsel %vm802, %v795, %v799
    %v804 = vand.u32 2147483647, %v794
    %vm805 = vcmp.eq.f32.partialorder %v804, 8.507059e+37
    %v806 = vand.u32 %v794, 2147483648
    %v807 = vor.u32 1.1754944e-38, %v806
    %v808 = vsel %vm805, %v807, %v803
    %v809 = vmul.f32 1.0, %v808
    %v810 = vadd.f32 %v360, %v768
    %v811 = vxor.u32 %v810, 2147483648
    %v812 = vmul.f32 %v811, 1.442695
    %v813 = vpow.pop %v812
    %v814 = vadd.f32 %v813, 1.0
    %v815 = vrcp.pop %v814
    %v816 = vmul.f32 %v814, %v815
    %v817 = vsub.f32 1.0, %v816
    %v818 = vmul.f32 %v815, %v817
    %v819 = vadd.f32 %v815, %v818
    %vm820 = vweird.f32 %v814
    %vm821 = vweird.f32 %v815
    %vm822 = vmor %vm820, %vm821
    %v823 = vsel %vm822, %v815, %v819
    %v824 = vand.u32 2147483647, %v814
    %vm825 = vcmp.eq.f32.partialorder %v824, 8.507059e+37
    %v826 = vand.u32 %v814, 2147483648
    %v827 = vor.u32 1.1754944e-38, %v826
    %v828 = vsel %vm825, %v827, %v823
    %v829 = vmul.f32 1.0, %v828
    %v830 = vmul.f32 %v809, %v788
    %v831 = vadd.f32 %v398, %v830
    %v832 = vtanh.pop %v831
    %v833 = vsub.f32 1.0, %v829
    %v834 = vmul.f32 %v833, %v832
    %v835 = vmul.f32 %v829, %v729
    %v836 = vadd.f32 %v834, %v835
    %837 = vmatpush.msra.mxu0 %v116
    %838 = vmatpush.msra.mxu0 %v113
    %839 = vmatpush.msra.mxu0 %v110
    %840 = vmatpush.msra.mxu0 %v107
    %841 = vmatpush.msra.mxu0 %v104
    %842 = vmatpush.msra.mxu0 %v101
    %843 = vmatpush.msra.mxu0 %v98
    %844 = vmatpush.msra.mxu0 %v95
    %845 = vmatpush.msra.mxu0 %v92
    %846 = vmatpush.msra.mxu0 %v89
    %847 = vmatpush.msra.mxu0 %v86
    %848 = vmatpush.msra.mxu0 %v83
    %849 = vmatpush.msra.mxu0 %v80
    %850 = vmatpush.msra.mxu0 %v77
    %851 = vmatpush.msra.mxu0 %v74
    %852 = vmatpush.msra.mxu0 %v71
    %853 = vmatmul.f32.gmra.mxu0 %v836
    %v854 = vpop.f32.mrf.mxu0
    %v855 = vadd.f32 %v267, %v854
    %856 = vdwg.mxu0
    %857 = vmatpush.msra.mxu0 %v117
    %858 = vmatpush.msra.mxu0 %v114
    %859 = vmatpush.msra.mxu0 %v111
    %860 = vmatpush.msra.mxu0 %v108
    %861 = vmatpush.msra.mxu0 %v105
    %862 = vmatpush.msra.mxu0 %v102
    %863 = vmatpush.msra.mxu0 %v99
    %864 = vmatpush.msra.mxu0 %v96
    %865 = vmatpush.msra.mxu0 %v93
    %866 = vmatpush.msra.mxu0 %v90
    %867 = vmatpush.msra.mxu0 %v87
    %868 = vmatpush.msra.mxu0 %v84
    %869 = vmatpush.msra.mxu0 %v81
    %870 = vmatpush.msra.mxu0 %v78
    %871 = vmatpush.msra.mxu0 %v75
    %872 = vmatpush.msra.mxu0 %v72
    %873 = vmatmul.f32.gmra.mxu0 %v836
    %v874 = vpop.f32.mrf.mxu0
    %v875 = vadd.f32 %v268, %v874
    %876 = vdwg.mxu0
    %877 = vmatpush.msra.mxu0 %v118
    %878 = vmatpush.msra.mxu0 %v115
    %879 = vmatpush.msra.mxu0 %v112
    %880 = vmatpush.msra.mxu0 %v109
    %881 = vmatpush.msra.mxu0 %v106
    %882 = vmatpush.msra.mxu0 %v103
    %883 = vmatpush.msra.mxu0 %v100
    %884 = vmatpush.msra.mxu0 %v97
    %885 = vmatpush.msra.mxu0 %v94
    %886 = vmatpush.msra.mxu0 %v91
    %887 = vmatpush.msra.mxu0 %v88
    %888 = vmatpush.msra.mxu0 %v85
    %889 = vmatpush.msra.mxu0 %v82
    %890 = vmatpush.msra.mxu0 %v79
    %891 = vmatpush.msra.mxu0 %v76
    %892 = vmatpush.msra.mxu0 %v73
    %893 = vmatmul.f32.gmra.mxu0 %v836
    %v894 = vpop.f32.mrf.mxu0
    %v895 = vadd.f32 %v269, %v894
    %896 = vdwg.mxu0
    %v897 = vadd.f32 %v325, %v855
    %v898 = vxor.u32 %v897, 2147483648
    %v899 = vmul.f32 %v898, 1.442695
    %v900 = vpow.pop %v899
    %v901 = vadd.f32 %v900, 1.0
    %v902 = vrcp.pop %v901
    %v903 = vmul.f32 %v901, %v902
    %v904 = vsub.f32 1.0, %v903
    %v905 = vmul.f32 %v902, %v904
    %v906 = vadd.f32 %v902, %v905
    %vm907 = vweird.f32 %v901
    %vm908 = vweird.f32 %v902
    %vm909 = vmor %vm907, %vm908
    %v910 = vsel %vm909, %v902, %v906
    %v911 = vand.u32 2147483647, %v901
    %vm912 = vcmp.eq.f32.partialorder %v911, 8.507059e+37
    %v913 = vand.u32 %v901, 2147483648
    %v914 = vor.u32 1.1754944e-38, %v913
    %v915 = vsel %vm912, %v914, %v910
    %v916 = vmul.f32 1.0, %v915
    %v917 = vadd.f32 %v363, %v875
    %v918 = vxor.u32 %v917, 2147483648
    %v919 = vmul.f32 %v918, 1.442695
    %v920 = vpow.pop %v919
    %v921 = vadd.f32 %v920, 1.0
    %v922 = vrcp.pop %v921
    %v923 = vmul.f32 %v921, %v922
    %v924 = vsub.f32 1.0, %v923
    %v925 = vmul.f32 %v922, %v924
    %v926 = vadd.f32 %v922, %v925
    %vm927 = vweird.f32 %v921
    %vm928 = vweird.f32 %v922
    %vm929 = vmor %vm927, %vm928
    %v930 = vsel %vm929, %v922, %v926
    %v931 = vand.u32 2147483647, %v921
    %vm932 = vcmp.eq.f32.partialorder %v931, 8.507059e+37
    %v933 = vand.u32 %v921, 2147483648
    %v934 = vor.u32 1.1754944e-38, %v933
    %v935 = vsel %vm932, %v934, %v930
    %v936 = vmul.f32 1.0, %v935
    %v937 = vmul.f32 %v916, %v895
    %v938 = vadd.f32 %v401, %v937
    %v939 = vtanh.pop %v938
    %v940 = vsub.f32 1.0, %v936
    %v941 = vmul.f32 %v940, %v939
    %v942 = vmul.f32 %v936, %v836
    %v943 = vadd.f32 %v941, %v942
    %944 = vmatpush.msra.mxu0 %v116
    %945 = vmatpush.msra.mxu0 %v113
    %946 = vmatpush.msra.mxu0 %v110
    %947 = vmatpush.msra.mxu0 %v107
    %948 = vmatpush.msra.mxu0 %v104
    %949 = vmatpush.msra.mxu0 %v101
    %950 = vmatpush.msra.mxu0 %v98
    %951 = vmatpush.msra.mxu0 %v95
    %952 = vmatpush.msra.mxu0 %v92
    %953 = vmatpush.msra.mxu0 %v89
    %954 = vmatpush.msra.mxu0 %v86
    %955 = vmatpush.msra.mxu0 %v83
    %956 = vmatpush.msra.mxu0 %v80
    %957 = vmatpush.msra.mxu0 %v77
    %958 = vmatpush.msra.mxu0 %v74
    %959 = vmatpush.msra.mxu0 %v71
    %960 = vmatmul.f32.gmra.mxu0 %v943
    %v961 = vpop.f32.mrf.mxu0
    %v962 = vadd.f32 %v267, %v961
    %963 = vdwg.mxu0
    %964 = vmatpush.msra.mxu0 %v117
    %965 = vmatpush.msra.mxu0 %v114
    %966 = vmatpush.msra.mxu0 %v111
    %967 = vmatpush.msra.mxu0 %v108
    %968 = vmatpush.msra.mxu0 %v105
    %969 = vmatpush.msra.mxu0 %v102
    %970 = vmatpush.msra.mxu0 %v99
    %971 = vmatpush.msra.mxu0 %v96
    %972 = vmatpush.msra.mxu0 %v93
    %973 = vmatpush.msra.mxu0 %v90
    %974 = vmatpush.msra.mxu0 %v87
    %975 = vmatpush.msra.mxu0 %v84
    %976 = vmatpush.msra.mxu0 %v81
    %977 = vmatpush.msra.mxu0 %v78
    %978 = vmatpush.msra.mxu0 %v75
    %979 = vmatpush.msra.mxu0 %v72
    %980 = vmatmul.f32.gmra.mxu0 %v943
    %v981 = vpop.f32.mrf.mxu0
    %v982 = vadd.f32 %v268, %v981
    %983 = vdwg.mxu0
    %984 = vmatpush.msra.mxu0 %v118
    %985 = vmatpush.msra.mxu0 %v115
    %986 = vmatpush.msra.mxu0 %v112
    %987 = vmatpush.msra.mxu0 %v109
    %988 = vmatpush.msra.mxu0 %v106
    %989 = vmatpush.msra.mxu0 %v103
    %990 = vmatpush.msra.mxu0 %v100
    %991 = vmatpush.msra.mxu0 %v97
    %992 = vmatpush.msra.mxu0 %v94
    %993 = vmatpush.msra.mxu0 %v91
    %994 = vmatpush.msra.mxu0 %v88
    %995 = vmatpush.msra.mxu0 %v85
    %996 = vmatpush.msra.mxu0 %v82
    %997 = vmatpush.msra.mxu0 %v79
    %998 = vmatpush.msra.mxu0 %v76
    %999 = vmatpush.msra.mxu0 %v73
    %1000 = vmatmul.f32.gmra.mxu0 %v943
    %v1001 = vpop.f32.mrf.mxu0
    %v1002 = vadd.f32 %v269, %v1001
    %1003 = vdwg.mxu0
    %v1004 = vadd.f32 %v328, %v962
    %v1005 = vxor.u32 %v1004, 2147483648
    %v1006 = vmul.f32 %v1005, 1.442695
    %v1007 = vpow.pop %v1006
    %v1008 = vadd.f32 %v1007, 1.0
    %v1009 = vrcp.pop %v1008
    %v1010 = vmul.f32 %v1008, %v1009
    %v1011 = vsub.f32 1.0, %v1010
    %v1012 = vmul.f32 %v1009, %v1011
    %v1013 = vadd.f32 %v1009, %v1012
    %vm1014 = vweird.f32 %v1008
    %vm1015 = vweird.f32 %v1009
    %vm1016 = vmor %vm1014, %vm1015
    %v1017 = vsel %vm1016, %v1009, %v1013
    %v1018 = vand.u32 2147483647, %v1008
    %vm1019 = vcmp.eq.f32.partialorder %v1018, 8.507059e+37
    %v1020 = vand.u32 %v1008, 2147483648
    %v1021 = vor.u32 1.1754944e-38, %v1020
    %v1022 = vsel %vm1019, %v1021, %v1017
    %v1023 = vmul.f32 1.0, %v1022
    %v1024 = vadd.f32 %v366, %v982
    %v1025 = vxor.u32 %v1024, 2147483648
    %v1026 = vmul.f32 %v1025, 1.442695
    %v1027 = vpow.pop %v1026
    %v1028 = vadd.f32 %v1027, 1.0
    %v1029 = vrcp.pop %v1028
    %v1030 = vmul.f32 %v1028, %v1029
    %v1031 = vsub.f32 1.0, %v1030
    %v1032 = vmul.f32 %v1029, %v1031
    %v1033 = vadd.f32 %v1029, %v1032
    %vm1034 = vweird.f32 %v1028
    %vm1035 = vweird.f32 %v1029
    %vm1036 = vmor %vm1034, %vm1035
    %v1037 = vsel %vm1036, %v1029, %v1033
    %v1038 = vand.u32 2147483647, %v1028
    %vm1039 = vcmp.eq.f32.partialorder %v1038, 8.507059e+37
    %v1040 = vand.u32 %v1028, 2147483648
    %v1041 = vor.u32 1.1754944e-38, %v1040
    %v1042 = vsel %vm1039, %v1041, %v1037
    %v1043 = vmul.f32 1.0, %v1042
    %v1044 = vmul.f32 %v1023, %v1002
    %v1045 = vadd.f32 %v404, %v1044
    %v1046 = vtanh.pop %v1045
    %v1047 = vsub.f32 1.0, %v1043
    %v1048 = vmul.f32 %v1047, %v1046
    %v1049 = vmul.f32 %v1043, %v943
    %v1050 = vadd.f32 %v1048, %v1049
    %1051 = vmatpush.msra.mxu0 %v116
    %1052 = vmatpush.msra.mxu0 %v113
    %1053 = vmatpush.msra.mxu0 %v110
    %1054 = vmatpush.msra.mxu0 %v107
    %1055 = vmatpush.msra.mxu0 %v104
    %1056 = vmatpush.msra.mxu0 %v101
    %1057 = vmatpush.msra.mxu0 %v98
    %1058 = vmatpush.msra.mxu0 %v95
    %1059 = vmatpush.msra.mxu0 %v92
    %1060 = vmatpush.msra.mxu0 %v89
    %1061 = vmatpush.msra.mxu0 %v86
    %1062 = vmatpush.msra.mxu0 %v83
    %1063 = vmatpush.msra.mxu0 %v80
    %1064 = vmatpush.msra.mxu0 %v77
    %1065 = vmatpush.msra.mxu0 %v74
    %1066 = vmatpush.msra.mxu0 %v71
    %1067 = vmatmul.f32.gmra.mxu0 %v1050
    %v1068 = vpop.f32.mrf.mxu0
    %v1069 = vadd.f32 %v267, %v1068
    %1070 = vdwg.mxu0
    %1071 = vmatpush.msra.mxu0 %v117
    %1072 = vmatpush.msra.mxu0 %v114
    %1073 = vmatpush.msra.mxu0 %v111
    %1074 = vmatpush.msra.mxu0 %v108
    %1075 = vmatpush.msra.mxu0 %v105
    %1076 = vmatpush.msra.mxu0 %v102
    %1077 = vmatpush.msra.mxu0 %v99
    %1078 = vmatpush.msra.mxu0 %v96
    %1079 = vmatpush.msra.mxu0 %v93
    %1080 = vmatpush.msra.mxu0 %v90
    %1081 = vmatpush.msra.mxu0 %v87
    %1082 = vmatpush.msra.mxu0 %v84
    %1083 = vmatpush.msra.mxu0 %v81
    %1084 = vmatpush.msra.mxu0 %v78
    %1085 = vmatpush.msra.mxu0 %v75
    %1086 = vmatpush.msra.mxu0 %v72
    %1087 = vmatmul.f32.gmra.mxu0 %v1050
    %v1088 = vpop.f32.mrf.mxu0
    %v1089 = vadd.f32 %v268, %v1088
    %1090 = vdwg.mxu0
    %1091 = vmatpush.msra.mxu0 %v118
    %1092 = vmatpush.msra.mxu0 %v115
    %1093 = vmatpush.msra.mxu0 %v112
    %1094 = vmatpush.msra.mxu0 %v109
    %1095 = vmatpush.msra.mxu0 %v106
    %1096 = vmatpush.msra.mxu0 %v103
    %1097 = vmatpush.msra.mxu0 %v100
    %1098 = vmatpush.msra.mxu0 %v97
    %1099 = vmatpush.msra.mxu0 %v94
    %1100 = vmatpush.msra.mxu0 %v91
    %1101 = vmatpush.msra.mxu0 %v88
    %1102 = vmatpush.msra.mxu0 %v85
    %1103 = vmatpush.msra.mxu0 %v82
    %1104 = vmatpush.msra.mxu0 %v79
    %1105 = vmatpush.msra.mxu0 %v76
    %1106 = vmatpush.msra.mxu0 %v73
    %1107 = vmatmul.f32.gmra.mxu0 %v1050
    %v1108 = vpop.f32.mrf.mxu0
    %v1109 = vadd.f32 %v269, %v1108
    %1110 = vdwg.mxu0
    %v1111 = vadd.f32 %v331, %v1069
    %v1112 = vxor.u32 %v1111, 2147483648
    %v1113 = vmul.f32 %v1112, 1.442695
    %v1114 = vpow.pop %v1113
    %v1115 = vadd.f32 %v1114, 1.0
    %v1116 = vrcp.pop %v1115
    %v1117 = vmul.f32 %v1115, %v1116
    %v1118 = vsub.f32 1.0, %v1117
    %v1119 = vmul.f32 %v1116, %v1118
    %v1120 = vadd.f32 %v1116, %v1119
    %vm1121 = vweird.f32 %v1115
    %vm1122 = vweird.f32 %v1116
    %vm1123 = vmor %vm1121, %vm1122
    %v1124 = vsel %vm1123, %v1116, %v1120
    %v1125 = vand.u32 2147483647, %v1115
    %vm1126 = vcmp.eq.f32.partialorder %v1125, 8.507059e+37
    %v1127 = vand.u32 %v1115, 2147483648
    %v1128 = vor.u32 1.1754944e-38, %v1127
    %v1129 = vsel %vm1126, %v1128, %v1124
    %v1130 = vmul.f32 1.0, %v1129
    %v1131 = vadd.f32 %v369, %v1089
    %v1132 = vxor.u32 %v1131, 2147483648
    %v1133 = vmul.f32 %v1132, 1.442695
    %v1134 = vpow.pop %v1133
    %v1135 = vadd.f32 %v1134, 1.0
    %v1136 = vrcp.pop %v1135
    %v1137 = vmul.f32 %v1135, %v1136
    %v1138 = vsub.f32 1.0, %v1137
    %v1139 = vmul.f32 %v1136, %v1138
    %v1140 = vadd.f32 %v1136, %v1139
    %vm1141 = vweird.f32 %v1135
    %vm1142 = vweird.f32 %v1136
    %vm1143 = vmor %vm1141, %vm1142
    %v1144 = vsel %vm1143, %v1136, %v1140
    %v1145 = vand.u32 2147483647, %v1135
    %vm1146 = vcmp.eq.f32.partialorder %v1145, 8.507059e+37
    %v1147 = vand.u32 %v1135, 2147483648
    %v1148 = vor.u32 1.1754944e-38, %v1147
    %v1149 = vsel %vm1146, %v1148, %v1144
    %v1150 = vmul.f32 1.0, %v1149
    %v1151 = vmul.f32 %v1130, %v1109
    %v1152 = vadd.f32 %v407, %v1151
    %v1153 = vtanh.pop %v1152
    %v1154 = vsub.f32 1.0, %v1150
    %v1155 = vmul.f32 %v1154, %v1153
    %v1156 = vmul.f32 %v1150, %v1050
    %v1157 = vadd.f32 %v1155, %v1156
    %1158 = vmatpush.msra.mxu0 %v230
    %1159 = vmatpush.msra.mxu0 %v229
    %1160 = vmatpush.msra.mxu0 %v228
    %1161 = vmatpush.msra.mxu0 %v227
    %1162 = vmatpush.msra.mxu0 %v226
    %1163 = vmatpush.msra.mxu0 %v225
    %1164 = vmatpush.msra.mxu0 %v224
    %1165 = vmatpush.msra.mxu0 %v223
    %1166 = vmatpush.msra.mxu0 %v222
    %1167 = vmatpush.msra.mxu0 %v221
    %1168 = vmatpush.msra.mxu0 %v220
    %1169 = vmatpush.msra.mxu0 %v219
    %1170 = vmatpush.msra.mxu0 %v218
    %1171 = vmatpush.msra.mxu0 %v217
    %1172 = vmatpush.msra.mxu0 %v216
    %1173 = vmatpush.msra.mxu0 %v215
    %1174 = vmatmul.f32.gmra.mxu0 %v1157
    %v1175 = vpop.f32.mrf.mxu0
    %v1176 = vadd.f32 %v291, %v1175
    %1177 = vdwg.mxu0
    %v1178 = vmul.f32 %v1176, 0.5
    %v1179 = vmul.f32 %v1178, 1.442695
    %v1180 = vpow.pop %v1179
    %v1181 = vmul.f32 %v22, 0.01
    %1183 = vrot.lane.b32.xlu0 %v1180, 120
    %v1184 = vpop.permute.xlu0 %1183
    %v1186 = vmul.f32 %v1181, %v1184
    %v1187 = vadd.f32 %v1186, %v1176
    %vm1188 = vcmask 64512
    %v1190 = vsel %vm1188, %v1187, 0
    %1192 = vmatpush.msra.mxu0 0.0
    %1193 = vmatpush.msra.mxu0 0.0
    %1194 = vmatpush.msra.mxu0 0.0
    %1195 = vmatpush.msra.mxu0 0.0
    %1196 = vmatpush.msra.mxu0 0.0
    %1197 = vmatpush.msra.mxu0 0.0
    %1198 = vmatpush.msra.mxu0 0.0
    %1199 = vmatpush.msra.mxu0 0.0
    %1200 = vmatpush.msra.mxu0 0.0
    %1201 = vmatpush.msra.mxu0 0.0
    %1202 = vmatpush.msra.mxu0 0.0
    %1203 = vmatpush.msra.mxu0 0.0
    %1204 = vmatpush.msra.mxu0 0.0
    %1205 = vmatpush.msra.mxu0 0.0
    %1206 = vmatpush.msra.mxu0 0.0
    %1207 = vmatpush.msra.mxu0 %v231
    %1208 = vmatmul.f32.gmra.mxu0 %v1190
    %v1209 = vpop.f32.mrf.mxu0
    %v1210 = vadd.f32 %v292, %v1209
    %1211 = vdwg.mxu0
    %v1212 = vmax.f32 %v1210, 0.0
    %1213 = vmatpush.msra.mxu0 %v164
    %1214 = vmatpush.msra.mxu0 %v161
    %1215 = vmatpush.msra.mxu0 %v158
    %1216 = vmatpush.msra.mxu0 %v155
    %1217 = vmatpush.msra.mxu0 %v152
    %1218 = vmatpush.msra.mxu0 %v149
    %1219 = vmatpush.msra.mxu0 %v146
    %1220 = vmatpush.msra.mxu0 %v143
    %1221 = vmatpush.msra.mxu0 %v140
    %1222 = vmatpush.msra.mxu0 %v137
    %1223 = vmatpush.msra.mxu0 %v134
    %1224 = vmatpush.msra.mxu0 %v131
    %1225 = vmatpush.msra.mxu0 %v128
    %1226 = vmatpush.msra.mxu0 %v125
    %1227 = vmatpush.msra.mxu0 %v122
    %1228 = vmatpush.msra.mxu0 %v119
    %1229 = vmatmul.f32.gmra.mxu0 %v1212
    %v1230 = vpop.f32.mrf.mxu0
    %v1231 = vadd.f32 %v276, %v1230
    %1232 = vdwg.mxu0
    %1233 = vmatpush.msra.mxu0 %v165
    %1234 = vmatpush.msra.mxu0 %v162
    %1235 = vmatpush.msra.mxu0 %v159
    %1236 = vmatpush.msra.mxu0 %v156
    %1237 = vmatpush.msra.mxu0 %v153
    %1238 = vmatpush.msra.mxu0 %v150
    %1239 = vmatpush.msra.mxu0 %v147
    %1240 = vmatpush.msra.mxu0 %v144
    %1241 = vmatpush.msra.mxu0 %v141
    %1242 = vmatpush.msra.mxu0 %v138
    %1243 = vmatpush.msra.mxu0 %v135
    %1244 = vmatpush.msra.mxu0 %v132
    %1245 = vmatpush.msra.mxu0 %v129
    %1246 = vmatpush.msra.mxu0 %v126
    %1247 = vmatpush.msra.mxu0 %v123
    %1248 = vmatpush.msra.mxu0 %v120
    %1249 = vmatmul.f32.gmra.mxu0 %v1212
    %v1250 = vpop.f32.mrf.mxu0
    %v1251 = vadd.f32 %v277, %v1250
    %1252 = vdwg.mxu0
    %1253 = vmatpush.msra.mxu0 %v166
    %1254 = vmatpush.msra.mxu0 %v163
    %1255 = vmatpush.msra.mxu0 %v160
    %1256 = vmatpush.msra.mxu0 %v157
    %1257 = vmatpush.msra.mxu0 %v154
    %1258 = vmatpush.msra.mxu0 %v151
    %1259 = vmatpush.msra.mxu0 %v148
    %1260 = vmatpush.msra.mxu0 %v145
    %1261 = vmatpush.msra.mxu0 %v142
    %1262 = vmatpush.msra.mxu0 %v139
    %1263 = vmatpush.msra.mxu0 %v136
    %1264 = vmatpush.msra.mxu0 %v133
    %1265 = vmatpush.msra.mxu0 %v130
    %1266 = vmatpush.msra.mxu0 %v127
    %1267 = vmatpush.msra.mxu0 %v124
    %1268 = vmatpush.msra.mxu0 %v121
    %1269 = vmatmul.f32.gmra.mxu0 %v1212
    %v1270 = vpop.f32.mrf.mxu0
    %v1271 = vadd.f32 %v278, %v1270
    %1272 = vdwg.mxu0
    %1273 = vmatpush.msra.mxu0 %v212
    %1274 = vmatpush.msra.mxu0 %v209
    %1275 = vmatpush.msra.mxu0 %v206
    %1276 = vmatpush.msra.mxu0 %v203
    %1277 = vmatpush.msra.mxu0 %v200
    %1278 = vmatpush.msra.mxu0 %v197
    %1279 = vmatpush.msra.mxu0 %v194
    %1280 = vmatpush.msra.mxu0 %v191
    %1281 = vmatpush.msra.mxu0 %v188
    %1282 = vmatpush.msra.mxu0 %v185
    %1283 = vmatpush.msra.mxu0 %v182
    %1284 = vmatpush.msra.mxu0 %v179
    %1285 = vmatpush.msra.mxu0 %v176
    %1286 = vmatpush.msra.mxu0 %v173
    %1287 = vmatpush.msra.mxu0 %v170
    %1288 = vmatpush.msra.mxu0 %v167
    %1289 = vmatmul.f32.gmra.mxu0 0.0
    %v1290 = vpop.f32.mrf.mxu0
    %v1291 = vadd.f32 %v285, %v1290
    %1292 = vdwg.mxu0
    %1293 = vmatpush.msra.mxu0 %v213
    %1294 = vmatpush.msra.mxu0 %v210
    %1295 = vmatpush.msra.mxu0 %v207
    %1296 = vmatpush.msra.mxu0 %v204
    %1297 = vmatpush.msra.mxu0 %v201
    %1298 = vmatpush.msra.mxu0 %v198
    %1299 = vmatpush.msra.mxu0 %v195
    %1300 = vmatpush.msra.mxu0 %v192
    %1301 = vmatpush.msra.mxu0 %v189
    %1302 = vmatpush.msra.mxu0 %v186
    %1303 = vmatpush.msra.mxu0 %v183
    %1304 = vmatpush.msra.mxu0 %v180
    %1305 = vmatpush.msra.mxu0 %v177
    %1306 = vmatpush.msra.mxu0 %v174
    %1307 = vmatpush.msra.mxu0 %v171
    %1308 = vmatpush.msra.mxu0 %v168
    %1309 = vmatmul.f32.gmra.mxu0 0.0
    %v1310 = vpop.f32.mrf.mxu0
    %v1311 = vadd.f32 %v286, %v1310
    %1312 = vdwg.mxu0
    %1313 = vmatpush.msra.mxu0 %v214
    %1314 = vmatpush.msra.mxu0 %v211
    %1315 = vmatpush.msra.mxu0 %v208
    %1316 = vmatpush.msra.mxu0 %v205
    %1317 = vmatpush.msra.mxu0 %v202
    %1318 = vmatpush.msra.mxu0 %v199
    %1319 = vmatpush.msra.mxu0 %v196
    %1320 = vmatpush.msra.mxu0 %v193
    %1321 = vmatpush.msra.mxu0 %v190
    %1322 = vmatpush.msra.mxu0 %v187
    %1323 = vmatpush.msra.mxu0 %v184
    %1324 = vmatpush.msra.mxu0 %v181
    %1325 = vmatpush.msra.mxu0 %v178
    %1326 = vmatpush.msra.mxu0 %v175
    %1327 = vmatpush.msra.mxu0 %v172
    %1328 = vmatpush.msra.mxu0 %v169
    %1329 = vmatmul.f32.gmra.mxu0 0.0
    %v1330 = vpop.f32.mrf.mxu0
    %v1331 = vadd.f32 %v287, %v1330
    %1332 = vdwg.mxu0
    %v1333 = vadd.f32 %v1231, %v1291
    %v1334 = vxor.u32 %v1333, 2147483648
    %v1335 = vmul.f32 %v1334, 1.442695
    %v1336 = vpow.pop %v1335
    %v1337 = vadd.f32 %v1336, 1.0
    %v1338 = vrcp.pop %v1337
    %v1339 = vmul.f32 %v1337, %v1338
    %v1340 = vsub.f32 1.0, %v1339
    %v1341 = vmul.f32 %v1338, %v1340
    %v1342 = vadd.f32 %v1338, %v1341
    %vm1343 = vweird.f32 %v1337
    %vm1344 = vweird.f32 %v1338
    %vm1345 = vmor %vm1343, %vm1344
    %v1346 = vsel %vm1345, %v1338, %v1342
    %v1347 = vand.u32 2147483647, %v1337
    %vm1348 = vcmp.eq.f32.partialorder %v1347, 8.507059e+37
    %v1349 = vand.u32 %v1337, 2147483648
    %v1350 = vor.u32 1.1754944e-38, %v1349
    %v1351 = vsel %vm1348, %v1350, %v1346
    %v1352 = vmul.f32 1.0, %v1351
    %v1353 = vadd.f32 %v1251, %v1311
    %v1354 = vxor.u32 %v1353, 2147483648
    %v1355 = vmul.f32 %v1354, 1.442695
    %v1356 = vpow.pop %v1355
    %v1357 = vadd.f32 %v1356, 1.0
    %v1358 = vrcp.pop %v1357
    %v1359 = vmul.f32 %v1357, %v1358
    %v1360 = vsub.f32 1.0, %v1359
    %v1361 = vmul.f32 %v1358, %v1360
    %v1362 = vadd.f32 %v1358, %v1361
    %vm1363 = vweird.f32 %v1357
    %vm1364 = vweird.f32 %v1358
    %vm1365 = vmor %vm1363, %vm1364
    %v1366 = vsel %vm1365, %v1358, %v1362
    %v1367 = vand.u32 2147483647, %v1357
    %vm1368 = vcmp.eq.f32.partialorder %v1367, 8.507059e+37
    %v1369 = vand.u32 %v1357, 2147483648
    %v1370 = vor.u32 1.1754944e-38, %v1369
    %v1371 = vsel %vm1368, %v1370, %v1366
    %v1372 = vmul.f32 1.0, %v1371
    %v1373 = vmul.f32 %v1352, %v1331
    %v1374 = vadd.f32 %v1271, %v1373
    %v1375 = vtanh.pop %v1374
    %v1376 = vsub.f32 1.0, %v1372
    %v1377 = vmul.f32 %v1376, %v1375
    %v1378 = vmul.f32 %v1372, 0.0
    %v1379 = vadd.f32 %v1377, %v1378
    %1380 = vmatpush.msra.mxu0 %v212
    %1381 = vmatpush.msra.mxu0 %v209
    %1382 = vmatpush.msra.mxu0 %v206
    %1383 = vmatpush.msra.mxu0 %v203
    %1384 = vmatpush.msra.mxu0 %v200
    %1385 = vmatpush.msra.mxu0 %v197
    %1386 = vmatpush.msra.mxu0 %v194
    %1387 = vmatpush.msra.mxu0 %v191
    %1388 = vmatpush.msra.mxu0 %v188
    %1389 = vmatpush.msra.mxu0 %v185
    %1390 = vmatpush.msra.mxu0 %v182
    %1391 = vmatpush.msra.mxu0 %v179
    %1392 = vmatpush.msra.mxu0 %v176
    %1393 = vmatpush.msra.mxu0 %v173
    %1394 = vmatpush.msra.mxu0 %v170
    %1395 = vmatpush.msra.mxu0 %v167
    %1396 = vmatmul.f32.gmra.mxu0 %v1379
    %v1397 = vpop.f32.mrf.mxu0
    %v1398 = vadd.f32 %v285, %v1397
    %1399 = vdwg.mxu0
    %1400 = vmatpush.msra.mxu0 %v213
    %1401 = vmatpush.msra.mxu0 %v210
    %1402 = vmatpush.msra.mxu0 %v207
    %1403 = vmatpush.msra.mxu0 %v204
    %1404 = vmatpush.msra.mxu0 %v201
    %1405 = vmatpush.msra.mxu0 %v198
    %1406 = vmatpush.msra.mxu0 %v195
    %1407 = vmatpush.msra.mxu0 %v192
    %1408 = vmatpush.msra.mxu0 %v189
    %1409 = vmatpush.msra.mxu0 %v186
    %1410 = vmatpush.msra.mxu0 %v183
    %1411 = vmatpush.msra.mxu0 %v180
    %1412 = vmatpush.msra.mxu0 %v177
    %1413 = vmatpush.msra.mxu0 %v174
    %1414 = vmatpush.msra.mxu0 %v171
    %1415 = vmatpush.msra.mxu0 %v168
    %1416 = vmatmul.f32.gmra.mxu0 %v1379
    %v1417 = vpop.f32.mrf.mxu0
    %v1418 = vadd.f32 %v286, %v1417
    %1419 = vdwg.mxu0
    %1420 = vmatpush.msra.mxu0 %v214
    %1421 = vmatpush.msra.mxu0 %v211
    %1422 = vmatpush.msra.mxu0 %v208
    %1423 = vmatpush.msra.mxu0 %v205
    %1424 = vmatpush.msra.mxu0 %v202
    %1425 = vmatpush.msra.mxu0 %v199
    %1426 = vmatpush.msra.mxu0 %v196
    %1427 = vmatpush.msra.mxu0 %v193
    %1428 = vmatpush.msra.mxu0 %v190
    %1429 = vmatpush.msra.mxu0 %v187
    %1430 = vmatpush.msra.mxu0 %v184
    %1431 = vmatpush.msra.mxu0 %v181
    %1432 = vmatpush.msra.mxu0 %v178
    %1433 = vmatpush.msra.mxu0 %v175
    %1434 = vmatpush.msra.mxu0 %v172
    %1435 = vmatpush.msra.mxu0 %v169
    %1436 = vmatmul.f32.gmra.mxu0 %v1379
    %v1437 = vpop.f32.mrf.mxu0
    %v1438 = vadd.f32 %v287, %v1437
    %1439 = vdwg.mxu0
    %v1440 = vadd.f32 %v1231, %v1398
    %v1441 = vxor.u32 %v1440, 2147483648
    %v1442 = vmul.f32 %v1441, 1.442695
    %v1443 = vpow.pop %v1442
    %v1444 = vadd.f32 %v1443, 1.0
    %v1445 = vrcp.pop %v1444
    %v1446 = vmul.f32 %v1444, %v1445
    %v1447 = vsub.f32 1.0, %v1446
    %v1448 = vmul.f32 %v1445, %v1447
    %v1449 = vadd.f32 %v1445, %v1448
    %vm1450 = vweird.f32 %v1444
    %vm1451 = vweird.f32 %v1445
    %vm1452 = vmor %vm1450, %vm1451
    %v1453 = vsel %vm1452, %v1445, %v1449
    %v1454 = vand.u32 2147483647, %v1444
    %vm1455 = vcmp.eq.f32.partialorder %v1454, 8.507059e+37
    %v1456 = vand.u32 %v1444, 2147483648
    %v1457 = vor.u32 1.1754944e-38, %v1456
    %v1458 = vsel %vm1455, %v1457, %v1453
    %v1459 = vmul.f32 1.0, %v1458
    %v1460 = vadd.f32 %v1251, %v1418
    %v1461 = vxor.u32 %v1460, 2147483648
    %v1462 = vmul.f32 %v1461, 1.442695
    %v1463 = vpow.pop %v1462
    %v1464 = vadd.f32 %v1463, 1.0
    %v1465 = vrcp.pop %v1464
    %v1466 = vmul.f32 %v1464, %v1465
    %v1467 = vsub.f32 1.0, %v1466
    %v1468 = vmul.f32 %v1465, %v1467
    %v1469 = vadd.f32 %v1465, %v1468
    %vm1470 = vweird.f32 %v1464
    %vm1471 = vweird.f32 %v1465
    %vm1472 = vmor %vm1470, %vm1471
    %v1473 = vsel %vm1472, %v1465, %v1469
    %v1474 = vand.u32 2147483647, %v1464
    %vm1475 = vcmp.eq.f32.partialorder %v1474, 8.507059e+37
    %v1476 = vand.u32 %v1464, 2147483648
    %v1477 = vor.u32 1.1754944e-38, %v1476
    %v1478 = vsel %vm1475, %v1477, %v1473
    %v1479 = vmul.f32 1.0, %v1478
    %v1480 = vmul.f32 %v1459, %v1438
    %v1481 = vadd.f32 %v1271, %v1480
    %v1482 = vtanh.pop %v1481
    %v1483 = vsub.f32 1.0, %v1479
    %v1484 = vmul.f32 %v1483, %v1482
    %v1485 = vmul.f32 %v1479, %v1379
    %v1486 = vadd.f32 %v1484, %v1485
    %1487 = vmatpush.msra.mxu0 %v212
    %1488 = vmatpush.msra.mxu0 %v209
    %1489 = vmatpush.msra.mxu0 %v206
    %1490 = vmatpush.msra.mxu0 %v203
    %1491 = vmatpush.msra.mxu0 %v200
    %1492 = vmatpush.msra.mxu0 %v197
    %1493 = vmatpush.msra.mxu0 %v194
    %1494 = vmatpush.msra.mxu0 %v191
    %1495 = vmatpush.msra.mxu0 %v188
    %1496 = vmatpush.msra.mxu0 %v185
    %1497 = vmatpush.msra.mxu0 %v182
    %1498 = vmatpush.msra.mxu0 %v179
    %1499 = vmatpush.msra.mxu0 %v176
    %1500 = vmatpush.msra.mxu0 %v173
    %1501 = vmatpush.msra.mxu0 %v170
    %1502 = vmatpush.msra.mxu0 %v167
    %1503 = vmatmul.f32.gmra.mxu0 %v1486
    %v1504 = vpop.f32.mrf.mxu0
    %v1505 = vadd.f32 %v285, %v1504
    %1506 = vdwg.mxu0
    %1507 = vmatpush.msra.mxu0 %v213
    %1508 = vmatpush.msra.mxu0 %v210
    %1509 = vmatpush.msra.mxu0 %v207
    %1510 = vmatpush.msra.mxu0 %v204
    %1511 = vmatpush.msra.mxu0 %v201
    %1512 = vmatpush.msra.mxu0 %v198
    %1513 = vmatpush.msra.mxu0 %v195
    %1514 = vmatpush.msra.mxu0 %v192
    %1515 = vmatpush.msra.mxu0 %v189
    %1516 = vmatpush.msra.mxu0 %v186
    %1517 = vmatpush.msra.mxu0 %v183
    %1518 = vmatpush.msra.mxu0 %v180
    %1519 = vmatpush.msra.mxu0 %v177
    %1520 = vmatpush.msra.mxu0 %v174
    %1521 = vmatpush.msra.mxu0 %v171
    %1522 = vmatpush.msra.mxu0 %v168
    %1523 = vmatmul.f32.gmra.mxu0 %v1486
    %v1524 = vpop.f32.mrf.mxu0
    %v1525 = vadd.f32 %v286, %v1524
    %1526 = vdwg.mxu0
    %1527 = vmatpush.msra.mxu0 %v214
    %1528 = vmatpush.msra.mxu0 %v211
    %1529 = vmatpush.msra.mxu0 %v208
    %1530 = vmatpush.msra.mxu0 %v205
    %1531 = vmatpush.msra.mxu0 %v202
    %1532 = vmatpush.msra.mxu0 %v199
    %1533 = vmatpush.msra.mxu0 %v196
    %1534 = vmatpush.msra.mxu0 %v193
    %1535 = vmatpush.msra.mxu0 %v190
    %1536 = vmatpush.msra.mxu0 %v187
    %1537 = vmatpush.msra.mxu0 %v184
    %1538 = vmatpush.msra.mxu0 %v181
    %1539 = vmatpush.msra.mxu0 %v178
    %1540 = vmatpush.msra.mxu0 %v175
    %1541 = vmatpush.msra.mxu0 %v172
    %1542 = vmatpush.msra.mxu0 %v169
    %1543 = vmatmul.f32.gmra.mxu0 %v1486
    %v1544 = vpop.f32.mrf.mxu0
    %v1545 = vadd.f32 %v287, %v1544
    %1546 = vdwg.mxu0
    %v1547 = vadd.f32 %v1231, %v1505
    %v1548 = vxor.u32 %v1547, 2147483648
    %v1549 = vmul.f32 %v1548, 1.442695
    %v1550 = vpow.pop %v1549
    %v1551 = vadd.f32 %v1550, 1.0
    %v1552 = vrcp.pop %v1551
    %v1553 = vmul.f32 %v1551, %v1552
    %v1554 = vsub.f32 1.0, %v1553
    %v1555 = vmul.f32 %v1552, %v1554
    %v1556 = vadd.f32 %v1552, %v1555
    %vm1557 = vweird.f32 %v1551
    %vm1558 = vweird.f32 %v1552
    %vm1559 = vmor %vm1557, %vm1558
    %v1560 = vsel %vm1559, %v1552, %v1556
    %v1561 = vand.u32 2147483647, %v1551
    %vm1562 = vcmp.eq.f32.partialorder %v1561, 8.507059e+37
    %v1563 = vand.u32 %v1551, 2147483648
    %v1564 = vor.u32 1.1754944e-38, %v1563
    %v1565 = vsel %vm1562, %v1564, %v1560
    %v1566 = vmul.f32 1.0, %v1565
    %v1567 = vadd.f32 %v1251, %v1525
    %v1568 = vxor.u32 %v1567, 2147483648
    %v1569 = vmul.f32 %v1568, 1.442695
    %v1570 = vpow.pop %v1569
    %v1571 = vadd.f32 %v1570, 1.0
    %v1572 = vrcp.pop %v1571
    %v1573 = vmul.f32 %v1571, %v1572
    %v1574 = vsub.f32 1.0, %v1573
    %v1575 = vmul.f32 %v1572, %v1574
    %v1576 = vadd.f32 %v1572, %v1575
    %vm1577 = vweird.f32 %v1571
    %vm1578 = vweird.f32 %v1572
    %vm1579 = vmor %vm1577, %vm1578
    %v1580 = vsel %vm1579, %v1572, %v1576
    %v1581 = vand.u32 2147483647, %v1571
    %vm1582 = vcmp.eq.f32.partialorder %v1581, 8.507059e+37
    %v1583 = vand.u32 %v1571, 2147483648
    %v1584 = vor.u32 1.1754944e-38, %v1583
    %v1585 = vsel %vm1582, %v1584, %v1580
    %v1586 = vmul.f32 1.0, %v1585
    %v1587 = vmul.f32 %v1566, %v1545
    %v1588 = vadd.f32 %v1271, %v1587
    %v1589 = vtanh.pop %v1588
    %v1590 = vsub.f32 1.0, %v1586
    %v1591 = vmul.f32 %v1590, %v1589
    %v1592 = vmul.f32 %v1586, %v1486
    %v1593 = vadd.f32 %v1591, %v1592
    %1594 = vmatpush.msra.mxu0 %v212
    %1595 = vmatpush.msra.mxu0 %v209
    %1596 = vmatpush.msra.mxu0 %v206
    %1597 = vmatpush.msra.mxu0 %v203
    %1598 = vmatpush.msra.mxu0 %v200
    %1599 = vmatpush.msra.mxu0 %v197
    %1600 = vmatpush.msra.mxu0 %v194
    %1601 = vmatpush.msra.mxu0 %v191
    %1602 = vmatpush.msra.mxu0 %v188
    %1603 = vmatpush.msra.mxu0 %v185
    %1604 = vmatpush.msra.mxu0 %v182
    %1605 = vmatpush.msra.mxu0 %v179
    %1606 = vmatpush.msra.mxu0 %v176
    %1607 = vmatpush.msra.mxu0 %v173
    %1608 = vmatpush.msra.mxu0 %v170
    %1609 = vmatpush.msra.mxu0 %v167
    %1610 = vmatmul.f32.gmra.mxu0 %v1593
    %v1611 = vpop.f32.mrf.mxu0
    %v1612 = vadd.f32 %v285, %v1611
    %1613 = vdwg.mxu0
    %1614 = vmatpush.msra.mxu0 %v213
    %1615 = vmatpush.msra.mxu0 %v210
    %1616 = vmatpush.msra.mxu0 %v207
    %1617 = vmatpush.msra.mxu0 %v204
    %1618 = vmatpush.msra.mxu0 %v201
    %1619 = vmatpush.msra.mxu0 %v198
    %1620 = vmatpush.msra.mxu0 %v195
    %1621 = vmatpush.msra.mxu0 %v192
    %1622 = vmatpush.msra.mxu0 %v189
    %1623 = vmatpush.msra.mxu0 %v186
    %1624 = vmatpush.msra.mxu0 %v183
    %1625 = vmatpush.msra.mxu0 %v180
    %1626 = vmatpush.msra.mxu0 %v177
    %1627 = vmatpush.msra.mxu0 %v174
    %1628 = vmatpush.msra.mxu0 %v171
    %1629 = vmatpush.msra.mxu0 %v168
    %1630 = vmatmul.f32.gmra.mxu0 %v1593
    %v1631 = vpop.f32.mrf.mxu0
    %v1632 = vadd.f32 %v286, %v1631
    %1633 = vdwg.mxu0
    %1634 = vmatpush.msra.mxu0 %v214
    %1635 = vmatpush.msra.mxu0 %v211
    %1636 = vmatpush.msra.mxu0 %v208
    %1637 = vmatpush.msra.mxu0 %v205
    %1638 = vmatpush.msra.mxu0 %v202
    %1639 = vmatpush.msra.mxu0 %v199
    %1640 = vmatpush.msra.mxu0 %v196
    %1641 = vmatpush.msra.mxu0 %v193
    %1642 = vmatpush.msra.mxu0 %v190
    %1643 = vmatpush.msra.mxu0 %v187
    %1644 = vmatpush.msra.mxu0 %v184
    %1645 = vmatpush.msra.mxu0 %v181
    %1646 = vmatpush.msra.mxu0 %v178
    %1647 = vmatpush.msra.mxu0 %v175
    %1648 = vmatpush.msra.mxu0 %v172
    %1649 = vmatpush.msra.mxu0 %v169
    %1650 = vmatmul.f32.gmra.mxu0 %v1593
    %v1651 = vpop.f32.mrf.mxu0
    %v1652 = vadd.f32 %v287, %v1651
    %1653 = vdwg.mxu0
    %v1654 = vadd.f32 %v1231, %v1612
    %v1655 = vxor.u32 %v1654, 2147483648
    %v1656 = vmul.f32 %v1655, 1.442695
    %v1657 = vpow.pop %v1656
    %v1658 = vadd.f32 %v1657, 1.0
    %v1659 = vrcp.pop %v1658
    %v1660 = vmul.f32 %v1658, %v1659
    %v1661 = vsub.f32 1.0, %v1660
    %v1662 = vmul.f32 %v1659, %v1661
    %v1663 = vadd.f32 %v1659, %v1662
    %vm1664 = vweird.f32 %v1658
    %vm1665 = vweird.f32 %v1659
    %vm1666 = vmor %vm1664, %vm1665
    %v1667 = vsel %vm1666, %v1659, %v1663
    %v1668 = vand.u32 2147483647, %v1658
    %vm1669 = vcmp.eq.f32.partialorder %v1668, 8.507059e+37
    %v1670 = vand.u32 %v1658, 2147483648
    %v1671 = vor.u32 1.1754944e-38, %v1670
    %v1672 = vsel %vm1669, %v1671, %v1667
    %v1673 = vmul.f32 1.0, %v1672
    %v1674 = vadd.f32 %v1251, %v1632
    %v1675 = vxor.u32 %v1674, 2147483648
    %v1676 = vmul.f32 %v1675, 1.442695
    %v1677 = vpow.pop %v1676
    %v1678 = vadd.f32 %v1677, 1.0
    %v1679 = vrcp.pop %v1678
    %v1680 = vmul.f32 %v1678, %v1679
    %v1681 = vsub.f32 1.0, %v1680
    %v1682 = vmul.f32 %v1679, %v1681
    %v1683 = vadd.f32 %v1679, %v1682
    %vm1684 = vweird.f32 %v1678
    %vm1685 = vweird.f32 %v1679
    %vm1686 = vmor %vm1684, %vm1685
    %v1687 = vsel %vm1686, %v1679, %v1683
    %v1688 = vand.u32 2147483647, %v1678
    %vm1689 = vcmp.eq.f32.partialorder %v1688, 8.507059e+37
    %v1690 = vand.u32 %v1678, 2147483648
    %v1691 = vor.u32 1.1754944e-38, %v1690
    %v1692 = vsel %vm1689, %v1691, %v1687
    %v1693 = vmul.f32 1.0, %v1692
    %v1694 = vmul.f32 %v1673, %v1652
    %v1695 = vadd.f32 %v1271, %v1694
    %v1696 = vtanh.pop %v1695
    %v1697 = vsub.f32 1.0, %v1693
    %v1698 = vmul.f32 %v1697, %v1696
    %v1699 = vmul.f32 %v1693, %v1593
    %v1700 = vadd.f32 %v1698, %v1699
    %1701 = vmatpush.msra.mxu0 %v212
    %1702 = vmatpush.msra.mxu0 %v209
    %1703 = vmatpush.msra.mxu0 %v206
    %1704 = vmatpush.msra.mxu0 %v203
    %1705 = vmatpush.msra.mxu0 %v200
    %1706 = vmatpush.msra.mxu0 %v197
    %1707 = vmatpush.msra.mxu0 %v194
    %1708 = vmatpush.msra.mxu0 %v191
    %1709 = vmatpush.msra.mxu0 %v188
    %1710 = vmatpush.msra.mxu0 %v185
    %1711 = vmatpush.msra.mxu0 %v182
    %1712 = vmatpush.msra.mxu0 %v179
    %1713 = vmatpush.msra.mxu0 %v176
    %1714 = vmatpush.msra.mxu0 %v173
    %1715 = vmatpush.msra.mxu0 %v170
    %1716 = vmatpush.msra.mxu0 %v167
    %1717 = vmatmul.f32.gmra.mxu0 %v1700
    %v1718 = vpop.f32.mrf.mxu0
    %v1719 = vadd.f32 %v285, %v1718
    %1720 = vdwg.mxu0
    %1721 = vmatpush.msra.mxu0 %v213
    %1722 = vmatpush.msra.mxu0 %v210
    %1723 = vmatpush.msra.mxu0 %v207
    %1724 = vmatpush.msra.mxu0 %v204
    %1725 = vmatpush.msra.mxu0 %v201
    %1726 = vmatpush.msra.mxu0 %v198
    %1727 = vmatpush.msra.mxu0 %v195
    %1728 = vmatpush.msra.mxu0 %v192
    %1729 = vmatpush.msra.mxu0 %v189
    %1730 = vmatpush.msra.mxu0 %v186
    %1731 = vmatpush.msra.mxu0 %v183
    %1732 = vmatpush.msra.mxu0 %v180
    %1733 = vmatpush.msra.mxu0 %v177
    %1734 = vmatpush.msra.mxu0 %v174
    %1735 = vmatpush.msra.mxu0 %v171
    %1736 = vmatpush.msra.mxu0 %v168
    %1737 = vmatmul.f32.gmra.mxu0 %v1700
    %v1738 = vpop.f32.mrf.mxu0
    %v1739 = vadd.f32 %v286, %v1738
    %1740 = vdwg.mxu0
    %1741 = vmatpush.msra.mxu0 %v214
    %1742 = vmatpush.msra.mxu0 %v211
    %1743 = vmatpush.msra.mxu0 %v208
    %1744 = vmatpush.msra.mxu0 %v205
    %1745 = vmatpush.msra.mxu0 %v202
    %1746 = vmatpush.msra.mxu0 %v199
    %1747 = vmatpush.msra.mxu0 %v196
    %1748 = vmatpush.msra.mxu0 %v193
    %1749 = vmatpush.msra.mxu0 %v190
    %1750 = vmatpush.msra.mxu0 %v187
    %1751 = vmatpush.msra.mxu0 %v184
    %1752 = vmatpush.msra.mxu0 %v181
    %1753 = vmatpush.msra.mxu0 %v178
    %1754 = vmatpush.msra.mxu0 %v175
    %1755 = vmatpush.msra.mxu0 %v172
    %1756 = vmatpush.msra.mxu0 %v169
    %1757 = vmatmul.f32.gmra.mxu0 %v1700
    %v1758 = vpop.f32.mrf.mxu0
    %v1759 = vadd.f32 %v287, %v1758
    %1760 = vdwg.mxu0
    %v1761 = vadd.f32 %v1231, %v1719
    %v1762 = vxor.u32 %v1761, 2147483648
    %v1763 = vmul.f32 %v1762, 1.442695
    %v1764 = vpow.pop %v1763
    %v1765 = vadd.f32 %v1764, 1.0
    %v1766 = vrcp.pop %v1765
    %v1767 = vmul.f32 %v1765, %v1766
    %v1768 = vsub.f32 1.0, %v1767
    %v1769 = vmul.f32 %v1766, %v1768
    %v1770 = vadd.f32 %v1766, %v1769
    %vm1771 = vweird.f32 %v1765
    %vm1772 = vweird.f32 %v1766
    %vm1773 = vmor %vm1771, %vm1772
    %v1774 = vsel %vm1773, %v1766, %v1770
    %v1775 = vand.u32 2147483647, %v1765
    %vm1776 = vcmp.eq.f32.partialorder %v1775, 8.507059e+37
    %v1777 = vand.u32 %v1765, 2147483648
    %v1778 = vor.u32 1.1754944e-38, %v1777
    %v1779 = vsel %vm1776, %v1778, %v1774
    %v1780 = vmul.f32 1.0, %v1779
    %v1781 = vadd.f32 %v1251, %v1739
    %v1782 = vxor.u32 %v1781, 2147483648
    %v1783 = vmul.f32 %v1782, 1.442695
    %v1784 = vpow.pop %v1783
    %v1785 = vadd.f32 %v1784, 1.0
    %v1786 = vrcp.pop %v1785
    %v1787 = vmul.f32 %v1785, %v1786
    %v1788 = vsub.f32 1.0, %v1787
    %v1789 = vmul.f32 %v1786, %v1788
    %v1790 = vadd.f32 %v1786, %v1789
    %vm1791 = vweird.f32 %v1785
    %vm1792 = vweird.f32 %v1786
    %vm1793 = vmor %vm1791, %vm1792
    %v1794 = vsel %vm1793, %v1786, %v1790
    %v1795 = vand.u32 2147483647, %v1785
    %vm1796 = vcmp.eq.f32.partialorder %v1795, 8.507059e+37
    %v1797 = vand.u32 %v1785, 2147483648
    %v1798 = vor.u32 1.1754944e-38, %v1797
    %v1799 = vsel %vm1796, %v1798, %v1794
    %v1800 = vmul.f32 1.0, %v1799
    %v1801 = vmul.f32 %v1780, %v1759
    %v1802 = vadd.f32 %v1271, %v1801
    %v1803 = vtanh.pop %v1802
    %v1804 = vsub.f32 1.0, %v1800
    %v1805 = vmul.f32 %v1804, %v1803
    %v1806 = vmul.f32 %v1800, %v1700
    %v1807 = vadd.f32 %v1805, %v1806
    %1808 = vmatpush.msra.mxu0 %v212
    %1809 = vmatpush.msra.mxu0 %v209
    %1810 = vmatpush.msra.mxu0 %v206
    %1811 = vmatpush.msra.mxu0 %v203
    %1812 = vmatpush.msra.mxu0 %v200
    %1813 = vmatpush.msra.mxu0 %v197
    %1814 = vmatpush.msra.mxu0 %v194
    %1815 = vmatpush.msra.mxu0 %v191
    %1816 = vmatpush.msra.mxu0 %v188
    %1817 = vmatpush.msra.mxu0 %v185
    %1818 = vmatpush.msra.mxu0 %v182
    %1819 = vmatpush.msra.mxu0 %v179
    %1820 = vmatpush.msra.mxu0 %v176
    %1821 = vmatpush.msra.mxu0 %v173
    %1822 = vmatpush.msra.mxu0 %v170
    %1823 = vmatpush.msra.mxu0 %v167
    %1824 = vmatmul.f32.gmra.mxu0 %v1807
    %v1825 = vpop.f32.mrf.mxu0
    %v1826 = vadd.f32 %v285, %v1825
    %1827 = vdwg.mxu0
    %1828 = vmatpush.msra.mxu0 %v213
    %1829 = vmatpush.msra.mxu0 %v210
    %1830 = vmatpush.msra.mxu0 %v207
    %1831 = vmatpush.msra.mxu0 %v204
    %1832 = vmatpush.msra.mxu0 %v201
    %1833 = vmatpush.msra.mxu0 %v198
    %1834 = vmatpush.msra.mxu0 %v195
    %1835 = vmatpush.msra.mxu0 %v192
    %1836 = vmatpush.msra.mxu0 %v189
    %1837 = vmatpush.msra.mxu0 %v186
    %1838 = vmatpush.msra.mxu0 %v183
    %1839 = vmatpush.msra.mxu0 %v180
    %1840 = vmatpush.msra.mxu0 %v177
    %1841 = vmatpush.msra.mxu0 %v174
    %1842 = vmatpush.msra.mxu0 %v171
    %1843 = vmatpush.msra.mxu0 %v168
    %1844 = vmatmul.f32.gmra.mxu0 %v1807
    %v1845 = vpop.f32.mrf.mxu0
    %v1846 = vadd.f32 %v286, %v1845
    %1847 = vdwg.mxu0
    %1848 = vmatpush.msra.mxu0 %v214
    %1849 = vmatpush.msra.mxu0 %v211
    %1850 = vmatpush.msra.mxu0 %v208
    %1851 = vmatpush.msra.mxu0 %v205
    %1852 = vmatpush.msra.mxu0 %v202
    %1853 = vmatpush.msra.mxu0 %v199
    %1854 = vmatpush.msra.mxu0 %v196
    %1855 = vmatpush.msra.mxu0 %v193
    %1856 = vmatpush.msra.mxu0 %v190
    %1857 = vmatpush.msra.mxu0 %v187
    %1858 = vmatpush.msra.mxu0 %v184
    %1859 = vmatpush.msra.mxu0 %v181
    %1860 = vmatpush.msra.mxu0 %v178
    %1861 = vmatpush.msra.mxu0 %v175
    %1862 = vmatpush.msra.mxu0 %v172
    %1863 = vmatpush.msra.mxu0 %v169
    %1864 = vmatmul.f32.gmra.mxu0 %v1807
    %v1865 = vpop.f32.mrf.mxu0
    %v1866 = vadd.f32 %v287, %v1865
    %1867 = vdwg.mxu0
    %v1868 = vadd.f32 %v1231, %v1826
    %v1869 = vxor.u32 %v1868, 2147483648
    %v1870 = vmul.f32 %v1869, 1.442695
    %v1871 = vpow.pop %v1870
    %v1872 = vadd.f32 %v1871, 1.0
    %v1873 = vrcp.pop %v1872
    %v1874 = vmul.f32 %v1872, %v1873
    %v1875 = vsub.f32 1.0, %v1874
    %v1876 = vmul.f32 %v1873, %v1875
    %v1877 = vadd.f32 %v1873, %v1876
    %vm1878 = vweird.f32 %v1872
    %vm1879 = vweird.f32 %v1873
    %vm1880 = vmor %vm1878, %vm1879
    %v1881 = vsel %vm1880, %v1873, %v1877
    %v1882 = vand.u32 2147483647, %v1872
    %vm1883 = vcmp.eq.f32.partialorder %v1882, 8.507059e+37
    %v1884 = vand.u32 %v1872, 2147483648
    %v1885 = vor.u32 1.1754944e-38, %v1884
    %v1886 = vsel %vm1883, %v1885, %v1881
    %v1887 = vmul.f32 1.0, %v1886
    %v1888 = vadd.f32 %v1251, %v1846
    %v1889 = vxor.u32 %v1888, 2147483648
    %v1890 = vmul.f32 %v1889, 1.442695
    %v1891 = vpow.pop %v1890
    %v1892 = vadd.f32 %v1891, 1.0
    %v1893 = vrcp.pop %v1892
    %v1894 = vmul.f32 %v1892, %v1893
    %v1895 = vsub.f32 1.0, %v1894
    %v1896 = vmul.f32 %v1893, %v1895
    %v1897 = vadd.f32 %v1893, %v1896
    %vm1898 = vweird.f32 %v1892
    %vm1899 = vweird.f32 %v1893
    %vm1900 = vmor %vm1898, %vm1899
    %v1901 = vsel %vm1900, %v1893, %v1897
    %v1902 = vand.u32 2147483647, %v1892
    %vm1903 = vcmp.eq.f32.partialorder %v1902, 8.507059e+37
    %v1904 = vand.u32 %v1892, 2147483648
    %v1905 = vor.u32 1.1754944e-38, %v1904
    %v1906 = vsel %vm1903, %v1905, %v1901
    %v1907 = vmul.f32 1.0, %v1906
    %v1908 = vmul.f32 %v1887, %v1866
    %v1909 = vadd.f32 %v1271, %v1908
    %v1910 = vtanh.pop %v1909
    %v1911 = vsub.f32 1.0, %v1907
    %v1912 = vmul.f32 %v1911, %v1910
    %v1913 = vmul.f32 %v1907, %v1807
    %v1914 = vadd.f32 %v1912, %v1913
    %1915 = vmatpush.msra.mxu0 %v212
    %1916 = vmatpush.msra.mxu0 %v209
    %1917 = vmatpush.msra.mxu0 %v206
    %1918 = vmatpush.msra.mxu0 %v203
    %1919 = vmatpush.msra.mxu0 %v200
    %1920 = vmatpush.msra.mxu0 %v197
    %1921 = vmatpush.msra.mxu0 %v194
    %1922 = vmatpush.msra.mxu0 %v191
    %1923 = vmatpush.msra.mxu0 %v188
    %1924 = vmatpush.msra.mxu0 %v185
    %1925 = vmatpush.msra.mxu0 %v182
    %1926 = vmatpush.msra.mxu0 %v179
    %1927 = vmatpush.msra.mxu0 %v176
    %1928 = vmatpush.msra.mxu0 %v173
    %1929 = vmatpush.msra.mxu0 %v170
    %1930 = vmatpush.msra.mxu0 %v167
    %1931 = vmatmul.f32.gmra.mxu0 %v1914
    %v1932 = vpop.f32.mrf.mxu0
    %v1933 = vadd.f32 %v285, %v1932
    %1934 = vdwg.mxu0
    %1935 = vmatpush.msra.mxu0 %v213
    %1936 = vmatpush.msra.mxu0 %v210
    %1937 = vmatpush.msra.mxu0 %v207
    %1938 = vmatpush.msra.mxu0 %v204
    %1939 = vmatpush.msra.mxu0 %v201
    %1940 = vmatpush.msra.mxu0 %v198
    %1941 = vmatpush.msra.mxu0 %v195
    %1942 = vmatpush.msra.mxu0 %v192
    %1943 = vmatpush.msra.mxu0 %v189
    %1944 = vmatpush.msra.mxu0 %v186
    %1945 = vmatpush.msra.mxu0 %v183
    %1946 = vmatpush.msra.mxu0 %v180
    %1947 = vmatpush.msra.mxu0 %v177
    %1948 = vmatpush.msra.mxu0 %v174
    %1949 = vmatpush.msra.mxu0 %v171
    %1950 = vmatpush.msra.mxu0 %v168
    %1951 = vmatmul.f32.gmra.mxu0 %v1914
    %v1952 = vpop.f32.mrf.mxu0
    %v1953 = vadd.f32 %v286, %v1952
    %1954 = vdwg.mxu0
    %1955 = vmatpush.msra.mxu0 %v214
    %1956 = vmatpush.msra.mxu0 %v211
    %1957 = vmatpush.msra.mxu0 %v208
    %1958 = vmatpush.msra.mxu0 %v205
    %1959 = vmatpush.msra.mxu0 %v202
    %1960 = vmatpush.msra.mxu0 %v199
    %1961 = vmatpush.msra.mxu0 %v196
    %1962 = vmatpush.msra.mxu0 %v193
    %1963 = vmatpush.msra.mxu0 %v190
    %1964 = vmatpush.msra.mxu0 %v187
    %1965 = vmatpush.msra.mxu0 %v184
    %1966 = vmatpush.msra.mxu0 %v181
    %1967 = vmatpush.msra.mxu0 %v178
    %1968 = vmatpush.msra.mxu0 %v175
    %1969 = vmatpush.msra.mxu0 %v172
    %1970 = vmatpush.msra.mxu0 %v169
    %1971 = vmatmul.f32.gmra.mxu0 %v1914
    %v1972 = vpop.f32.mrf.mxu0
    %v1973 = vadd.f32 %v287, %v1972
    %1974 = vdwg.mxu0
    %v1975 = vadd.f32 %v1231, %v1933
    %v1976 = vxor.u32 %v1975, 2147483648
    %v1977 = vmul.f32 %v1976, 1.442695
    %v1978 = vpow.pop %v1977
    %v1979 = vadd.f32 %v1978, 1.0
    %v1980 = vrcp.pop %v1979
    %v1981 = vmul.f32 %v1979, %v1980
    %v1982 = vsub.f32 1.0, %v1981
    %v1983 = vmul.f32 %v1980, %v1982
    %v1984 = vadd.f32 %v1980, %v1983
    %vm1985 = vweird.f32 %v1979
    %vm1986 = vweird.f32 %v1980
    %vm1987 = vmor %vm1985, %vm1986
    %v1988 = vsel %vm1987, %v1980, %v1984
    %v1989 = vand.u32 2147483647, %v1979
    %vm1990 = vcmp.eq.f32.partialorder %v1989, 8.507059e+37
    %v1991 = vand.u32 %v1979, 2147483648
    %v1992 = vor.u32 1.1754944e-38, %v1991
    %v1993 = vsel %vm1990, %v1992, %v1988
    %v1994 = vmul.f32 1.0, %v1993
    %v1995 = vadd.f32 %v1251, %v1953
    %v1996 = vxor.u32 %v1995, 2147483648
    %v1997 = vmul.f32 %v1996, 1.442695
    %v1998 = vpow.pop %v1997
    %v1999 = vadd.f32 %v1998, 1.0
    %v2000 = vrcp.pop %v1999
    %v2001 = vmul.f32 %v1999, %v2000
    %v2002 = vsub.f32 1.0, %v2001
    %v2003 = vmul.f32 %v2000, %v2002
    %v2004 = vadd.f32 %v2000, %v2003
    %vm2005 = vweird.f32 %v1999
    %vm2006 = vweird.f32 %v2000
    %vm2007 = vmor %vm2005, %vm2006
    %v2008 = vsel %vm2007, %v2000, %v2004
    %v2009 = vand.u32 2147483647, %v1999
    %vm2010 = vcmp.eq.f32.partialorder %v2009, 8.507059e+37
    %v2011 = vand.u32 %v1999, 2147483648
    %v2012 = vor.u32 1.1754944e-38, %v2011
    %v2013 = vsel %vm2010, %v2012, %v2008
    %v2014 = vmul.f32 1.0, %v2013
    %v2015 = vmul.f32 %v1994, %v1973
    %v2016 = vadd.f32 %v1271, %v2015
    %v2017 = vtanh.pop %v2016
    %v2018 = vsub.f32 1.0, %v2014
    %v2019 = vmul.f32 %v2018, %v2017
    %v2020 = vmul.f32 %v2014, %v1914
    %v2021 = vadd.f32 %v2019, %v2020
    %2022 = vmatpush.msra.mxu0 %v247
    %2023 = vmatpush.msra.mxu0 %v246
    %2024 = vmatpush.msra.mxu0 %v245
    %2025 = vmatpush.msra.mxu0 %v244
    %2026 = vmatpush.msra.mxu0 %v243
    %2027 = vmatpush.msra.mxu0 %v242
    %2028 = vmatpush.msra.mxu0 %v241
    %2029 = vmatpush.msra.mxu0 %v240
    %2030 = vmatpush.msra.mxu0 %v239
    %2031 = vmatpush.msra.mxu0 %v238
    %2032 = vmatpush.msra.mxu0 %v237
    %2033 = vmatpush.msra.mxu0 %v236
    %2034 = vmatpush.msra.mxu0 %v235
    %2035 = vmatpush.msra.mxu0 %v234
    %2036 = vmatpush.msra.mxu0 %v233
    %2037 = vmatpush.msra.mxu0 %v232
    %2038 = vmatmul.f32.gmra.mxu0 %v1379
    %v2039 = vpop.f32.mrf.mxu0
    %v2040 = vadd.f32 %v293, %v2039
    %2041 = vmatmul.f32.gmra.mxu0 %v1486
    %v2042 = vpop.f32.mrf.mxu0
    %v2043 = vadd.f32 %v293, %v2042
    %2044 = vmatmul.f32.gmra.mxu0 %v1593
    %v2045 = vpop.f32.mrf.mxu0
    %v2046 = vadd.f32 %v293, %v2045
    %2047 = vmatmul.f32.gmra.mxu0 %v1700
    %v2048 = vpop.f32.mrf.mxu0
    %v2049 = vadd.f32 %v293, %v2048
    %2050 = vmatmul.f32.gmra.mxu0 %v1807
    %v2051 = vpop.f32.mrf.mxu0
    %v2052 = vadd.f32 %v293, %v2051
    %2053 = vmatmul.f32.gmra.mxu0 %v1914
    %v2054 = vpop.f32.mrf.mxu0
    %v2055 = vadd.f32 %v293, %v2054
    %2056 = vmatmul.f32.gmra.mxu0 %v2021
    %v2057 = vpop.f32.mrf.mxu0
    %v2058 = vadd.f32 %v293, %v2057
    %2059 = vdwg.mxu0
    %v2060 = vmax.f32 %v2040, 0.0
    %v2061 = vmax.f32 %v2043, 0.0
    %v2062 = vmax.f32 %v2046, 0.0
    %v2063 = vmax.f32 %v2049, 0.0
    %v2064 = vmax.f32 %v2052, 0.0
    %v2065 = vmax.f32 %v2055, 0.0
    %v2066 = vmax.f32 %v2058, 0.0
    %vm2067 = vcmask 523264
    %v2069 = vsel %vm2067, %v2060, 0
    %v2072 = vsel %vm2067, %v2061, 0
    %v2075 = vsel %vm2067, %v2062, 0
    %v2078 = vsel %vm2067, %v2063, 0
    %v2081 = vsel %vm2067, %v2064, 0
    %v2084 = vsel %vm2067, %v2065, 0
    %v2087 = vsel %vm2067, %v2066, 0
    %2089 = vmatpush.msra.mxu0 0.0
    %2090 = vmatpush.msra.mxu0 0.0
    %2091 = vmatpush.msra.mxu0 0.0
    %2092 = vmatpush.msra.mxu0 0.0
    %2093 = vmatpush.msra.mxu0 0.0
    %2094 = vmatpush.msra.mxu0 0.0
    %2095 = vmatpush.msra.mxu0 0.0
    %2096 = vmatpush.msra.mxu0 0.0
    %2097 = vmatpush.msra.mxu0 %v255
    %2098 = vmatpush.msra.mxu0 %v254
    %2099 = vmatpush.msra.mxu0 %v253
    %2100 = vmatpush.msra.mxu0 %v252
    %2101 = vmatpush.msra.mxu0 %v251
    %2102 = vmatpush.msra.mxu0 %v250
    %2103 = vmatpush.msra.mxu0 %v249
    %2104 = vmatpush.msra.mxu0 %v248
    %2105 = vmatmul.f32.gmra.mxu0 %v2069
    %v2106 = vpop.f32.mrf.mxu0
    %v2107 = vadd.f32 %v294, %v2106
    %2108 = vmatmul.f32.gmra.mxu0 %v2072
    %v2109 = vpop.f32.mrf.mxu0
    %v2110 = vadd.f32 %v294, %v2109
    %2111 = vmatmul.f32.gmra.mxu0 %v2075
    %v2112 = vpop.f32.mrf.mxu0
    %v2113 = vadd.f32 %v294, %v2112
    %2114 = vmatmul.f32.gmra.mxu0 %v2078
    %v2115 = vpop.f32.mrf.mxu0
    %v2116 = vadd.f32 %v294, %v2115
    %2117 = vmatmul.f32.gmra.mxu0 %v2081
    %v2118 = vpop.f32.mrf.mxu0
    %v2119 = vadd.f32 %v294, %v2118
    %2120 = vmatmul.f32.gmra.mxu0 %v2084
    %v2121 = vpop.f32.mrf.mxu0
    %v2122 = vadd.f32 %v294, %v2121
    %2123 = vmatmul.f32.gmra.mxu0 %v2087
    %v2124 = vpop.f32.mrf.mxu0
    %v2125 = vadd.f32 %v294, %v2124
    %2126 = vdwg.mxu0
    %v2127 = vlaneseq
    %v2128 = vand.u32 %v2127, 127
    %vm2129 = vcmask 48128
    %v2130 = vsel %vm2129, %v15, -inf
    %2131 = vmax.xlane.f32.xlu0 %v2130
    %v2132 = vpop.xlane.xlu0 %2131
    %v2133 = vsel %vm2129, %v16, -inf
    %2134 = vmax.xlane.f32.xlu0 %v2133
    %v2135 = vpop.xlane.xlu0 %2134
    %v2136 = vsel %vm2129, %v17, -inf
    %2137 = vmax.xlane.f32.xlu0 %v2136
    %v2138 = vpop.xlane.xlu0 %2137
    %v2139 = vsel %vm2129, %v18, -inf
    %2140 = vmax.xlane.f32.xlu0 %v2139
    %v2141 = vpop.xlane.xlu0 %2140
    %v2142 = vsel %vm2129, %v19, -inf
    %2143 = vmax.xlane.f32.xlu0 %v2142
    %v2144 = vpop.xlane.xlu0 %2143
    %v2145 = vsel %vm2129, %v20, -inf
    %2146 = vmax.xlane.f32.xlu0 %v2145
    %v2147 = vpop.xlane.xlu0 %2146
    %v2148 = vsel %vm2129, %v21, -inf
    %2149 = vmax.xlane.f32.xlu0 %v2148
    %v2150 = vpop.xlane.xlu0 %2149
    %vm2151 = vcmp.eq.f32.partialorder %v15, %v2132
    %vm2152 = vcmp.eq.f32.partialorder %v16, %v2135
    %vm2153 = vcmp.eq.f32.partialorder %v17, %v2138
    %vm2154 = vcmp.eq.f32.partialorder %v18, %v2141
    %vm2155 = vcmp.eq.f32.partialorder %v19, %v2144
    %vm2156 = vcmp.eq.f32.partialorder %v20, %v2147
    %vm2157 = vcmp.eq.f32.partialorder %v21, %v2150
    %v2158 = vsel %vm2151, %v2128, 6
    %v2159 = vsel %vm2152, %v2128, 6
    %v2160 = vsel %vm2153, %v2128, 6
    %v2161 = vsel %vm2154, %v2128, 6
    %v2162 = vsel %vm2155, %v2128, 6
    %v2163 = vsel %vm2156, %v2128, 6
    %v2164 = vsel %vm2157, %v2128, 6
    %v2165 = vsel %vm2129, %v2158, 2147483647
    %v2166 = vand.u32 %v2165, 65535
    %v2167 = vshra.s32 %v2165, 16
    %v2168 = vcvt.s32.f32 %v2166
    %v2169 = vcvt.s32.f32 %v2167
    %2170 = vmin.xlane.f32.xlu0 %v2169
    %v2171 = vpop.xlane.xlu0 %2170
    %vm2172 = vcmp.eq.f32.partialorder %v2169, %v2171
    %v2173 = vsel %vm2172, %v2168, inf
    %2174 = vmin.xlane.f32.xlu0 %v2173
    %v2175 = vpop.xlane.xlu0 %2174
    %v2176 = vcvt.f32.s32 %v2175
    %v2177 = vcvt.f32.s32 %v2171
    %v2178 = vshll.u32 %v2177, 16
    %v2179 = vadd.s32 %v2178, %v2176
    %v2180 = vsel %vm2129, %v2159, 2147483647
    %v2181 = vand.u32 %v2180, 65535
    %v2182 = vshra.s32 %v2180, 16
    %v2183 = vcvt.s32.f32 %v2181
    %v2184 = vcvt.s32.f32 %v2182
    %2185 = vmin.xlane.f32.xlu0 %v2184
    %v2186 = vpop.xlane.xlu0 %2185
    %vm2187 = vcmp.eq.f32.partialorder %v2184, %v2186
    %v2188 = vsel %vm2187, %v2183, inf
    %2189 = vmin.xlane.f32.xlu0 %v2188
    %v2190 = vpop.xlane.xlu0 %2189
    %v2191 = vcvt.f32.s32 %v2190
    %v2192 = vcvt.f32.s32 %v2186
    %v2193 = vshll.u32 %v2192, 16
    %v2194 = vadd.s32 %v2193, %v2191
    %v2195 = vsel %vm2129, %v2160, 2147483647
    %v2196 = vand.u32 %v2195, 65535
    %v2197 = vshra.s32 %v2195, 16
    %v2198 = vcvt.s32.f32 %v2196
    %v2199 = vcvt.s32.f32 %v2197
    %2200 = vmin.xlane.f32.xlu0 %v2199
    %v2201 = vpop.xlane.xlu0 %2200
    %vm2202 = vcmp.eq.f32.partialorder %v2199, %v2201
    %v2203 = vsel %vm2202, %v2198, inf
    %2204 = vmin.xlane.f32.xlu0 %v2203
    %v2205 = vpop.xlane.xlu0 %2204
    %v2206 = vcvt.f32.s32 %v2205
    %v2207 = vcvt.f32.s32 %v2201
    %v2208 = vshll.u32 %v2207, 16
    %v2209 = vadd.s32 %v2208, %v2206
    %v2210 = vsel %vm2129, %v2161, 2147483647
    %v2211 = vand.u32 %v2210, 65535
    %v2212 = vshra.s32 %v2210, 16
    %v2213 = vcvt.s32.f32 %v2211
    %v2214 = vcvt.s32.f32 %v2212
    %2215 = vmin.xlane.f32.xlu0 %v2214
    %v2216 = vpop.xlane.xlu0 %2215
    %vm2217 = vcmp.eq.f32.partialorder %v2214, %v2216
    %v2218 = vsel %vm2217, %v2213, inf
    %2219 = vmin.xlane.f32.xlu0 %v2218
    %v2220 = vpop.xlane.xlu0 %2219
    %v2221 = vcvt.f32.s32 %v2220
    %v2222 = vcvt.f32.s32 %v2216
    %v2223 = vshll.u32 %v2222, 16
    %v2224 = vadd.s32 %v2223, %v2221
    %v2225 = vsel %vm2129, %v2162, 2147483647
    %v2226 = vand.u32 %v2225, 65535
    %v2227 = vshra.s32 %v2225, 16
    %v2228 = vcvt.s32.f32 %v2226
    %v2229 = vcvt.s32.f32 %v2227
    %2230 = vmin.xlane.f32.xlu0 %v2229
    %v2231 = vpop.xlane.xlu0 %2230
    %vm2232 = vcmp.eq.f32.partialorder %v2229, %v2231
    %v2233 = vsel %vm2232, %v2228, inf
    %2234 = vmin.xlane.f32.xlu0 %v2233
    %v2235 = vpop.xlane.xlu0 %2234
    %v2236 = vcvt.f32.s32 %v2235
    %v2237 = vcvt.f32.s32 %v2231
    %v2238 = vshll.u32 %v2237, 16
    %v2239 = vadd.s32 %v2238, %v2236
    %v2240 = vsel %vm2129, %v2163, 2147483647
    %v2241 = vand.u32 %v2240, 65535
    %v2242 = vshra.s32 %v2240, 16
    %v2243 = vcvt.s32.f32 %v2241
    %v2244 = vcvt.s32.f32 %v2242
    %2245 = vmin.xlane.f32.xlu0 %v2244
    %v2246 = vpop.xlane.xlu0 %2245
    %vm2247 = vcmp.eq.f32.partialorder %v2244, %v2246
    %v2248 = vsel %vm2247, %v2243, inf
    %2249 = vmin.xlane.f32.xlu0 %v2248
    %v2250 = vpop.xlane.xlu0 %2249
    %v2251 = vcvt.f32.s32 %v2250
    %v2252 = vcvt.f32.s32 %v2246
    %v2253 = vshll.u32 %v2252, 16
    %v2254 = vadd.s32 %v2253, %v2251
    %v2255 = vsel %vm2129, %v2164, 2147483647
    %v2256 = vand.u32 %v2255, 65535
    %v2257 = vshra.s32 %v2255, 16
    %v2258 = vcvt.s32.f32 %v2256
    %v2259 = vcvt.s32.f32 %v2257
    %2260 = vmin.xlane.f32.xlu0 %v2259
    %v2261 = vpop.xlane.xlu0 %2260
    %vm2262 = vcmp.eq.f32.partialorder %v2259, %v2261
    %v2263 = vsel %vm2262, %v2258, inf
    %2264 = vmin.xlane.f32.xlu0 %v2263
    %v2265 = vpop.xlane.xlu0 %2264
    %v2266 = vcvt.f32.s32 %v2265
    %v2267 = vcvt.f32.s32 %v2261
    %v2268 = vshll.u32 %v2267, 16
    %v2269 = vadd.s32 %v2268, %v2266
    %vm2270 = vcmp.eq.s32.totalorder %v2128, %v2179
    %vm2271 = vcmp.eq.s32.totalorder %v2128, %v2194
    %vm2272 = vcmp.eq.s32.totalorder %v2128, %v2209
    %vm2273 = vcmp.eq.s32.totalorder %v2128, %v2224
    %vm2274 = vcmp.eq.s32.totalorder %v2128, %v2239
    %vm2275 = vcmp.eq.s32.totalorder %v2128, %v2254
    %vm2276 = vcmp.eq.s32.totalorder %v2128, %v2269
    %v2277 = vsel %vm2270, 1, 0
    %v2278 = vsel %vm2271, 1, 0
    %v2279 = vsel %vm2272, 1, 0
    %v2280 = vsel %vm2273, 1, 0
    %v2281 = vsel %vm2274, 1, 0
    %v2282 = vsel %vm2275, 1, 0
    %v2283 = vsel %vm2276, 1, 0
    %v2284 = vcvt.s32.f32 %v2277
    %v2285 = vcvt.s32.f32 %v2278
    %v2286 = vcvt.s32.f32 %v2279
    %v2287 = vcvt.s32.f32 %v2280
    %v2288 = vcvt.s32.f32 %v2281
    %v2289 = vcvt.s32.f32 %v2282
    %v2290 = vcvt.s32.f32 %v2283
    %v2291 = vsel %vm2129, %v2107, -inf
    %2292 = vmax.xlane.f32.xlu0 %v2291
    %v2293 = vpop.xlane.xlu0 %2292
    %v2294 = vsel %vm2129, %v2110, -inf
    %2295 = vmax.xlane.f32.xlu0 %v2294
    %v2296 = vpop.xlane.xlu0 %2295
    %v2297 = vsel %vm2129, %v2113, -inf
    %2298 = vmax.xlane.f32.xlu0 %v2297
    %v2299 = vpop.xlane.xlu0 %2298
    %v2300 = vsel %vm2129, %v2116, -inf
    %2301 = vmax.xlane.f32.xlu0 %v2300
    %v2302 = vpop.xlane.xlu0 %2301
    %v2303 = vsel %vm2129, %v2119, -inf
    %2304 = vmax.xlane.f32.xlu0 %v2303
    %v2305 = vpop.xlane.xlu0 %2304
    %v2306 = vsel %vm2129, %v2122, -inf
    %2307 = vmax.xlane.f32.xlu0 %v2306
    %v2308 = vpop.xlane.xlu0 %2307
    %v2309 = vsel %vm2129, %v2125, -inf
    %2310 = vmax.xlane.f32.xlu0 %v2309
    %v2311 = vpop.xlane.xlu0 %2310
    %v2312 = vsub.f32 %v2107, %v2293
    %v2313 = vsub.f32 %v2110, %v2296
    %v2314 = vsub.f32 %v2113, %v2299
    %v2315 = vsub.f32 %v2116, %v2302
    %v2316 = vsub.f32 %v2119, %v2305
    %v2317 = vsub.f32 %v2122, %v2308
    %v2318 = vsub.f32 %v2125, %v2311
    %v2319 = vmul.f32 %v2312, 1.442695
    %v2320 = vpow.pop %v2319
    %v2321 = vmul.f32 %v2313, 1.442695
    %v2322 = vpow.pop %v2321
    %v2323 = vmul.f32 %v2314, 1.442695
    %v2324 = vpow.pop %v2323
    %v2325 = vmul.f32 %v2315, 1.442695
    %v2326 = vpow.pop %v2325
    %v2327 = vmul.f32 %v2316, 1.442695
    %v2328 = vpow.pop %v2327
    %v2329 = vmul.f32 %v2317, 1.442695
    %v2330 = vpow.pop %v2329
    %v2331 = vmul.f32 %v2318, 1.442695
    %v2332 = vpow.pop %v2331
    %v2333 = vsel %vm2129, %v2320, 0.0
    %2334 = vadd.xlane.f32.xlu0 %v2333
    %v2335 = vpop.xlane.xlu0 %2334
    %v2336 = vsel %vm2129, %v2322, 0.0
    %2337 = vadd.xlane.f32.xlu0 %v2336
    %v2338 = vpop.xlane.xlu0 %2337
    %v2339 = vsel %vm2129, %v2324, 0.0
    %2340 = vadd.xlane.f32.xlu0 %v2339
    %v2341 = vpop.xlane.xlu0 %2340
    %v2342 = vsel %vm2129, %v2326, 0.0
    %2343 = vadd.xlane.f32.xlu0 %v2342
    %v2344 = vpop.xlane.xlu0 %2343
    %v2345 = vsel %vm2129, %v2328, 0.0
    %2346 = vadd.xlane.f32.xlu0 %v2345
    %v2347 = vpop.xlane.xlu0 %2346
    %v2348 = vsel %vm2129, %v2330, 0.0
    %2349 = vadd.xlane.f32.xlu0 %v2348
    %v2350 = vpop.xlane.xlu0 %2349
    %v2351 = vsel %vm2129, %v2332, 0.0
    %2352 = vadd.xlane.f32.xlu0 %v2351
    %v2353 = vpop.xlane.xlu0 %2352
    %v2354 = vlog2.pop %v2335
    %v2355 = vmul.f32 %v2354, 0.6931472
    %v2356 = vlog2.pop %v2338
    %v2357 = vmul.f32 %v2356, 0.6931472
    %v2358 = vlog2.pop %v2341
    %v2359 = vmul.f32 %v2358, 0.6931472
    %v2360 = vlog2.pop %v2344
    %v2361 = vmul.f32 %v2360, 0.6931472
    %v2362 = vlog2.pop %v2347
    %v2363 = vmul.f32 %v2362, 0.6931472
    %v2364 = vlog2.pop %v2350
    %v2365 = vmul.f32 %v2364, 0.6931472
    %v2366 = vlog2.pop %v2353
    %v2367 = vmul.f32 %v2366, 0.6931472
    %v2368 = vadd.f32 %v2355, %v2293
    %v2369 = vadd.f32 %v2357, %v2296
    %v2370 = vadd.f32 %v2359, %v2299
    %v2371 = vadd.f32 %v2361, %v2302
    %v2372 = vadd.f32 %v2363, %v2305
    %v2373 = vadd.f32 %v2365, %v2308
    %v2374 = vadd.f32 %v2367, %v2311
    %v2375 = vmul.f32 %v2284, %v2107
    %v2376 = vmul.f32 %v2285, %v2110
    %v2377 = vmul.f32 %v2286, %v2113
    %v2378 = vmul.f32 %v2287, %v2116
    %v2379 = vmul.f32 %v2288, %v2119
    %v2380 = vmul.f32 %v2289, %v2122
    %v2381 = vmul.f32 %v2290, %v2125
    %v2382 = vsel %vm2129, %v2375, 0.0
    %2383 = vadd.xlane.f32.xlu0 %v2382
    %v2384 = vpop.xlane.xlu0 %2383
    %v2385 = vsel %vm2129, %v2376, 0.0
    %2386 = vadd.xlane.f32.xlu0 %v2385
    %v2387 = vpop.xlane.xlu0 %2386
    %v2388 = vsel %vm2129, %v2377, 0.0
    %2389 = vadd.xlane.f32.xlu0 %v2388
    %v2390 = vpop.xlane.xlu0 %2389
    %v2391 = vsel %vm2129, %v2378, 0.0
    %2392 = vadd.xlane.f32.xlu0 %v2391
    %v2393 = vpop.xlane.xlu0 %2392
    %v2394 = vsel %vm2129, %v2379, 0.0
    %2395 = vadd.xlane.f32.xlu0 %v2394
    %v2396 = vpop.xlane.xlu0 %2395
    %v2397 = vsel %vm2129, %v2380, 0.0
    %2398 = vadd.xlane.f32.xlu0 %v2397
    %v2399 = vpop.xlane.xlu0 %2398
    %v2400 = vsel %vm2129, %v2381, 0.0
    %2401 = vadd.xlane.f32.xlu0 %v2400
    %v2402 = vpop.xlane.xlu0 %2401
    %v2403 = vsub.f32 %v2368, %v2384
    %v2404 = vsub.f32 %v2369, %v2387
    %v2405 = vsub.f32 %v2370, %v2390
    %v2406 = vsub.f32 %v2371, %v2393
    %v2407 = vsub.f32 %v2372, %v2396
    %v2408 = vsub.f32 %v2373, %v2399
    %v2409 = vsub.f32 %v2374, %v2402
    %vm2410 = vcmask 7168
    %v2411 = vsel %vm2410, %v2403, 0.0
    %v2412 = vsel %vm2410, %v2404, 0.0
    %v2413 = vadd.f32 %v2411, %v2412
    %v2414 = vsel %vm2410, %v2405, 0.0
    %v2415 = vadd.f32 %v2413, %v2414
    %v2416 = vsel %vm2410, %v2406, 0.0
    %v2417 = vadd.f32 %v2415, %v2416
    %v2418 = vsel %vm2410, %v2407, 0.0
    %v2419 = vadd.f32 %v2417, %v2418
    %v2420 = vsel %vm2410, %v2408, 0.0
    %v2421 = vadd.f32 %v2419, %v2420
    %v2422 = vsel %vm2410, %v2409, 0.0
    %v2423 = vadd.f32 %v2421, %v2422
    %2424 = vadd.xlane.f32.xlu0 %v2423
    %v2425 = vpop.xlane.xlu0 %2424
    %v2426 = vrot.slane %v2425, 4
    %v2427 = vadd.f32 %v2425, %v2426
    %v2428 = vrot.slane %v2427, 2
    %v2429 = vadd.f32 %v2427, %v2428
    %v2430 = vrot.slane %v2429, 1
    %v2431 = vadd.f32 %v2429, %v2430
    %s2432 = vtos %v2431
    %v2433 = vxor.u32 %v2107, 2147483648
    %v2434 = vxor.u32 %v2110, 2147483648
    %v2435 = vxor.u32 %v2113, 2147483648
    %v2436 = vxor.u32 %v2116, 2147483648
    %v2437 = vxor.u32 %v2119, 2147483648
    %v2438 = vxor.u32 %v2122, 2147483648
    %v2439 = vxor.u32 %v2125, 2147483648
    %v2440 = vmul.f32 %v2433, 1.442695
    %v2441 = vpow.pop %v2440
    %v2442 = vmul.f32 %v2434, 1.442695
    %v2443 = vpow.pop %v2442
    %v2444 = vmul.f32 %v2435, 1.442695
    %v2445 = vpow.pop %v2444
    %v2446 = vmul.f32 %v2436, 1.442695
    %v2447 = vpow.pop %v2446
    %v2448 = vmul.f32 %v2437, 1.442695
    %v2449 = vpow.pop %v2448
    %v2450 = vmul.f32 %v2438, 1.442695
    %v2451 = vpow.pop %v2450
    %v2452 = vmul.f32 %v2439, 1.442695
    %v2453 = vpow.pop %v2452
    %v2454 = vadd.f32 %v2441, 1.0
    %v2455 = vadd.f32 %v2443, 1.0
    %v2456 = vadd.f32 %v2445, 1.0
    %v2457 = vadd.f32 %v2447, 1.0
    %v2458 = vadd.f32 %v2449, 1.0
    %v2459 = vadd.f32 %v2451, 1.0
    %v2460 = vadd.f32 %v2453, 1.0
    %v2461 = vrcp.pop %v2454
    %v2462 = vmul.f32 %v2454, %v2461
    %v2463 = vsub.f32 1.0, %v2462
    %v2464 = vmul.f32 %v2461, %v2463
    %v2465 = vadd.f32 %v2461, %v2464
    %vm2466 = vweird.f32 %v2454
    %vm2467 = vweird.f32 %v2461
    %vm2468 = vmor %vm2466, %vm2467
    %v2469 = vsel %vm2468, %v2461, %v2465
    %v2470 = vand.u32 2147483647, %v2454
    %vm2471 = vcmp.eq.f32.partialorder %v2470, 8.507059e+37
    %v2472 = vand.u32 %v2454, 2147483648
    %v2473 = vor.u32 1.1754944e-38, %v2472
    %v2474 = vsel %vm2471, %v2473, %v2469
    %v2475 = vmul.f32 1.0, %v2474
    %v2476 = vrcp.pop %v2455
    %v2477 = vmul.f32 %v2455, %v2476
    %v2478 = vsub.f32 1.0, %v2477
    %v2479 = vmul.f32 %v2476, %v2478
    %v2480 = vadd.f32 %v2476, %v2479
    %vm2481 = vweird.f32 %v2455
    %vm2482 = vweird.f32 %v2476
    %vm2483 = vmor %vm2481, %vm2482
    %v2484 = vsel %vm2483, %v2476, %v2480
    %v2485 = vand.u32 2147483647, %v2455
    %vm2486 = vcmp.eq.f32.partialorder %v2485, 8.507059e+37
    %v2487 = vand.u32 %v2455, 2147483648
    %v2488 = vor.u32 1.1754944e-38, %v2487
    %v2489 = vsel %vm2486, %v2488, %v2484
    %v2490 = vmul.f32 1.0, %v2489
    %v2491 = vrcp.pop %v2456
    %v2492 = vmul.f32 %v2456, %v2491
    %v2493 = vsub.f32 1.0, %v2492
    %v2494 = vmul.f32 %v2491, %v2493
    %v2495 = vadd.f32 %v2491, %v2494
    %vm2496 = vweird.f32 %v2456
    %vm2497 = vweird.f32 %v2491
    %vm2498 = vmor %vm2496, %vm2497
    %v2499 = vsel %vm2498, %v2491, %v2495
    %v2500 = vand.u32 2147483647, %v2456
    %vm2501 = vcmp.eq.f32.partialorder %v2500, 8.507059e+37
    %v2502 = vand.u32 %v2456, 2147483648
    %v2503 = vor.u32 1.1754944e-38, %v2502
    %v2504 = vsel %vm2501, %v2503, %v2499
    %v2505 = vmul.f32 1.0, %v2504
    %v2506 = vrcp.pop %v2457
    %v2507 = vmul.f32 %v2457, %v2506
    %v2508 = vsub.f32 1.0, %v2507
    %v2509 = vmul.f32 %v2506, %v2508
    %v2510 = vadd.f32 %v2506, %v2509
    %vm2511 = vweird.f32 %v2457
    %vm2512 = vweird.f32 %v2506
    %vm2513 = vmor %vm2511, %vm2512
    %v2514 = vsel %vm2513, %v2506, %v2510
    %v2515 = vand.u32 2147483647, %v2457
    %vm2516 = vcmp.eq.f32.partialorder %v2515, 8.507059e+37
    %v2517 = vand.u32 %v2457, 2147483648
    %v2518 = vor.u32 1.1754944e-38, %v2517
    %v2519 = vsel %vm2516, %v2518, %v2514
    %v2520 = vmul.f32 1.0, %v2519
    %v2521 = vrcp.pop %v2458
    %v2522 = vmul.f32 %v2458, %v2521
    %v2523 = vsub.f32 1.0, %v2522
    %v2524 = vmul.f32 %v2521, %v2523
    %v2525 = vadd.f32 %v2521, %v2524
    %vm2526 = vweird.f32 %v2458
    %vm2527 = vweird.f32 %v2521
    %vm2528 = vmor %vm2526, %vm2527
    %v2529 = vsel %vm2528, %v2521, %v2525
    %v2530 = vand.u32 2147483647, %v2458
    %vm2531 = vcmp.eq.f32.partialorder %v2530, 8.507059e+37
    %v2532 = vand.u32 %v2458, 2147483648
    %v2533 = vor.u32 1.1754944e-38, %v2532
    %v2534 = vsel %vm2531, %v2533, %v2529
    %v2535 = vmul.f32 1.0, %v2534
    %v2536 = vrcp.pop %v2459
    %v2537 = vmul.f32 %v2459, %v2536
    %v2538 = vsub.f32 1.0, %v2537
    %v2539 = vmul.f32 %v2536, %v2538
    %v2540 = vadd.f32 %v2536, %v2539
    %vm2541 = vweird.f32 %v2459
    %vm2542 = vweird.f32 %v2536
    %vm2543 = vmor %vm2541, %vm2542
    %v2544 = vsel %vm2543, %v2536, %v2540
    %v2545 = vand.u32 2147483647, %v2459
    %vm2546 = vcmp.eq.f32.partialorder %v2545, 8.507059e+37
    %v2547 = vand.u32 %v2459, 2147483648
    %v2548 = vor.u32 1.1754944e-38, %v2547
    %v2549 = vsel %vm2546, %v2548, %v2544
    %v2550 = vmul.f32 1.0, %v2549
    %v2551 = vrcp.pop %v2460
    %v2552 = vmul.f32 %v2460, %v2551
    %v2553 = vsub.f32 1.0, %v2552
    %v2554 = vmul.f32 %v2551, %v2553
    %v2555 = vadd.f32 %v2551, %v2554
    %vm2556 = vweird.f32 %v2460
    %vm2557 = vweird.f32 %v2551
    %vm2558 = vmor %vm2556, %vm2557
    %v2559 = vsel %vm2558, %v2551, %v2555
    %v2560 = vand.u32 2147483647, %v2460
    %vm2561 = vcmp.eq.f32.partialorder %v2560, 8.507059e+37
    %v2562 = vand.u32 %v2460, 2147483648
    %v2563 = vor.u32 1.1754944e-38, %v2562
    %v2564 = vsel %vm2561, %v2563, %v2559
    %v2565 = vmul.f32 1.0, %v2564
    %v2566 = vlog2.pop %v2475
    %v2567 = vmul.f32 %v2566, 0.6931472
    %v2568 = vlog2.pop %v2490
    %v2569 = vmul.f32 %v2568, 0.6931472
    %v2570 = vlog2.pop %v2505
    %v2571 = vmul.f32 %v2570, 0.6931472
    %v2572 = vlog2.pop %v2520
    %v2573 = vmul.f32 %v2572, 0.6931472
    %v2574 = vlog2.pop %v2535
    %v2575 = vmul.f32 %v2574, 0.6931472
    %v2576 = vlog2.pop %v2550
    %v2577 = vmul.f32 %v2576, 0.6931472
    %v2578 = vlog2.pop %v2565
    %v2579 = vmul.f32 %v2578, 0.6931472
    %v2580 = vmax.f32 %v2567, -100.0
    %v2581 = vmax.f32 %v2569, -100.0
    %v2582 = vmax.f32 %v2571, -100.0
    %v2583 = vmax.f32 %v2573, -100.0
    %v2584 = vmax.f32 %v2575, -100.0
    %v2585 = vmax.f32 %v2577, -100.0
    %v2586 = vmax.f32 %v2579, -100.0
    %v2587 = vsub.f32 1.0, %v2475
    %v2588 = vsub.f32 1.0, %v2490
    %v2589 = vsub.f32 1.0, %v2505
    %v2590 = vsub.f32 1.0, %v2520
    %v2591 = vsub.f32 1.0, %v2535
    %v2592 = vsub.f32 1.0, %v2550
    %v2593 = vsub.f32 1.0, %v2565
    %v2594 = vlog2.pop %v2587
    %v2595 = vmul.f32 %v2594, 0.6931472
    %v2596 = vlog2.pop %v2588
    %v2597 = vmul.f32 %v2596, 0.6931472
    %v2598 = vlog2.pop %v2589
    %v2599 = vmul.f32 %v2598, 0.6931472
    %v2600 = vlog2.pop %v2590
    %v2601 = vmul.f32 %v2600, 0.6931472
    %v2602 = vlog2.pop %v2591
    %v2603 = vmul.f32 %v2602, 0.6931472
    %v2604 = vlog2.pop %v2592
    %v2605 = vmul.f32 %v2604, 0.6931472
    %v2606 = vlog2.pop %v2593
    %v2607 = vmul.f32 %v2606, 0.6931472
    %v2608 = vmax.f32 %v2595, -100.0
    %v2609 = vmax.f32 %v2597, -100.0
    %v2610 = vmax.f32 %v2599, -100.0
    %v2611 = vmax.f32 %v2601, -100.0
    %v2612 = vmax.f32 %v2603, -100.0
    %v2613 = vmax.f32 %v2605, -100.0
    %v2614 = vmax.f32 %v2607, -100.0
    %v2615 = vmul.f32 %v15, %v2580
    %v2616 = vmul.f32 %v16, %v2581
    %v2617 = vmul.f32 %v17, %v2582
    %v2618 = vmul.f32 %v18, %v2583
    %v2619 = vmul.f32 %v19, %v2584
    %v2620 = vmul.f32 %v20, %v2585
    %v2621 = vmul.f32 %v21, %v2586
    %v2622 = vsub.f32 1.0, %v15
    %v2623 = vsub.f32 1.0, %v16
    %v2624 = vsub.f32 1.0, %v17
    %v2625 = vsub.f32 1.0, %v18
    %v2626 = vsub.f32 1.0, %v19
    %v2627 = vsub.f32 1.0, %v20
    %v2628 = vsub.f32 1.0, %v21
    %v2629 = vmul.f32 %v2622, %v2608
    %v2630 = vmul.f32 %v2623, %v2609
    %v2631 = vmul.f32 %v2624, %v2610
    %v2632 = vmul.f32 %v2625, %v2611
    %v2633 = vmul.f32 %v2626, %v2612
    %v2634 = vmul.f32 %v2627, %v2613
    %v2635 = vmul.f32 %v2628, %v2614
    %v2636 = vadd.f32 %v2615, %v2629
    %v2637 = vadd.f32 %v2616, %v2630
    %v2638 = vadd.f32 %v2617, %v2631
    %v2639 = vadd.f32 %v2618, %v2632
    %v2640 = vadd.f32 %v2619, %v2633
    %v2641 = vadd.f32 %v2620, %v2634
    %v2642 = vadd.f32 %v2621, %v2635
    %v2643 = vsub.f32 0.0, %v2636
    %v2644 = vsub.f32 0.0, %v2637
    %v2645 = vsub.f32 0.0, %v2638
    %v2646 = vsub.f32 0.0, %v2639
    %v2647 = vsub.f32 0.0, %v2640
    %v2648 = vsub.f32 0.0, %v2641
    %v2649 = vsub.f32 0.0, %v2642
    %2657 = vrot.lane.b32.xlu0 %v2643, 122
    %v2658 = vpop.permute.xlu0 %2657
    %2659 = vrot.lane.b32.xlu0 %v2644, 122
    %v2660 = vpop.permute.xlu0 %2659
    %2661 = vrot.lane.b32.xlu0 %v2645, 122
    %v2662 = vpop.permute.xlu0 %2661
    %2663 = vrot.lane.b32.xlu0 %v2646, 122
    %v2664 = vpop.permute.xlu0 %2663
    %2665 = vrot.lane.b32.xlu0 %v2647, 122
    %v2666 = vpop.permute.xlu0 %2665
    %2667 = vrot.lane.b32.xlu0 %v2648, 122
    %v2668 = vpop.permute.xlu0 %2667
    %2669 = vrot.lane.b32.xlu0 %v2649, 122
    %v2670 = vpop.permute.xlu0 %2669
    %vm2678 = vcmask 56320
    %v2679 = vsel %vm2678, %v2658, 0.0
    %v2680 = vsel %vm2678, %v2660, 0.0
    %v2681 = vadd.f32 %v2679, %v2680
    %v2682 = vsel %vm2678, %v2662, 0.0
    %v2683 = vadd.f32 %v2681, %v2682
    %v2684 = vsel %vm2678, %v2664, 0.0
    %v2685 = vadd.f32 %v2683, %v2684
    %v2686 = vsel %vm2678, %v2666, 0.0
    %v2687 = vadd.f32 %v2685, %v2686
    %v2688 = vsel %vm2678, %v2668, 0.0
    %v2689 = vadd.f32 %v2687, %v2688
    %v2690 = vsel %vm2678, %v2670, 0.0
    %v2691 = vadd.f32 %v2689, %v2690
    %2692 = vadd.xlane.f32.xlu0 %v2691
    %v2693 = vpop.xlane.xlu0 %2692
    %v2694 = vrot.slane %v2693, 4
    %v2695 = vadd.f32 %v2693, %v2694
    %v2696 = vrot.slane %v2695, 2
    %v2697 = vadd.f32 %v2695, %v2696
    %v2698 = vrot.slane %v2697, 1
    %v2699 = vadd.f32 %v2697, %v2698
    %s2700 = vtos %v2699
    %v2701 = vadd.f32 %v1176, 1.0
    %v2702 = vmul.f32 %v1176, %v1176
    %2704 = vrot.lane.b32.xlu0 %v2702, 8
    %v2705 = vpop.permute.xlu0 %2704
    %v2707 = vsub.f32 %v2701, %v2705
    %v2708 = vmul.f32 %v1176, 1.442695
    %v2709 = vpow.pop %v2708
    %v2710 = vsub.f32 %v2707, %v2709
    %2712 = vrot.lane.b32.xlu0 %v2710, 120
    %v2713 = vpop.permute.xlu0 %2712
    %v2715 = vsel %vm1188, %v2713, 0.0
    %2716 = vadd.xlane.f32.xlu0 %v2715
    %v2717 = vpop.xlane.xlu0 %2716
    %v2718 = vrot.slane %v2717, 4
    %v2719 = vadd.f32 %v2717, %v2718
    %v2720 = vrot.slane %v2719, 2
    %v2721 = vadd.f32 %v2719, %v2720
    %v2722 = vrot.slane %v2721, 1
    %v2723 = vadd.f32 %v2721, %v2722
    %s2724 = vtos %v2723
    %s2725 = smul.f32 %s2724, -0.5
    %v2726 = vstv %s2432
    %v2727 = vadd.f32 %v2726, 0.0
    %v2728 = vstv %s2700
    %v2729 = vadd.f32 %v2727, %v2728
    %s2730 = smul.f32 %s2725, 0.005
    %v2731 = vstv %s2730
    %v2732 = vadd.f32 %v2729, %v2731
    %vm2733 = vcmask 0
    %2734 = vst.msk [vmem:[#allocation2] sm:$0x1] %vm2733, %v2732
    // Predicated region
    $region14: #{svae_forward_loss.1} parent=1 // pred_check
      _
    $region15: #{svae_forward_loss.1} parent=1 // pred_check_branch
      %2736 = sbr.rel (0) target = $region17
    $region16: #{svae_forward_loss.1} parent=1 // pred_region
      %2738 = vsyncadd [#allocation3], 0
      %s2740 = sshll.u32 [#allocation2], 4
      %s2741 = int_to_ptr.vmem [resolvable:$true] %s2740
      %s2742 = sshll.u32 %s3, 4
      %s2743 = int_to_ptr.hbm [resolvable:$true] %s2742
      %2745 = dma.vmem_to_hbm [thread:$0]  %s2741, 16, %s2743, [#allocation3]
    $region17: #{svae_forward_loss.1} parent=1 // pred_fallthru
      _
    // Predicated region
    $region18: #{svae_forward_loss.1} parent=1 // pred_check
      _
    $region19: #{svae_forward_loss.1} parent=1 // pred_check_branch
      %2747 = sbr.rel (0) target = $region21
    $region20: #{svae_forward_loss.1} parent=1 // pred_region
      %2749 = dma.done [#allocation3], 16
    $region21: #{svae_forward_loss.1} parent=1 // pred_fallthru
      _
    %2750 = vsyncpa [#allocation3], 1

</llo_original>
